<compile_context>
chip_gen: v6e
topology: v6e:2x2x1
jax: 0.10.0
libtpu: 0.0.40
codegen_flags: <defaults>
</compile_context>

<pallas_src>
import functools

import jax
import jax.numpy as jnp
from jax import lax
from jax.experimental import pallas as pl
from jax.experimental.pallas import tpu as pltpu


_BN_EPS = 1e-5


# ------------------------------- Pallas kernel ------------------------------- #

def _up_project_kernel(x_ref, b1_ref, r2_ref, sb1_ref, sb3_ref, o_ref, l2_ref,
                       *, h, w, cout):
    wq = 2 * w                      # interleaved width
    wb = wq * cout                  # lanes of one (row-parity) block: (q, co)
    pb = (wq + 2) * cout            # padded block width inside the stage-2 LHS
    half = 2 * wb                   # branch-1 lanes [0:half], branch-2 lanes [half:2*half]
    c = cout

    # -------- Stage 1: all 8 "up" convs as 3 banded matmuls over padded input rows -------- #
    acc = jnp.zeros((h, 4 * wb), jnp.float32)
    for kh in range(3):                                            # static, unrolled
        lhs = x_ref[0, kh:kh + h, :].astype(jnp.bfloat16)          # (h, (w+2)*cin)
        acc = acc + jnp.dot(lhs, b1_ref[kh], preferred_element_type=jnp.float32)

    y = acc * sb1_ref[0:1, :] + sb1_ref[1:2, :]                    # fused bn1 / bn2 (f32)
    y1 = jnp.maximum(y[:, :half], 0.0)                             # branch-1 ReLU (static split)
    y2 = y[:, half:]                                               # branch-2 residual, stays f32

    # -------- Stage 2 LHS: the 4 padded interleaved y1 rows (2i-1 .. 2i+2) per row block --- #
    l2_ref[...] = jnp.zeros(l2_ref.shape, l2_ref.dtype)            # zero pads / boundary rows
    # s=0: interleaved row 2i-1 (row-parity 1, source row i-1); row 0 stays zero (top pad)
    l2_ref[1:h, c:c + wb] = y1[0:h - 1, wb:2 * wb]
    # s=1: interleaved row 2i   (row-parity 0, source row i)
    l2_ref[:, pb + c:pb + c + wb] = y1[:, 0:wb]
    # s=2: interleaved row 2i+1 (row-parity 1, source row i)
    l2_ref[:, 2 * pb + c:2 * pb + c + wb] = y1[:, wb:2 * wb]
    # s=3: interleaved row 2i+2 (row-parity 0, source row i+1); last row stays zero (bottom pad)
    l2_ref[0:h - 1, 3 * pb + c:3 * pb + c + wb] = y1[1:h, 0:wb]

    # -------- conv3 (+bn3) for BOTH output row parities in one matmul, + residual + ReLU --- #
    z = jnp.dot(l2_ref[...].astype(jnp.bfloat16), r2_ref[...],
                preferred_element_type=jnp.float32)                # (h, 2*2w*cout)
    o = jnp.maximum(z * sb3_ref[0:1, :] + sb3_ref[1:2, :] + y2, 0.0)
    o_ref[0] = o.astype(o_ref.dtype)                               # one bulk lane-dense store


# --------------------------- wrapper-side weight prep --------------------------- #

def _fold_bn(bn):
    gamma, beta, mean, var = bn
    s = gamma / jnp.sqrt(var + _BN_EPS)
    return s, beta - mean * s


def _ext3(wk):
    """Zero-extend a (kh, kw, ci, co) kernel to 3x3 (pads at bottom/right)."""
    kh, kw = wk.shape[0], wk.shape[1]
    return jnp.pad(wk, ((0, 3 - kh), (0, 3 - kw), (0, 0), (0, 0)))


def _build_stage1_rhs(params, cin, cout, w):
    """Banded RHS: (3, (w+2)*cin, 8*w*cout), column order (branch, r, q=2j+c, co)."""
    w8 = jnp.stack([_ext3(params[k]) for k in
                    ("w11", "w12", "w13", "w14", "w21", "w22", "w23", "w24")], axis=3)
    w8 = w8.reshape(3, 3, cin, 2, 2, 2, cout)            # (kh, kw, ci, branch, r, c, co)
    wq = 2 * w
    jj = jnp.arange(w + 2)
    q = jnp.arange(wq)
    kw_sel = jj[:, None] - q[None, :] // 2               # kernel column tap jj - j
    sel = ((kw_sel[:, :, None] == jnp.arange(3)[None, None, :])[:, :, :, None]
           & ((q % 2)[None, :, None, None] == jnp.arange(2)[None, None, None, :]))
    sel = sel.astype(jnp.float32)                        # (w+2, wq, kw, col-parity)
    b = jnp.einsum("Jqkp,hkcBrpd->hJcBrqd", sel, w8)     # (3, w+2, cin, 2, 2, wq, cout)
    return b.reshape(3, (w + 2) * cin, 4 * wq * cout).astype(jnp.bfloat16)


def _build_stage2_rhs(w3, cout, w):
    """Banded conv3 RHS: (4*(2w+2)*cout, 2*2w*cout); K=(src-row slot, padded col, ci),
    N=(row-parity, q=2j+pc, co)."""
    wq = 2 * w
    s = jnp.arange(4)
    pr = jnp.arange(2)
    row_sel = ((s[:, None] - pr[None, :])[:, :, None]
               == jnp.arange(3)[None, None, :]).astype(jnp.float32)       # (4, 2, dh+1)
    qp = jnp.arange(wq + 2)
    q = jnp.arange(wq)
    col_sel = ((qp[:, None] - q[None, :])[:, :, None]
               == jnp.arange(3)[None, None, :]).astype(jnp.float32)       # (wq+2, wq, dw+1)
    r2 = jnp.einsum("spa,Qqb,abcd->sQcpqd", row_sel, col_sel, w3)         # (4, wq+2, C, 2, wq, C)
    return r2.reshape(4 * (wq + 2) * cout, 2 * wq * cout).astype(jnp.bfloat16)


def up_project(x_nhwc, params):
    """Pallas UpProject.forward. x_nhwc: [N, H, W, Cin] -> [N, 2H, 2W, Cout]."""
    n, h, w, cin = x_nhwc.shape
    cout = params["w11"].shape[-1]
    wq = 2 * w
    n1 = 4 * wq * cout                      # stage-1 lanes: (branch, r, q, co)
    n2 = 2 * wq * cout                      # output  lanes: (pr, q, co)
    k2 = 4 * (wq + 2) * cout

    # Padded input with rows on sublanes and (col, cin) packed on lanes (free reshape).
    xp = jnp.pad(x_nhwc, ((0, 0), (1, 1), (1, 1), (0, 0))).reshape(n, h + 2, (w + 2) * cin)

    b1 = _build_stage1_rhs(params, cin, cout, w)          # (3, (w+2)*cin, n1) bf16
    r2 = _build_stage2_rhs(params["w3"], cout, w)         # (k2, n2) bf16

    s1, t1 = _fold_bn(params["bn1"])
    s2, t2 = _fold_bn(params["bn2"])
    s3, t3 = _fold_bn(params["bn3"])
    sb1 = jnp.stack([jnp.concatenate([jnp.tile(s1, 2 * wq), jnp.tile(s2, 2 * wq)]),
                     jnp.concatenate([jnp.tile(t1, 2 * wq), jnp.tile(t2, 2 * wq)])])  # (2, n1)
    sb3 = jnp.stack([jnp.tile(s3, 2 * wq), jnp.tile(t3, 2 * wq)])                     # (2, n2)

    # Scoped-VMEM limit derived from actual need (weights + double-buffered blocks + scratch).
    need = 2 * (b1.size * 2 + r2.size * 2 + sb1.size * 4 + sb3.size * 4
                + (h + 2) * (w + 2) * cin * 4 + h * n2 * 4) + h * k2 * 4
    limit = int(min(max(2 * need, 16 << 20), 32 << 20))

    kern = functools.partial(_up_project_kernel, h=h, w=w, cout=cout)
    out = pl.pallas_call(
        kern,
        out_shape=jax.ShapeDtypeStruct((n, h, n2), jnp.float32),
        grid_spec=pltpu.PrefetchScalarGridSpec(
            num_scalar_prefetch=0,
            grid=(n,),
            in_specs=[
                pl.BlockSpec((1, h + 2, (w + 2) * cin), lambda b: (b, 0, 0)),
                pl.BlockSpec((3, (w + 2) * cin, n1), lambda b: (0, 0, 0)),
                pl.BlockSpec((k2, n2), lambda b: (0, 0)),
                pl.BlockSpec((2, n1), lambda b: (0, 0)),
                pl.BlockSpec((2, n2), lambda b: (0, 0)),
            ],
            out_specs=pl.BlockSpec((1, h, n2), lambda b: (b, 0, 0)),
            scratch_shapes=[pltpu.VMEM((h, k2), jnp.float32)],
        ),
        compiler_params=pltpu.CompilerParams(
            dimension_semantics=("parallel",),
            vmem_limit_bytes=limit),
    )(xp, b1, r2, sb1, sb3)

    # lanes are (row-parity, q=2j+pc, co) -> interleaving is a FREE reshape, no transpose.
    return out.reshape(n, 2 * h, 2 * w, cout)


# ---------------------------- Params & pure-JAX reference ---------------------------- #

def init_params(key, cin, cout):
    ks = jax.random.split(key, 12)

    def wgt(k, kh, kw, ci=cin, co=cout):
        return 0.1 * jax.random.normal(k, (kh, kw, ci, co), jnp.float32)

    def bn(k):
        k1, k2, k3, k4 = jax.random.split(k, 4)
        gamma = 1.0 + 0.1 * jax.random.normal(k1, (cout,), jnp.float32)
        beta = 0.1 * jax.random.normal(k2, (cout,), jnp.float32)
        mean = 0.1 * jax.random.normal(k3, (cout,), jnp.float32)
        var = 1.0 + 0.1 * jax.random.uniform(k4, (cout,), jnp.float32)
        return (gamma, beta, mean, var)

    return dict(
        w11=wgt(ks[0], 3, 3), w12=wgt(ks[1], 2, 3), w13=wgt(ks[2], 3, 2), w14=wgt(ks[3], 2, 2),
        w21=wgt(ks[4], 3, 3), w22=wgt(ks[5], 2, 3), w23=wgt(ks[6], 3, 2), w24=wgt(ks[7], 2, 2),
        w3=0.1 * jax.random.normal(ks[8], (3, 3, cout, cout), jnp.float32),
        bn1=bn(ks[9]), bn2=bn(ks[10]), bn3=bn(ks[11]),
    )


def interleave(x1, x2, x3, x4):
    """out[:,2i,2j]=x1, [:,2i,2j+1]=x2, [:,2i+1,2j]=x3, [:,2i+1,2j+1]=x4 (reference only)."""
    n, h, w, ch = x1.shape
    top = jnp.stack([x1, x2], axis=3).reshape(n, h, 2 * w, ch)
    bot = jnp.stack([x3, x4], axis=3).reshape(n, h, 2 * w, ch)
    return jnp.stack([top, bot], axis=2).reshape(n, 2 * h, 2 * w, ch)


def ref_forward(x, p):
    """Pure-JAX reference reproducing the PyTorch forward (NHWC), for validation only."""
    pad = lambda a, t, b, l, r: jnp.pad(a, ((0, 0), (t, b), (l, r), (0, 0)))
    cv = lambda a, wk: lax.conv_general_dilated(
        a, wk, (1, 1), "VALID", dimension_numbers=("NHWC", "HWIO", "NHWC"),
        precision=lax.Precision.HIGHEST)

    def bn(a, q):
        g, b, m, v = q
        return (a - m) / jnp.sqrt(v + _BN_EPS) * g + b

    x11 = cv(pad(x, 1, 1, 1, 1), p["w11"]); x12 = cv(pad(x, 1, 0, 1, 1), p["w12"])
    x13 = cv(pad(x, 1, 1, 1, 0), p["w13"]); x14 = cv(pad(x, 1, 0, 1, 0), p["w14"])
    x21 = cv(pad(x, 1, 1, 1, 1), p["w21"]); x22 = cv(pad(x, 1, 0, 1, 1), p["w22"])
    x23 = cv(pad(x, 1, 1, 1, 0), p["w23"]); x24 = cv(pad(x, 1, 0, 1, 0), p["w24"])
    y1 = jax.nn.relu(bn(interleave(x11, x12, x13, x14), p["bn1"]))
    y1 = bn(cv(pad(y1, 1, 1, 1, 1), p["w3"]), p["bn3"])
    y2 = bn(interleave(x21, x22, x23, x24), p["bn2"])
    return jax.nn.relu(y1 + y2)


# ---------------------------------------- main ---------------------------------------- #

if __name__ == "__main__":
    key = jax.random.PRNGKey(0)
    kx, kp = jax.random.split(key)

    N, CIN, H, W, COUT = 2, 4, 16, 16, 8
    x = jax.random.normal(kx, (N, H, W, CIN), jnp.float32)   # NHWC (NCHW equiv: [2, 4, 16, 16])
    params = init_params(kp, CIN, COUT)

    out = jax.jit(lambda a: up_project(a, params))(x)
    out = jax.block_until_ready(out)

    ref = ref_forward(x, params)
    assert out.shape == (N, 2 * H, 2 * W, COUT), out.shape
    max_err = float(jnp.max(jnp.abs(out - ref)))
    # bf16 matmul operands with f32 accumulation: slightly looser tolerance than pure f32.
    assert jnp.allclose(out, ref, rtol=2e-2, atol=2e-2), max_err

    print("KERNEL_OK")
</pallas_src>

<mosaic_0001>
module attributes {stable_mosaic.version = 11 : i64} {
  func.func @_up_project_kernel(%arg0: i32, %arg1: memref<1x18x72xf32, #tpu.memory_space<vmem>>, %arg2: memref<3x72x1024xbf16, #tpu.memory_space<vmem>>, %arg3: memref<1088x512xbf16, #tpu.memory_space<vmem>>, %arg4: memref<2x1024xf32, #tpu.memory_space<vmem>>, %arg5: memref<2x512xf32, #tpu.memory_space<vmem>>, %arg6: memref<1x16x512xf32, #tpu.memory_space<vmem>>, %arg7: memref<16x1088xf32, #tpu.memory_space<vmem>>) attributes {dimension_semantics = [#tpu.dimension_semantics<parallel>], iteration_bounds = array<i64: 2>, scalar_prefetch = 0 : i64, scratch_operands = 1 : i64, tpu.core_type = #tpu.core_type<tc>, window_params = [{transform_indices = @transform_0, window_bounds = array<i64: 1, 18, 72>}, {pipeline_mode = #tpu.pipeline_mode<synchronous>, transform_indices = @transform_1, window_bounds = array<i64: 3, 72, 1024>}, {pipeline_mode = #tpu.pipeline_mode<synchronous>, transform_indices = @transform_2, window_bounds = array<i64: 1088, 512>}, {pipeline_mode = #tpu.pipeline_mode<synchronous>, transform_indices = @transform_3, window_bounds = array<i64: 2, 1024>}, {pipeline_mode = #tpu.pipeline_mode<synchronous>, transform_indices = @transform_4, window_bounds = array<i64: 2, 512>}, {transform_indices = @transform_5, window_bounds = array<i64: 1, 16, 512>}]} {
    %cst = arith.constant 0.000000e+00 : f32
    %0 = vector.broadcast %cst : f32 to vector<16x1024xf32>
    %c0 = arith.constant 0 : index
    %c0_0 = arith.constant 0 : index
    %c0_1 = arith.constant 0 : index
    %1 = vector.load %arg1[%c0, %c0_0, %c0_1] : memref<1x18x72xf32, #tpu.memory_space<vmem>>, vector<1x16x72xf32>
    %2 = vector.shape_cast %1 : vector<1x16x72xf32> to vector<16x72xf32>
    %3 = arith.truncf %2 : vector<16x72xf32> to vector<16x72xbf16>
    %c0_2 = arith.constant 0 : index
    %c0_3 = arith.constant 0 : index
    %c0_4 = arith.constant 0 : index
    %4 = vector.load %arg2[%c0_2, %c0_3, %c0_4] : memref<3x72x1024xbf16, #tpu.memory_space<vmem>>, vector<1x72x1024xbf16>
    %5 = vector.shape_cast %4 : vector<1x72x1024xbf16> to vector<72x1024xbf16>
    %cst_5 = arith.constant dense<0.000000e+00> : vector<16x1024xf32>
    %6 = tpu.matmul %3, %5, %cst_5 {dimension_numbers = #tpu.dot_dimension_numbers<[1], [0], [0], [1], [0, 0, 1, 1], [], []>} : vector<16x72xbf16>, vector<72x1024xbf16>, vector<16x1024xf32> -> vector<16x1024xf32>
    %7 = arith.addf %0, %6 : vector<16x1024xf32>
    %c0_6 = arith.constant 0 : index
    %c1 = arith.constant 1 : index
    %c0_7 = arith.constant 0 : index
    %8 = vector.load %arg1[%c0_6, %c1, %c0_7] : memref<1x18x72xf32, #tpu.memory_space<vmem>>, vector<1x16x72xf32>
    %9 = vector.shape_cast %8 : vector<1x16x72xf32> to vector<16x72xf32>
    %10 = arith.truncf %9 : vector<16x72xf32> to vector<16x72xbf16>
    %c1_8 = arith.constant 1 : index
    %c0_9 = arith.constant 0 : index
    %c0_10 = arith.constant 0 : index
    %11 = vector.load %arg2[%c1_8, %c0_9, %c0_10] : memref<3x72x1024xbf16, #tpu.memory_space<vmem>>, vector<1x72x1024xbf16>
    %12 = vector.shape_cast %11 : vector<1x72x1024xbf16> to vector<72x1024xbf16>
    %cst_11 = arith.constant dense<0.000000e+00> : vector<16x1024xf32>
    %13 = tpu.matmul %10, %12, %cst_11 {dimension_numbers = #tpu.dot_dimension_numbers<[1], [0], [0], [1], [0, 0, 1, 1], [], []>} : vector<16x72xbf16>, vector<72x1024xbf16>, vector<16x1024xf32> -> vector<16x1024xf32>
    %14 = arith.addf %7, %13 : vector<16x1024xf32>
    %c0_12 = arith.constant 0 : index
    %c2 = arith.constant 2 : index
    %c0_13 = arith.constant 0 : index
    %15 = vector.load %arg1[%c0_12, %c2, %c0_13] : memref<1x18x72xf32, #tpu.memory_space<vmem>>, vector<1x16x72xf32>
    %16 = vector.shape_cast %15 : vector<1x16x72xf32> to vector<16x72xf32>
    %17 = arith.truncf %16 : vector<16x72xf32> to vector<16x72xbf16>
    %c2_14 = arith.constant 2 : index
    %c0_15 = arith.constant 0 : index
    %c0_16 = arith.constant 0 : index
    %18 = vector.load %arg2[%c2_14, %c0_15, %c0_16] : memref<3x72x1024xbf16, #tpu.memory_space<vmem>>, vector<1x72x1024xbf16>
    %19 = vector.shape_cast %18 : vector<1x72x1024xbf16> to vector<72x1024xbf16>
    %cst_17 = arith.constant dense<0.000000e+00> : vector<16x1024xf32>
    %20 = tpu.matmul %17, %19, %cst_17 {dimension_numbers = #tpu.dot_dimension_numbers<[1], [0], [0], [1], [0, 0, 1, 1], [], []>} : vector<16x72xbf16>, vector<72x1024xbf16>, vector<16x1024xf32> -> vector<16x1024xf32>
    %21 = arith.addf %14, %20 : vector<16x1024xf32>
    %c0_18 = arith.constant 0 : index
    %c0_19 = arith.constant 0 : index
    %22 = vector.load %arg4[%c0_18, %c0_19] : memref<2x1024xf32, #tpu.memory_space<vmem>>, vector<1x1024xf32>
    %23 = vector.broadcast %22 : vector<1x1024xf32> to vector<16x1024xf32>
    %24 = arith.mulf %21, %23 : vector<16x1024xf32>
    %c1_20 = arith.constant 1 : index
    %c0_21 = arith.constant 0 : index
    %25 = vector.load %arg4[%c1_20, %c0_21] : memref<2x1024xf32, #tpu.memory_space<vmem>>, vector<1x1024xf32>
    %26 = vector.broadcast %25 : vector<1x1024xf32> to vector<16x1024xf32>
    %27 = arith.addf %24, %26 : vector<16x1024xf32>
    %28 = vector.extract_strided_slice %27 {offsets = [0, 0], sizes = [16, 512], strides = [1, 1]} : vector<16x1024xf32> to vector<16x512xf32>
    %cst_22 = arith.constant 0.000000e+00 : f32
    %29 = vector.broadcast %cst_22 : f32 to vector<16x512xf32>
    %30 = arith.maximumf %28, %29 : vector<16x512xf32>
    %31 = vector.extract_strided_slice %27 {offsets = [0, 512], sizes = [16, 512], strides = [1, 1]} : vector<16x1024xf32> to vector<16x512xf32>
    %cst_23 = arith.constant 0.000000e+00 : f32
    %32 = vector.broadcast %cst_23 : f32 to vector<16x1088xf32>
    %c0_24 = arith.constant 0 : index
    %c0_25 = arith.constant 0 : index
    %33 = vector.load %arg7[%c0_24, %c0_25] : memref<16x1088xf32, #tpu.memory_space<vmem>>, vector<16x1088xf32>
    tpu.vector_store %arg7[%c0_24, %c0_25], %32 {strides = array<i32>} : memref<16x1088xf32, #tpu.memory_space<vmem>>, vector<16x1088xf32>,
    %34 = vector.extract_strided_slice %30 {offsets = [0, 256], sizes = [15, 256], strides = [1, 1]} : vector<16x512xf32> to vector<15x256xf32>
    %c1_26 = arith.constant 1 : index
    %c8 = arith.constant 8 : index
    %35 = vector.load %arg7[%c1_26, %c8] : memref<16x1088xf32, #tpu.memory_space<vmem>>, vector<15x256xf32>
    tpu.vector_store %arg7[%c1_26, %c8], %34 {strides = array<i32>} : memref<16x1088xf32, #tpu.memory_space<vmem>>, vector<15x256xf32>,
    %36 = vector.extract_strided_slice %30 {offsets = [0, 0], sizes = [16, 256], strides = [1, 1]} : vector<16x512xf32> to vector<16x256xf32>
    %c0_27 = arith.constant 0 : index
    %c280 = arith.constant 280 : index
    %37 = vector.load %arg7[%c0_27, %c280] : memref<16x1088xf32, #tpu.memory_space<vmem>>, vector<16x256xf32>
    tpu.vector_store %arg7[%c0_27, %c280], %36 {strides = array<i32>} : memref<16x1088xf32, #tpu.memory_space<vmem>>, vector<16x256xf32>,
    %38 = vector.extract_strided_slice %30 {offsets = [0, 256], sizes = [16, 256], strides = [1, 1]} : vector<16x512xf32> to vector<16x256xf32>
    %c0_28 = arith.constant 0 : index
    %c552 = arith.constant 552 : index
    %39 = vector.load %arg7[%c0_28, %c552] : memref<16x1088xf32, #tpu.memory_space<vmem>>, vector<16x256xf32>
    tpu.vector_store %arg7[%c0_28, %c552], %38 {strides = array<i32>} : memref<16x1088xf32, #tpu.memory_space<vmem>>, vector<16x256xf32>,
    %40 = vector.extract_strided_slice %30 {offsets = [1, 0], sizes = [15, 256], strides = [1, 1]} : vector<16x512xf32> to vector<15x256xf32>
    %c0_29 = arith.constant 0 : index
    %c824 = arith.constant 824 : index
    %41 = vector.load %arg7[%c0_29, %c824] : memref<16x1088xf32, #tpu.memory_space<vmem>>, vector<15x256xf32>
    tpu.vector_store %arg7[%c0_29, %c824], %40 {strides = array<i32>} : memref<16x1088xf32, #tpu.memory_space<vmem>>, vector<15x256xf32>,
    %c0_30 = arith.constant 0 : index
    %c0_31 = arith.constant 0 : index
    %42 = vector.load %arg7[%c0_30, %c0_31] : memref<16x1088xf32, #tpu.memory_space<vmem>>, vector<16x1088xf32>
    %43 = arith.truncf %42 : vector<16x1088xf32> to vector<16x1088xbf16>
    %c0_32 = arith.constant 0 : index
    %c0_33 = arith.constant 0 : index
    %44 = vector.load %arg3[%c0_32, %c0_33] : memref<1088x512xbf16, #tpu.memory_space<vmem>>, vector<1088x512xbf16>
    %cst_34 = arith.constant dense<0.000000e+00> : vector<16x512xf32>
    %45 = tpu.matmul %43, %44, %cst_34 {dimension_numbers = #tpu.dot_dimension_numbers<[1], [0], [0], [1], [0, 0, 1, 1], [], []>} : vector<16x1088xbf16>, vector<1088x512xbf16>, vector<16x512xf32> -> vector<16x512xf32>
    %c0_35 = arith.constant 0 : index
    %c0_36 = arith.constant 0 : index
    %46 = vector.load %arg5[%c0_35, %c0_36] : memref<2x512xf32, #tpu.memory_space<vmem>>, vector<1x512xf32>
    %47 = vector.broadcast %46 : vector<1x512xf32> to vector<16x512xf32>
    %48 = arith.mulf %45, %47 : vector<16x512xf32>
    %c1_37 = arith.constant 1 : index
    %c0_38 = arith.constant 0 : index
    %49 = vector.load %arg5[%c1_37, %c0_38] : memref<2x512xf32, #tpu.memory_space<vmem>>, vector<1x512xf32>
    %50 = vector.broadcast %49 : vector<1x512xf32> to vector<16x512xf32>
    %51 = arith.addf %48, %50 : vector<16x512xf32>
    %52 = arith.addf %51, %31 : vector<16x512xf32>
    %cst_39 = arith.constant 0.000000e+00 : f32
    %53 = vector.broadcast %cst_39 : f32 to vector<16x512xf32>
    %54 = arith.maximumf %52, %53 : vector<16x512xf32>
    %c0_40 = arith.constant 0 : index
    %c0_41 = arith.constant 0 : index
    %c0_42 = arith.constant 0 : index
    %55 = vector.load %arg6[%c0_40, %c0_41, %c0_42] : memref<1x16x512xf32, #tpu.memory_space<vmem>>, vector<1x16x512xf32>
    %56 = vector.shape_cast %55 : vector<1x16x512xf32> to vector<16x512xf32>
    %57 = vector.shape_cast %54 : vector<16x512xf32> to vector<1x16x512xf32>
    tpu.vector_store %arg6[%c0_40, %c0_41, %c0_42], %57 {strides = array<i32>} : memref<1x16x512xf32, #tpu.memory_space<vmem>>, vector<1x16x512xf32>,
    return
  }
  func.func @transform_0(%arg0: i32) -> (i32, i32, i32) {
    %c0_i32 = arith.constant 0 : i32
    %c0_i32_0 = arith.constant 0 : i32
    %c0_i32_1 = arith.constant 0 : i32
    return %arg0, %c0_i32, %c0_i32_0 : i32, i32, i32
  }
  func.func @transform_1(%arg0: i32) -> (i32, i32, i32) {
    %c0_i32 = arith.constant 0 : i32
    %c0_i32_0 = arith.constant 0 : i32
    %c0_i32_1 = arith.constant 0 : i32
    %c0_i32_2 = arith.constant 0 : i32
    return %c0_i32, %c0_i32_0, %c0_i32_1 : i32, i32, i32
  }
  func.func @transform_2(%arg0: i32) -> (i32, i32) {
    %c0_i32 = arith.constant 0 : i32
    %c0_i32_0 = arith.constant 0 : i32
    %c0_i32_1 = arith.constant 0 : i32
    return %c0_i32, %c0_i32_0 : i32, i32
  }
  func.func @transform_3(%arg0: i32) -> (i32, i32) {
    %c0_i32 = arith.constant 0 : i32
    %c0_i32_0 = arith.constant 0 : i32
    %c0_i32_1 = arith.constant 0 : i32
    return %c0_i32, %c0_i32_0 : i32, i32
  }
  func.func @transform_4(%arg0: i32) -> (i32, i32) {
    %c0_i32 = arith.constant 0 : i32
    %c0_i32_0 = arith.constant 0 : i32
    %c0_i32_1 = arith.constant 0 : i32
    return %c0_i32, %c0_i32_0 : i32, i32
  }
  func.func @transform_5(%arg0: i32) -> (i32, i32, i32) {
    %c0_i32 = arith.constant 0 : i32
    %c0_i32_0 = arith.constant 0 : i32
    %c0_i32_1 = arith.constant 0 : i32
    return %arg0, %c0_i32, %c0_i32_0 : i32, i32, i32
  }
}

</mosaic_0001>

<llo_original>
// kernel: tile.26
$region0: #{tile.26}
  #allocation0 [shape = 's32[1]{0}', space=sflag, size = 0x4, scoped, tag = 'scoped memory for tile.26']
  %s0 = inlined_call_operand.vmem [shape: f32[8], index: 0, kind: input, shape index: {}]
  %s1 = inlined_call_operand.vmem [shape: f32[64,8], index: 1, kind: output, shape index: {}]
  // Predicated region
  $region2: #{tile.26} parent=0 // pred_check
    _
  $region3: #{tile.26} parent=0 // pred_check_branch
    %3 = sbr.rel (0) target = $region5
  $region4: #{tile.26} parent=0 // pred_region
    _
  $region5: #{tile.26} parent=0 // pred_fallthru
    _
  %v4 = vld [vmem:[%s0] ss:$0 sm:$0xff]
  %5 = vst [vmem:[%s1] sm:$0xff] %v4
  %s6 = scalar_lea.vmem %s1, 8
  %7 = vst [vmem:[%s6] sm:$0xff] %v4
  %s8 = scalar_lea.vmem %s1, 16
  %9 = vst [vmem:[%s8] sm:$0xff] %v4
  %s10 = scalar_lea.vmem %s1, 24
  %11 = vst [vmem:[%s10] sm:$0xff] %v4
  %s12 = scalar_lea.vmem %s1, 32
  %13 = vst [vmem:[%s12] sm:$0xff] %v4
  %s14 = scalar_lea.vmem %s1, 40
  %15 = vst [vmem:[%s14] sm:$0xff] %v4
  %s16 = scalar_lea.vmem %s1, 48
  %17 = vst [vmem:[%s16] sm:$0xff] %v4
  %s18 = scalar_lea.vmem %s1, 56
  %19 = vst [vmem:[%s18] sm:$0xff] %v4

// kernel: tile.27
$region0: #{tile.27}
  %s0 = inlined_call_operand.vmem [shape: f32[64,8], index: 0, kind: input, shape index: {}]
  %s1 = inlined_call_operand.vmem [shape: f32[512], index: 1, kind: output, shape index: {}]
  $region1: #{tile.27} parent=0
    #allocation0 [shape = 'u8[4096]{0}', space=vmem, size = 0x1000, scoped, tag = 'scoped mem for output reshape']
    %s2 = smov 3
    %v3 = vld [vmem:[%s0] ss:$16 sm:%s2]
    %s4 = smov 12
    %v5 = vld [vmem:[%s0] ss:$16 sm:%s4]
    %vm6 = vcmask 1043458
    %v7 = vsel %vm6, %v5, %v3
    %vm8 = vcmask 64512
    %9 = vst.msk [vmem:[#allocation0] sm:$0xf] %vm8, %v7
    %s10 = scalar_lea.vmem %s0, 15
    %s11 = smov 3
    %v12 = vld [vmem:[%s10] ss:$16 sm:%s11]
    %s13 = scalar_lea.vmem %s0, 15
    %s14 = smov 12
    %v15 = vld [vmem:[%s13] ss:$16 sm:%s14]
    %vm16 = vcmask 1043458
    %v17 = vsel %vm16, %v15, %v12
    %18 = vrot.lane.b32.xlu0 %v17, 120
    %v19 = vpop.permute.xlu0 %18
    %vm20 = vcmask 1048512
    %21 = vst.msk [vmem:[#allocation0] sm:$0xf] %vm20, %v19
    %s22 = scalar_lea.vmem %s0, 14
    %s23 = smov 3
    %v24 = vld [vmem:[%s22] ss:$16 sm:%s23]
    %s25 = scalar_lea.vmem %s0, 14
    %s26 = smov 12
    %v27 = vld [vmem:[%s25] ss:$16 sm:%s26]
    %vm28 = vcmask 1043458
    %v29 = vsel %vm28, %v27, %v24
    %30 = vrot.lane.b32.xlu0 %v29, 112
    %v31 = vpop.permute.xlu0 %30
    %vm32 = vcmask 982912
    %33 = vst.msk [vmem:[#allocation0] sm:$0xf] %vm32, %v31
    %s34 = scalar_lea.vmem %s0, 13
    %s35 = smov 3
    %v36 = vld [vmem:[%s34] ss:$16 sm:%s35]
    %s37 = scalar_lea.vmem %s0, 13
    %s38 = smov 12
    %v39 = vld [vmem:[%s37] ss:$16 sm:%s38]
    %vm40 = vcmask 1043458
    %v41 = vsel %vm40, %v39, %v36
    %42 = vrot.lane.b32.xlu0 %v41, 104
    %v43 = vpop.permute.xlu0 %42
    %vm44 = vcmask 917312
    %45 = vst.msk [vmem:[#allocation0] sm:$0xf] %vm44, %v43
    %s46 = scalar_lea.vmem %s0, 12
    %s47 = smov 3
    %v48 = vld [vmem:[%s46] ss:$16 sm:%s47]
    %s49 = scalar_lea.vmem %s0, 12
    %s50 = smov 12
    %v51 = vld [vmem:[%s49] ss:$16 sm:%s50]
    %vm52 = vcmask 1043458
    %v53 = vsel %vm52, %v51, %v48
    %54 = vrot.lane.b32.xlu0 %v53, 96
    %v55 = vpop.permute.xlu0 %54
    %vm56 = vcmask 851712
    %57 = vst.msk [vmem:[#allocation0] sm:$0xf] %vm56, %v55
    %s58 = scalar_lea.vmem %s0, 11
    %s59 = smov 3
    %v60 = vld [vmem:[%s58] ss:$16 sm:%s59]
    %s61 = scalar_lea.vmem %s0, 11
    %s62 = smov 12
    %v63 = vld [vmem:[%s61] ss:$16 sm:%s62]
    %vm64 = vcmask 1043458
    %v65 = vsel %vm64, %v63, %v60
    %66 = vrot.lane.b32.xlu0 %v65, 88
    %v67 = vpop.permute.xlu0 %66
    %vm68 = vcmask 786112
    %69 = vst.msk [vmem:[#allocation0] sm:$0xf] %vm68, %v67
    %s70 = scalar_lea.vmem %s0, 10
    %s71 = smov 3
    %v72 = vld [vmem:[%s70] ss:$16 sm:%s71]
    %s73 = scalar_lea.vmem %s0, 10
    %s74 = smov 12
    %v75 = vld [vmem:[%s73] ss:$16 sm:%s74]
    %vm76 = vcmask 1043458
    %v77 = vsel %vm76, %v75, %v72
    %78 = vrot.lane.b32.xlu0 %v77, 80
    %v79 = vpop.permute.xlu0 %78
    %vm80 = vcmask 720512
    %81 = vst.msk [vmem:[#allocation0] sm:$0xf] %vm80, %v79
    %s82 = scalar_lea.vmem %s0, 9
    %s83 = smov 3
    %v84 = vld [vmem:[%s82] ss:$16 sm:%s83]
    %s85 = scalar_lea.vmem %s0, 9
    %s86 = smov 12
    %v87 = vld [vmem:[%s85] ss:$16 sm:%s86]
    %vm88 = vcmask 1043458
    %v89 = vsel %vm88, %v87, %v84
    %90 = vrot.lane.b32.xlu0 %v89, 72
    %v91 = vpop.permute.xlu0 %90
    %vm92 = vcmask 654912
    %93 = vst.msk [vmem:[#allocation0] sm:$0xf] %vm92, %v91
    %s94 = scalar_lea.vmem %s0, 8
    %s95 = smov 3
    %v96 = vld [vmem:[%s94] ss:$16 sm:%s95]
    %s97 = scalar_lea.vmem %s0, 8
    %s98 = smov 12
    %v99 = vld [vmem:[%s97] ss:$16 sm:%s98]
    %vm100 = vcmask 1043458
    %v101 = vsel %vm100, %v99, %v96
    %102 = vrot.lane.b32.xlu0 %v101, 64
    %v103 = vpop.permute.xlu0 %102
    %vm104 = vcmask 589312
    %105 = vst.msk [vmem:[#allocation0] sm:$0xf] %vm104, %v103
    %s106 = scalar_lea.vmem %s0, 7
    %s107 = smov 3
    %v108 = vld [vmem:[%s106] ss:$16 sm:%s107]
    %s109 = scalar_lea.vmem %s0, 7
    %s110 = smov 12
    %v111 = vld [vmem:[%s109] ss:$16 sm:%s110]
    %vm112 = vcmask 1043458
    %v113 = vsel %vm112, %v111, %v108
    %114 = vrot.lane.b32.xlu0 %v113, 56
    %v115 = vpop.permute.xlu0 %114
    %vm116 = vcmask 523712
    %117 = vst.msk [vmem:[#allocation0] sm:$0xf] %vm116, %v115
    %s118 = scalar_lea.vmem %s0, 6
    %s119 = smov 3
    %v120 = vld [vmem:[%s118] ss:$16 sm:%s119]
    %s121 = scalar_lea.vmem %s0, 6
    %s122 = smov 12
    %v123 = vld [vmem:[%s121] ss:$16 sm:%s122]
    %vm124 = vcmask 1043458
    %v125 = vsel %vm124, %v123, %v120
    %126 = vrot.lane.b32.xlu0 %v125, 48
    %v127 = vpop.permute.xlu0 %126
    %vm128 = vcmask 458112
    %129 = vst.msk [vmem:[#allocation0] sm:$0xf] %vm128, %v127
    %s130 = scalar_lea.vmem %s0, 5
    %s131 = smov 3
    %v132 = vld [vmem:[%s130] ss:$16 sm:%s131]
    %s133 = scalar_lea.vmem %s0, 5
    %s134 = smov 12
    %v135 = vld [vmem:[%s133] ss:$16 sm:%s134]
    %vm136 = vcmask 1043458
    %v137 = vsel %vm136, %v135, %v132
    %138 = vrot.lane.b32.xlu0 %v137, 40
    %v139 = vpop.permute.xlu0 %138
    %vm140 = vcmask 392512
    %141 = vst.msk [vmem:[#allocation0] sm:$0xf] %vm140, %v139
    %s142 = scalar_lea.vmem %s0, 4
    %s143 = smov 3
    %v144 = vld [vmem:[%s142] ss:$16 sm:%s143]
    %s145 = scalar_lea.vmem %s0, 4
    %s146 = smov 12
    %v147 = vld [vmem:[%s145] ss:$16 sm:%s146]
    %vm148 = vcmask 1043458
    %v149 = vsel %vm148, %v147, %v144
    %150 = vrot.lane.b32.xlu0 %v149, 32
    %v151 = vpop.permute.xlu0 %150
    %vm152 = vcmask 326912
    %153 = vst.msk [vmem:[#allocation0] sm:$0xf] %vm152, %v151
    %s154 = scalar_lea.vmem %s0, 3
    %s155 = smov 3
    %v156 = vld [vmem:[%s154] ss:$16 sm:%s155]
    %s157 = scalar_lea.vmem %s0, 3
    %s158 = smov 12
    %v159 = vld [vmem:[%s157] ss:$16 sm:%s158]
    %vm160 = vcmask 1043458
    %v161 = vsel %vm160, %v159, %v156
    %162 = vrot.lane.b32.xlu0 %v161, 24
    %v163 = vpop.permute.xlu0 %162
    %vm164 = vcmask 261312
    %165 = vst.msk [vmem:[#allocation0] sm:$0xf] %vm164, %v163
    %s166 = scalar_lea.vmem %s0, 2
    %s167 = smov 3
    %v168 = vld [vmem:[%s166] ss:$16 sm:%s167]
    %s169 = scalar_lea.vmem %s0, 2
    %s170 = smov 12
    %v171 = vld [vmem:[%s169] ss:$16 sm:%s170]
    %vm172 = vcmask 1043458
    %v173 = vsel %vm172, %v171, %v168
    %174 = vrot.lane.b32.xlu0 %v173, 16
    %v175 = vpop.permute.xlu0 %174
    %vm176 = vcmask 195712
    %177 = vst.msk [vmem:[#allocation0] sm:$0xf] %vm176, %v175
    %s178 = scalar_lea.vmem %s0, 1
    %s179 = smov 3
    %v180 = vld [vmem:[%s178] ss:$16 sm:%s179]
    %s181 = scalar_lea.vmem %s0, 1
    %s182 = smov 12
    %v183 = vld [vmem:[%s181] ss:$16 sm:%s182]
    %vm184 = vcmask 1043458
    %v185 = vsel %vm184, %v183, %v180
    %186 = vrot.lane.b32.xlu0 %v185, 8
    %v187 = vpop.permute.xlu0 %186
    %vm188 = vcmask 130112
    %189 = vst.msk [vmem:[#allocation0] sm:$0xf] %vm188, %v187
    %s191 = sshll.u32 1, 4
    %s192 = ssub.s32 %s191, 1
    %v194 = vld [vmem:[#allocation0] sm:%s192]
    %s195 = sshll.u32 1, 4
    %s196 = ssub.s32 %s195, 1
    %197 = vst [vmem:[%s1] sm:%s196] %v194

// kernel: tile.46
$region0: #{tile.46}
  %s0 = inlined_call_operand.vmem [shape: f32[64,8], index: 0, kind: input, shape index: {}]
  %s1 = inlined_call_operand.vmem [shape: f32[1,512], index: 1, kind: output, shape index: {}]
  $region1: #{tile.46} parent=0
    #allocation0 [shape = 'u8[16384]{0}', space=vmem, size = 0x4000, scoped, tag = 'scoped mem for output reshape']
    %s2 = smov 3
    %v3 = vld [vmem:[%s0] ss:$16 sm:%s2]
    %s4 = smov 12
    %v5 = vld [vmem:[%s0] ss:$16 sm:%s4]
    %vm6 = vcmask 1043458
    %v7 = vsel %vm6, %v5, %v3
    %vm8 = vcmask 64512
    %9 = vst.msk [vmem:[#allocation0] ss:$8 sm:$0xf] %vm8, %v7
    %s10 = scalar_lea.vmem %s0, 15
    %s11 = smov 3
    %v12 = vld [vmem:[%s10] ss:$16 sm:%s11]
    %s13 = scalar_lea.vmem %s0, 15
    %s14 = smov 12
    %v15 = vld [vmem:[%s13] ss:$16 sm:%s14]
    %vm16 = vcmask 1043458
    %v17 = vsel %vm16, %v15, %v12
    %18 = vrot.lane.b32.xlu0 %v17, 120
    %v19 = vpop.permute.xlu0 %18
    %vm20 = vcmask 1048512
    %21 = vst.msk [vmem:[#allocation0] ss:$8 sm:$0xf] %vm20, %v19
    %s22 = scalar_lea.vmem %s0, 14
    %s23 = smov 3
    %v24 = vld [vmem:[%s22] ss:$16 sm:%s23]
    %s25 = scalar_lea.vmem %s0, 14
    %s26 = smov 12
    %v27 = vld [vmem:[%s25] ss:$16 sm:%s26]
    %vm28 = vcmask 1043458
    %v29 = vsel %vm28, %v27, %v24
    %30 = vrot.lane.b32.xlu0 %v29, 112
    %v31 = vpop.permute.xlu0 %30
    %vm32 = vcmask 982912
    %33 = vst.msk [vmem:[#allocation0] ss:$8 sm:$0xf] %vm32, %v31
    %s34 = scalar_lea.vmem %s0, 13
    %s35 = smov 3
    %v36 = vld [vmem:[%s34] ss:$16 sm:%s35]
    %s37 = scalar_lea.vmem %s0, 13
    %s38 = smov 12
    %v39 = vld [vmem:[%s37] ss:$16 sm:%s38]
    %vm40 = vcmask 1043458
    %v41 = vsel %vm40, %v39, %v36
    %42 = vrot.lane.b32.xlu0 %v41, 104
    %v43 = vpop.permute.xlu0 %42
    %vm44 = vcmask 917312
    %45 = vst.msk [vmem:[#allocation0] ss:$8 sm:$0xf] %vm44, %v43
    %s46 = scalar_lea.vmem %s0, 12
    %s47 = smov 3
    %v48 = vld [vmem:[%s46] ss:$16 sm:%s47]
    %s49 = scalar_lea.vmem %s0, 12
    %s50 = smov 12
    %v51 = vld [vmem:[%s49] ss:$16 sm:%s50]
    %vm52 = vcmask 1043458
    %v53 = vsel %vm52, %v51, %v48
    %54 = vrot.lane.b32.xlu0 %v53, 96
    %v55 = vpop.permute.xlu0 %54
    %vm56 = vcmask 851712
    %57 = vst.msk [vmem:[#allocation0] ss:$8 sm:$0xf] %vm56, %v55
    %s58 = scalar_lea.vmem %s0, 11
    %s59 = smov 3
    %v60 = vld [vmem:[%s58] ss:$16 sm:%s59]
    %s61 = scalar_lea.vmem %s0, 11
    %s62 = smov 12
    %v63 = vld [vmem:[%s61] ss:$16 sm:%s62]
    %vm64 = vcmask 1043458
    %v65 = vsel %vm64, %v63, %v60
    %66 = vrot.lane.b32.xlu0 %v65, 88
    %v67 = vpop.permute.xlu0 %66
    %vm68 = vcmask 786112
    %69 = vst.msk [vmem:[#allocation0] ss:$8 sm:$0xf] %vm68, %v67
    %s70 = scalar_lea.vmem %s0, 10
    %s71 = smov 3
    %v72 = vld [vmem:[%s70] ss:$16 sm:%s71]
    %s73 = scalar_lea.vmem %s0, 10
    %s74 = smov 12
    %v75 = vld [vmem:[%s73] ss:$16 sm:%s74]
    %vm76 = vcmask 1043458
    %v77 = vsel %vm76, %v75, %v72
    %78 = vrot.lane.b32.xlu0 %v77, 80
    %v79 = vpop.permute.xlu0 %78
    %vm80 = vcmask 720512
    %81 = vst.msk [vmem:[#allocation0] ss:$8 sm:$0xf] %vm80, %v79
    %s82 = scalar_lea.vmem %s0, 9
    %s83 = smov 3
    %v84 = vld [vmem:[%s82] ss:$16 sm:%s83]
    %s85 = scalar_lea.vmem %s0, 9
    %s86 = smov 12
    %v87 = vld [vmem:[%s85] ss:$16 sm:%s86]
    %vm88 = vcmask 1043458
    %v89 = vsel %vm88, %v87, %v84
    %90 = vrot.lane.b32.xlu0 %v89, 72
    %v91 = vpop.permute.xlu0 %90
    %vm92 = vcmask 654912
    %93 = vst.msk [vmem:[#allocation0] ss:$8 sm:$0xf] %vm92, %v91
    %s94 = scalar_lea.vmem %s0, 8
    %s95 = smov 3
    %v96 = vld [vmem:[%s94] ss:$16 sm:%s95]
    %s97 = scalar_lea.vmem %s0, 8
    %s98 = smov 12
    %v99 = vld [vmem:[%s97] ss:$16 sm:%s98]
    %vm100 = vcmask 1043458
    %v101 = vsel %vm100, %v99, %v96
    %102 = vrot.lane.b32.xlu0 %v101, 64
    %v103 = vpop.permute.xlu0 %102
    %vm104 = vcmask 589312
    %105 = vst.msk [vmem:[#allocation0] ss:$8 sm:$0xf] %vm104, %v103
    %s106 = scalar_lea.vmem %s0, 7
    %s107 = smov 3
    %v108 = vld [vmem:[%s106] ss:$16 sm:%s107]
    %s109 = scalar_lea.vmem %s0, 7
    %s110 = smov 12
    %v111 = vld [vmem:[%s109] ss:$16 sm:%s110]
    %vm112 = vcmask 1043458
    %v113 = vsel %vm112, %v111, %v108
    %114 = vrot.lane.b32.xlu0 %v113, 56
    %v115 = vpop.permute.xlu0 %114
    %vm116 = vcmask 523712
    %117 = vst.msk [vmem:[#allocation0] ss:$8 sm:$0xf] %vm116, %v115
    %s118 = scalar_lea.vmem %s0, 6
    %s119 = smov 3
    %v120 = vld [vmem:[%s118] ss:$16 sm:%s119]
    %s121 = scalar_lea.vmem %s0, 6
    %s122 = smov 12
    %v123 = vld [vmem:[%s121] ss:$16 sm:%s122]
    %vm124 = vcmask 1043458
    %v125 = vsel %vm124, %v123, %v120
    %126 = vrot.lane.b32.xlu0 %v125, 48
    %v127 = vpop.permute.xlu0 %126
    %vm128 = vcmask 458112
    %129 = vst.msk [vmem:[#allocation0] ss:$8 sm:$0xf] %vm128, %v127
    %s130 = scalar_lea.vmem %s0, 5
    %s131 = smov 3
    %v132 = vld [vmem:[%s130] ss:$16 sm:%s131]
    %s133 = scalar_lea.vmem %s0, 5
    %s134 = smov 12
    %v135 = vld [vmem:[%s133] ss:$16 sm:%s134]
    %vm136 = vcmask 1043458
    %v137 = vsel %vm136, %v135, %v132
    %138 = vrot.lane.b32.xlu0 %v137, 40
    %v139 = vpop.permute.xlu0 %138
    %vm140 = vcmask 392512
    %141 = vst.msk [vmem:[#allocation0] ss:$8 sm:$0xf] %vm140, %v139
    %s142 = scalar_lea.vmem %s0, 4
    %s143 = smov 3
    %v144 = vld [vmem:[%s142] ss:$16 sm:%s143]
    %s145 = scalar_lea.vmem %s0, 4
    %s146 = smov 12
    %v147 = vld [vmem:[%s145] ss:$16 sm:%s146]
    %vm148 = vcmask 1043458
    %v149 = vsel %vm148, %v147, %v144
    %150 = vrot.lane.b32.xlu0 %v149, 32
    %v151 = vpop.permute.xlu0 %150
    %vm152 = vcmask 326912
    %153 = vst.msk [vmem:[#allocation0] ss:$8 sm:$0xf] %vm152, %v151
    %s154 = scalar_lea.vmem %s0, 3
    %s155 = smov 3
    %v156 = vld [vmem:[%s154] ss:$16 sm:%s155]
    %s157 = scalar_lea.vmem %s0, 3
    %s158 = smov 12
    %v159 = vld [vmem:[%s157] ss:$16 sm:%s158]
    %vm160 = vcmask 1043458
    %v161 = vsel %vm160, %v159, %v156
    %162 = vrot.lane.b32.xlu0 %v161, 24
    %v163 = vpop.permute.xlu0 %162
    %vm164 = vcmask 261312
    %165 = vst.msk [vmem:[#allocation0] ss:$8 sm:$0xf] %vm164, %v163
    %s166 = scalar_lea.vmem %s0, 2
    %s167 = smov 3
    %v168 = vld [vmem:[%s166] ss:$16 sm:%s167]
    %s169 = scalar_lea.vmem %s0, 2
    %s170 = smov 12
    %v171 = vld [vmem:[%s169] ss:$16 sm:%s170]
    %vm172 = vcmask 1043458
    %v173 = vsel %vm172, %v171, %v168
    %174 = vrot.lane.b32.xlu0 %v173, 16
    %v175 = vpop.permute.xlu0 %174
    %vm176 = vcmask 195712
    %177 = vst.msk [vmem:[#allocation0] ss:$8 sm:$0xf] %vm176, %v175
    %s178 = scalar_lea.vmem %s0, 1
    %s179 = smov 3
    %v180 = vld [vmem:[%s178] ss:$16 sm:%s179]
    %s181 = scalar_lea.vmem %s0, 1
    %s182 = smov 12
    %v183 = vld [vmem:[%s181] ss:$16 sm:%s182]
    %vm184 = vcmask 1043458
    %v185 = vsel %vm184, %v183, %v180
    %186 = vrot.lane.b32.xlu0 %v185, 8
    %v187 = vpop.permute.xlu0 %186
    %vm188 = vcmask 130112
    %189 = vst.msk [vmem:[#allocation0] ss:$8 sm:$0xf] %vm188, %v187
    %s191 = sshll.u32 1, 1
    %s192 = ssub.s32 %s191, 1
    %v194 = vld [vmem:[#allocation0] sm:%s192]
    %s195 = sshll.u32 1, 1
    %s196 = ssub.s32 %s195, 1
    %197 = vst [vmem:[%s1] sm:%s196] %v194
    %s198 = scalar_lea.vmem [#allocation0], 8
    %v199 = vld [vmem:[%s198] sm:%s192]
    %s200 = sshll.u32 1, 1
    %s201 = ssub.s32 %s200, 1
    %s202 = scalar_lea.vmem %s1, 1
    %203 = vst [vmem:[%s202] sm:%s201] %v199
    %s204 = scalar_lea.vmem [#allocation0], 16
    %v205 = vld [vmem:[%s204] sm:%s192]
    %s206 = sshll.u32 1, 1
    %s207 = ssub.s32 %s206, 1
    %s208 = smul.addr 1, 2
    %s209 = scalar_lea.vmem %s1, %s208
    %210 = vst [vmem:[%s209] sm:%s207] %v205
    %s211 = scalar_lea.vmem [#allocation0], 24
    %v212 = vld [vmem:[%s211] sm:%s192]
    %s213 = sshll.u32 1, 1
    %s214 = ssub.s32 %s213, 1
    %s215 = smul.addr 1, 3
    %s216 = scalar_lea.vmem %s1, %s215
    %217 = vst [vmem:[%s216] sm:%s214] %v212

// kernel: _lambda_.1
$region0: #{_lambda_.1}
  #allocation0 [shape = 'u32[]', space=smem, size = 0x4, offset = 0x4, fixed_abs, tag = 'smem constant byte address 0x4 - core index']
  #allocation1 [shape = 'u32[144,128]{1,0:T(1,128)}', space=vmem, size = 0x12000, scoped, tag = 'internal scratch']
  #allocation2 [shape = 'f32[16,1088]{1,0:T(8,128)}', space=vmem, size = 0x12000, scoped, tag = 'scratch operand']
  %s0 = inlined_call_operand.vmem [shape: f32[2,18,72], index: 0, kind: input, shape index: {}]
  %s1 = inlined_call_operand.vmem [shape: bf16[3,72,1024], index: 1, kind: input, shape index: {}]
  %s2 = inlined_call_operand.vmem [shape: bf16[1088,512], index: 2, kind: input, shape index: {}]
  %s3 = inlined_call_operand.vmem [shape: f32[2,1024], index: 3, kind: input, shape index: {}]
  %s4 = inlined_call_operand.vmem [shape: f32[2,512], index: 4, kind: input, shape index: {}]
  %s5 = inlined_call_operand.vmem [shape: f32[2,16,512], index: 5, kind: output, shape index: {}]
  %s6 = sld [smem:[#allocation0]]
  $region53: #{_lambda_.1} parent=0
    _
  %s8 = ssub.s32 1, %s6
  %s9 = scalar_select 0, %s8, %s6
  loop: start=0, step=1, limit=4
  $region2: #{_lambda_.1} parent=0 // loop_pre_header
    _
  $region3: #{_lambda_.1} parent=0 // loop_header
    %s11 = sphi 0, %s15
    %p12 = scmp.ge.s32.totalorder %s11, 4
    %s21 = sphi 0, %s23
    %s24 = sphi 0, %s21
    %s25 = sphi 0, %s24
    %s41 = sphi 0, %s25
    %s45 = sphi 0, %s45
    %s47 = sphi 0, %s45
    %s48 = sphi 0, %s47
    %s62 = sphi 0, %s48
    %s66 = sphi 0, %s66
    %s68 = sphi 0, %s66
    %s69 = sphi 0, %s68
    %s83 = sphi 0, %s69
    %s87 = sphi 0, %s87
    %s89 = sphi 0, %s87
    %s90 = sphi 0, %s89
    %s104 = sphi 0, %s90
    %s108 = sphi 0, %s108
    %s110 = sphi 0, %s108
    %s111 = sphi 0, %s110
    %s125 = sphi 0, %s111
    %s131 = sphi 0, %s133
    %s134 = sphi 0, %s131
    %s135 = sphi 0, %s134
    %s151 = sphi 0, %s135
  $region4: #{_lambda_.1} parent=0 // loop_header_branch
    %14 = sbr.rel (%p12) target = $region8
  $region5: #{_lambda_.1} parent=0 // loop_body
    %s16 = ssub.s32 %s11, 1
    %s17 = ssub.s32 %s11, 2
    %s18 = sadd.s32 %s11, 1
    %s19 = ssub.s32 %s11, %s18
    %p20 = scmp.eq.s32.totalorder %s19, 0
    %s22 = sadd.s32 %s21, 1
    %s23 = scalar_select %p20, %s21, %s22
    %p26 = pneg %p20
    %p27 = scmp.eq.s32.totalorder %s11, 1
    %p28 = por %p26, %p27
    %p29 = scmp.ne.s32.totalorder %s21, %s24
    %p30 = scmp.eq.s32.totalorder %s11, 0
    %p31 = por %p29, %p30
    %p32 = scmp.ne.s32.totalorder %s21, %s24
    %p33 = scmp.eq.s32.totalorder %s16, 1
    %p34 = por %p32, %p33
    %p35 = scmp.ne.s32.totalorder %s24, %s25
    %p36 = scmp.eq.s32.totalorder %s16, 0
    %p37 = por %p35, %p36
    %p38 = scmp.ne.s32.totalorder %s24, %s25
    %p39 = scmp.eq.s32.totalorder %s17, 1
    %p40 = por %p38, %p39
    %p42 = scmp.ne.s32.totalorder %s25, %s41
    %p43 = scmp.eq.s32.totalorder %s17, 0
    %p44 = por %p42, %p43
    %s46 = sadd.s32 %s45, 1
    %p49 = scmp.eq.s32.totalorder %s11, 1
    %p50 = scmp.ne.s32.totalorder %s45, %s47
    %p51 = scmp.eq.s32.totalorder %s11, 0
    %p52 = por %p50, %p51
    %p53 = scmp.ne.s32.totalorder %s45, %s47
    %p54 = scmp.eq.s32.totalorder %s16, 1
    %p55 = por %p53, %p54
    %p56 = scmp.ne.s32.totalorder %s47, %s48
    %p57 = scmp.eq.s32.totalorder %s16, 0
    %p58 = por %p56, %p57
    %p59 = scmp.ne.s32.totalorder %s47, %s48
    %p60 = scmp.eq.s32.totalorder %s17, 1
    %p61 = por %p59, %p60
    %p63 = scmp.ne.s32.totalorder %s48, %s62
    %p64 = scmp.eq.s32.totalorder %s17, 0
    %p65 = por %p63, %p64
    %s67 = sadd.s32 %s66, 1
    %p70 = scmp.eq.s32.totalorder %s11, 1
    %p71 = scmp.ne.s32.totalorder %s66, %s68
    %p72 = scmp.eq.s32.totalorder %s11, 0
    %p73 = por %p71, %p72
    %p74 = scmp.ne.s32.totalorder %s66, %s68
    %p75 = scmp.eq.s32.totalorder %s16, 1
    %p76 = por %p74, %p75
    %p77 = scmp.ne.s32.totalorder %s68, %s69
    %p78 = scmp.eq.s32.totalorder %s16, 0
    %p79 = por %p77, %p78
    %p80 = scmp.ne.s32.totalorder %s68, %s69
    %p81 = scmp.eq.s32.totalorder %s17, 1
    %p82 = por %p80, %p81
    %p84 = scmp.ne.s32.totalorder %s69, %s83
    %p85 = scmp.eq.s32.totalorder %s17, 0
    %p86 = por %p84, %p85
    %s88 = sadd.s32 %s87, 1
    %p91 = scmp.eq.s32.totalorder %s11, 1
    %p92 = scmp.ne.s32.totalorder %s87, %s89
    %p93 = scmp.eq.s32.totalorder %s11, 0
    %p94 = por %p92, %p93
    %p95 = scmp.ne.s32.totalorder %s87, %s89
    %p96 = scmp.eq.s32.totalorder %s16, 1
    %p97 = por %p95, %p96
    %p98 = scmp.ne.s32.totalorder %s89, %s90
    %p99 = scmp.eq.s32.totalorder %s16, 0
    %p100 = por %p98, %p99
    %p101 = scmp.ne.s32.totalorder %s89, %s90
    %p102 = scmp.eq.s32.totalorder %s17, 1
    %p103 = por %p101, %p102
    %p105 = scmp.ne.s32.totalorder %s90, %s104
    %p106 = scmp.eq.s32.totalorder %s17, 0
    %p107 = por %p105, %p106
    %s109 = sadd.s32 %s108, 1
    %p112 = scmp.eq.s32.totalorder %s11, 1
    %p113 = scmp.ne.s32.totalorder %s108, %s110
    %p114 = scmp.eq.s32.totalorder %s11, 0
    %p115 = por %p113, %p114
    %p116 = scmp.ne.s32.totalorder %s108, %s110
    %p117 = scmp.eq.s32.totalorder %s16, 1
    %p118 = por %p116, %p117
    %p119 = scmp.ne.s32.totalorder %s110, %s111
    %p120 = scmp.eq.s32.totalorder %s16, 0
    %p121 = por %p119, %p120
    %p122 = scmp.ne.s32.totalorder %s110, %s111
    %p123 = scmp.eq.s32.totalorder %s17, 1
    %p124 = por %p122, %p123
    %p126 = scmp.ne.s32.totalorder %s111, %s125
    %p127 = scmp.eq.s32.totalorder %s17, 0
    %p128 = por %p126, %p127
    %s129 = ssub.s32 %s11, %s18
    %p130 = scmp.eq.s32.totalorder %s129, 0
    %s132 = sadd.s32 %s131, 1
    %s133 = scalar_select %p130, %s131, %s132
    %p136 = pneg %p130
    %p137 = scmp.eq.s32.totalorder %s11, 1
    %p138 = por %p136, %p137
    %p139 = scmp.ne.s32.totalorder %s131, %s134
    %p140 = scmp.eq.s32.totalorder %s11, 0
    %p141 = por %p139, %p140
    %p142 = scmp.ne.s32.totalorder %s131, %s134
    %p143 = scmp.eq.s32.totalorder %s16, 1
    %p144 = por %p142, %p143
    %p145 = scmp.ne.s32.totalorder %s134, %s135
    %p146 = scmp.eq.s32.totalorder %s16, 0
    %p147 = por %p145, %p146
    %p148 = scmp.ne.s32.totalorder %s134, %s135
    %p149 = scmp.eq.s32.totalorder %s17, 1
    %p150 = por %p148, %p149
    %p152 = scmp.ne.s32.totalorder %s135, %s151
    %p153 = scmp.eq.s32.totalorder %s17, 0
    %p154 = por %p152, %p153
    %p155 = scmp.le.s32.totalorder 1, %s11
    %p156 = scmp.lt.s32.totalorder %s11, 3
    %p157 = pnand %p155, %p156
    %p158 = pneg %p157
    // Predicated region
    $region9: #{_lambda_.1} parent=5 // pred_check
      _
    $region10: #{_lambda_.1} parent=5 // pred_check_branch
      %160 = sbr.rel (%p157) target = $region12
    $region11: #{_lambda_.1} parent=5 // pred_region
      %s161 = ssub.s32 %s11, 1
      // Predicated region
      $region13: #{_lambda_.1} parent=11 // pred_check
        %p162 = pneg %p58
      $region14: #{_lambda_.1} parent=11 // pred_check_branch
        %164 = sbr.rel (%p162) target = $region16
      $region15: #{_lambda_.1} parent=11 // pred_region
        _
      $region16: #{_lambda_.1} parent=11 // pred_fallthru
        _
      // Predicated region
      $region17: #{_lambda_.1} parent=11 // pred_check
        %p165 = pneg %p79
      $region18: #{_lambda_.1} parent=11 // pred_check_branch
        %167 = sbr.rel (%p165) target = $region20
      $region19: #{_lambda_.1} parent=11 // pred_region
        _
      $region20: #{_lambda_.1} parent=11 // pred_fallthru
        _
      // Predicated region
      $region21: #{_lambda_.1} parent=11 // pred_check
        %p168 = pneg %p100
      $region22: #{_lambda_.1} parent=11 // pred_check_branch
        %170 = sbr.rel (%p168) target = $region24
      $region23: #{_lambda_.1} parent=11 // pred_region
        _
      $region24: #{_lambda_.1} parent=11 // pred_fallthru
        _
      // Predicated region
      $region25: #{_lambda_.1} parent=11 // pred_check
        %p171 = pneg %p121
      $region26: #{_lambda_.1} parent=11 // pred_check_branch
        %173 = sbr.rel (%p171) target = $region28
      $region27: #{_lambda_.1} parent=11 // pred_region
        _
      $region28: #{_lambda_.1} parent=11 // pred_fallthru
        _
    $region12: #{_lambda_.1} parent=5 // pred_fallthru
      _
    %p174 = scmp.lt.s32.totalorder %s11, 2
    // Predicated region
    $region29: #{_lambda_.1} parent=5 // pred_check
      %p175 = pneg %p174
    $region30: #{_lambda_.1} parent=5 // pred_check_branch
      %177 = sbr.rel (%p175) target = $region32
    $region31: #{_lambda_.1} parent=5 // pred_region
      // Predicated region
      $region33: #{_lambda_.1} parent=31 // pred_check
        %p178 = pneg %p31
      $region34: #{_lambda_.1} parent=31 // pred_check_branch
        %180 = sbr.rel (%p178) target = $region36
      $region35: #{_lambda_.1} parent=31 // pred_region
        %p181 = scmp.lt.s32.totalorder %s11, 1
        %s182 = scalar_select %p181, %s11, 1
        %s183 = smul.addr %s182, 3
        %s184 = smul.addr %s183, 8
        %s185 = scalar_lea.vmem %s0, %s184
      $region36: #{_lambda_.1} parent=31 // pred_fallthru
        _
    $region32: #{_lambda_.1} parent=5 // pred_fallthru
      _
    %p186 = scmp.le.s32.totalorder 1, %s11
    %p187 = scmp.lt.s32.totalorder %s11, 3
    %p188 = pnand %p186, %p187
    %p189 = pneg %p188
    // Predicated region
    $region37: #{_lambda_.1} parent=5 // pred_check
      _
    $region38: #{_lambda_.1} parent=5 // pred_check_branch
      %191 = sbr.rel (%p188) target = $region40
    $region39: #{_lambda_.1} parent=5 // pred_region
      %s192 = ssub.s32 %s11, 1
      %p193 = scmp.lt.s32.totalorder %s16, 1
      %s194 = scalar_select %p193, %s16, 1
      %s195 = smul.addr %s194, 3
      %s196 = smul.addr %s195, 8
      %s197 = scalar_lea.vmem %s0, %s196
      %p198 = pneg %p37
      %p199 = pneg %p34
      %p200 = pneg %p58
      %p201 = pneg %p55
      %p202 = pneg %p79
      %p203 = pneg %p76
      %p204 = pneg %p100
      %p205 = pneg %p97
      %p206 = pneg %p121
      %p207 = pneg %p118
      %p208 = pneg %p147
      %p209 = pneg %p144
      %p210 = scmp.lt.s32.totalorder %s16, 1
      %s211 = scalar_select %p210, %s16, 1
      %s212 = smul.addr %s211, 8
      %s213 = smul.addr %s212, 8
      %s214 = scalar_lea.vmem %s5, %s213
      %p215 = scmp.lt.s32.totalorder %s16, 1
      %s216 = scalar_select %p215, %s16, 1
      %s217 = smul.addr %s216, 3
      %s218 = smul.addr %s217, 8
      %s219 = scalar_lea.vmem %s0, %s218
      %p220 = scmp.lt.s32.totalorder %s16, 1
      %s221 = scalar_select %p220, %s16, 1
      %s222 = smul.addr %s221, 8
      %s223 = smul.addr %s222, 8
      %s224 = scalar_lea.vmem %s5, %s223
      %v226 = vld [vmem:[%s219] sm:$0xff]
      %v227 = vld [vmem:[%s219 + $0x8] sm:$0xff]
      %v228 = vpack.c.bf16 %v227, %v226
      %v229 = vld [vmem:[%s1] sm:$0xff]
      %v230 = vld [vmem:[%s1 + $0x8] sm:$0xff]
      %v231 = vld [vmem:[%s1 + $0x10] sm:$0xff]
      %v232 = vld [vmem:[%s1 + $0x18] sm:$0xff]
      %v233 = vld [vmem:[%s1 + $0x20] sm:$0xff]
      %v234 = vld [vmem:[%s1 + $0x28] sm:$0xff]
      %v235 = vld [vmem:[%s1 + $0x30] sm:$0xff]
      %v236 = vld [vmem:[%s1 + $0x38] sm:$0xff]
      %v237 = vld [vmem:[%s1 + $0x40] sm:$0xff]
      %v238 = vld [vmem:[%s1 + $0x48] sm:$0xff]
      %v239 = vld [vmem:[%s1 + $0x50] sm:$0xff]
      %v240 = vld [vmem:[%s1 + $0x58] sm:$0xff]
      %v241 = vld [vmem:[%s1 + $0x60] sm:$0xff]
      %v242 = vld [vmem:[%s1 + $0x68] sm:$0xff]
      %v243 = vld [vmem:[%s1 + $0x70] sm:$0xff]
      %v244 = vld [vmem:[%s1 + $0x78] sm:$0xff]
      %v245 = vld [vmem:[%s1 + $0x80] sm:$0xff]
      %v246 = vld [vmem:[%s1 + $0x88] sm:$0xff]
      %v247 = vld [vmem:[%s1 + $0x90] sm:$0xff]
      %v248 = vld [vmem:[%s1 + $0x98] sm:$0xff]
      %v249 = vld [vmem:[%s1 + $0xa0] sm:$0xff]
      %v250 = vld [vmem:[%s1 + $0xa8] sm:$0xff]
      %v251 = vld [vmem:[%s1 + $0xb0] sm:$0xff]
      %v252 = vld [vmem:[%s1 + $0xb8] sm:$0xff]
      %v253 = vld [vmem:[%s1 + $0xc0] sm:$0xff]
      %v254 = vld [vmem:[%s1 + $0xc8] sm:$0xff]
      %v255 = vld [vmem:[%s1 + $0xd0] sm:$0xff]
      %v256 = vld [vmem:[%s1 + $0xd8] sm:$0xff]
      %v257 = vld [vmem:[%s1 + $0xe0] sm:$0xff]
      %v258 = vld [vmem:[%s1 + $0xe8] sm:$0xff]
      %v259 = vld [vmem:[%s1 + $0xf0] sm:$0xff]
      %v260 = vld [vmem:[%s1 + $0xf8] sm:$0xff]
      %v261 = vld [vmem:[%s1 + $0x100] sm:$0xff]
      %v262 = vld [vmem:[%s1 + $0x108] sm:$0xff]
      %v263 = vld [vmem:[%s1 + $0x110] sm:$0xff]
      %v264 = vld [vmem:[%s1 + $0x118] sm:$0xff]
      %v265 = vld [vmem:[%s219 + $0x1] sm:$0xff]
      %v266 = vld [vmem:[%s219 + $0x9] sm:$0xff]
      %v267 = vpack.c.bf16 %v266, %v265
      %s268 = scalar_lea.vmem %s1, 288
      %v269 = vld [vmem:[%s268] sm:$0xff]
      %v270 = vld [vmem:[%s268 + $0x8] sm:$0xff]
      %v271 = vld [vmem:[%s268 + $0x10] sm:$0xff]
      %v272 = vld [vmem:[%s268 + $0x18] sm:$0xff]
      %v273 = vld [vmem:[%s268 + $0x20] sm:$0xff]
      %v274 = vld [vmem:[%s268 + $0x28] sm:$0xff]
      %v275 = vld [vmem:[%s268 + $0x30] sm:$0xff]
      %v276 = vld [vmem:[%s268 + $0x38] sm:$0xff]
      %v277 = vld [vmem:[%s268 + $0x40] sm:$0xff]
      %v278 = vld [vmem:[%s268 + $0x48] sm:$0xff]
      %v279 = vld [vmem:[%s268 + $0x50] sm:$0xff]
      %v280 = vld [vmem:[%s268 + $0x58] sm:$0xff]
      %v281 = vld [vmem:[%s268 + $0x60] sm:$0xff]
      %v282 = vld [vmem:[%s268 + $0x68] sm:$0xff]
      %v283 = vld [vmem:[%s268 + $0x70] sm:$0xff]
      %v284 = vld [vmem:[%s268 + $0x78] sm:$0xff]
      %v285 = vld [vmem:[%s268 + $0x80] sm:$0xff]
      %v286 = vld [vmem:[%s268 + $0x88] sm:$0xff]
      %v287 = vld [vmem:[%s268 + $0x90] sm:$0xff]
      %v288 = vld [vmem:[%s268 + $0x98] sm:$0xff]
      %v289 = vld [vmem:[%s268 + $0xa0] sm:$0xff]
      %v290 = vld [vmem:[%s268 + $0xa8] sm:$0xff]
      %v291 = vld [vmem:[%s268 + $0xb0] sm:$0xff]
      %v292 = vld [vmem:[%s268 + $0xb8] sm:$0xff]
      %v293 = vld [vmem:[%s268 + $0xc0] sm:$0xff]
      %v294 = vld [vmem:[%s268 + $0xc8] sm:$0xff]
      %v295 = vld [vmem:[%s268 + $0xd0] sm:$0xff]
      %v296 = vld [vmem:[%s268 + $0xd8] sm:$0xff]
      %v297 = vld [vmem:[%s268 + $0xe0] sm:$0xff]
      %v298 = vld [vmem:[%s268 + $0xe8] sm:$0xff]
      %v299 = vld [vmem:[%s268 + $0xf0] sm:$0xff]
      %v300 = vld [vmem:[%s268 + $0xf8] sm:$0xff]
      %v301 = vld [vmem:[%s268 + $0x100] sm:$0xff]
      %v302 = vld [vmem:[%s268 + $0x108] sm:$0xff]
      %v303 = vld [vmem:[%s268 + $0x110] sm:$0xff]
      %v304 = vld [vmem:[%s268 + $0x118] sm:$0xff]
      %v341 = vunpack.c.l.b16 %v269
      %v342 = vunpack.c.h.b16 %v269
      %v343 = vunpack.c.l.b16 %v270
      %v344 = vunpack.c.h.b16 %v270
      %v345 = vunpack.c.l.b16 %v271
      %v346 = vunpack.c.h.b16 %v271
      %v347 = vunpack.c.l.b16 %v272
      %v348 = vunpack.c.h.b16 %v272
      %v349 = vunpack.c.l.b16 %v273
      %v350 = vunpack.c.h.b16 %v273
      %v351 = vunpack.c.l.b16 %v274
      %v352 = vunpack.c.h.b16 %v274
      %v353 = vunpack.c.l.b16 %v275
      %v354 = vunpack.c.h.b16 %v275
      %v355 = vunpack.c.l.b16 %v276
      %v356 = vunpack.c.h.b16 %v276
      %v357 = vunpack.c.l.b16 %v277
      %v358 = vunpack.c.h.b16 %v277
      %v359 = vunpack.c.l.b16 %v278
      %v360 = vunpack.c.h.b16 %v278
      %v361 = vunpack.c.l.b16 %v279
      %v362 = vunpack.c.h.b16 %v279
      %v363 = vunpack.c.l.b16 %v280
      %v364 = vunpack.c.h.b16 %v280
      %v365 = vunpack.c.l.b16 %v281
      %v366 = vunpack.c.h.b16 %v281
      %v367 = vunpack.c.l.b16 %v282
      %v368 = vunpack.c.h.b16 %v282
      %v369 = vunpack.c.l.b16 %v283
      %v370 = vunpack.c.h.b16 %v283
      %v371 = vunpack.c.l.b16 %v284
      %v372 = vunpack.c.h.b16 %v284
      %v373 = vunpack.c.l.b16 %v285
      %v374 = vunpack.c.h.b16 %v285
      %v375 = vunpack.c.l.b16 %v286
      %v376 = vunpack.c.h.b16 %v286
      %v377 = vunpack.c.l.b16 %v287
      %v378 = vunpack.c.h.b16 %v287
      %v379 = vunpack.c.l.b16 %v288
      %v380 = vunpack.c.h.b16 %v288
      %v381 = vunpack.c.l.b16 %v289
      %v382 = vunpack.c.h.b16 %v289
      %v383 = vunpack.c.l.b16 %v290
      %v384 = vunpack.c.h.b16 %v290
      %v385 = vunpack.c.l.b16 %v291
      %v386 = vunpack.c.h.b16 %v291
      %v387 = vunpack.c.l.b16 %v292
      %v388 = vunpack.c.h.b16 %v292
      %v389 = vunpack.c.l.b16 %v293
      %v390 = vunpack.c.h.b16 %v293
      %v391 = vunpack.c.l.b16 %v294
      %v392 = vunpack.c.h.b16 %v294
      %v393 = vunpack.c.l.b16 %v295
      %v394 = vunpack.c.h.b16 %v295
      %v395 = vunpack.c.l.b16 %v296
      %v396 = vunpack.c.h.b16 %v296
      %v397 = vunpack.c.l.b16 %v297
      %v398 = vunpack.c.h.b16 %v297
      %v399 = vunpack.c.l.b16 %v298
      %v400 = vunpack.c.h.b16 %v298
      %v401 = vunpack.c.l.b16 %v299
      %v402 = vunpack.c.h.b16 %v299
      %v403 = vunpack.c.l.b16 %v300
      %v404 = vunpack.c.h.b16 %v300
      %v405 = vunpack.c.l.b16 %v301
      %v406 = vunpack.c.h.b16 %v301
      %v407 = vunpack.c.l.b16 %v302
      %v408 = vunpack.c.h.b16 %v302
      %v409 = vunpack.c.l.b16 %v303
      %v410 = vunpack.c.h.b16 %v303
      %v411 = vunpack.c.l.b16 %v304
      %v412 = vunpack.c.h.b16 %v304
      %v413 = vpack.c.b16 %v349, %v341
      %v414 = vpack.c.b16 %v350, %v342
      %v415 = vpack.c.b16 %v351, %v343
      %v416 = vpack.c.b16 %v352, %v344
      %v417 = vpack.c.b16 %v353, %v345
      %v418 = vpack.c.b16 %v354, %v346
      %v419 = vpack.c.b16 %v355, %v347
      %v420 = vpack.c.b16 %v356, %v348
      %v421 = vpack.c.b16 %v365, %v357
      %v422 = vpack.c.b16 %v366, %v358
      %v423 = vpack.c.b16 %v367, %v359
      %v424 = vpack.c.b16 %v368, %v360
      %v425 = vpack.c.b16 %v369, %v361
      %v426 = vpack.c.b16 %v370, %v362
      %v427 = vpack.c.b16 %v371, %v363
      %v428 = vpack.c.b16 %v372, %v364
      %v429 = vpack.c.b16 %v381, %v373
      %v430 = vpack.c.b16 %v382, %v374
      %v431 = vpack.c.b16 %v383, %v375
      %v432 = vpack.c.b16 %v384, %v376
      %v433 = vpack.c.b16 %v385, %v377
      %v434 = vpack.c.b16 %v386, %v378
      %v435 = vpack.c.b16 %v387, %v379
      %v436 = vpack.c.b16 %v388, %v380
      %v437 = vpack.c.b16 %v397, %v389
      %v438 = vpack.c.b16 %v398, %v390
      %v439 = vpack.c.b16 %v399, %v391
      %v440 = vpack.c.b16 %v400, %v392
      %v441 = vpack.c.b16 %v401, %v393
      %v442 = vpack.c.b16 %v402, %v394
      %v443 = vpack.c.b16 %v403, %v395
      %v444 = vpack.c.b16 %v404, %v396
      %v445 = vpack.c.b16 %v405, %v405
      %v446 = vpack.c.b16 %v406, %v406
      %v447 = vpack.c.b16 %v407, %v407
      %v448 = vpack.c.b16 %v408, %v408
      %v449 = vpack.c.b16 %v409, %v409
      %v450 = vpack.c.b16 %v410, %v410
      %v451 = vpack.c.b16 %v411, %v411
      %v452 = vpack.c.b16 %v412, %v412
      %vm485 = vcmask 588800
      %v487 = vsel %vm485, %v267, 0
      %vm489 = vcmask 1043456
      %v491 = vsel %vm489, %v445, 0
      %v494 = vsel %vm489, %v446, 0
      %v497 = vsel %vm489, %v447, 0
      %v500 = vsel %vm489, %v448, 0
      %v503 = vsel %vm489, %v449, 0
      %v506 = vsel %vm489, %v450, 0
      %v509 = vsel %vm489, %v451, 0
      %v512 = vsel %vm489, %v452, 0
      %514 = vmatprep.subr.bf16.mxu0 0
      %515 = vmatpush1.bf16.msra.mxu0 0
      %516 = vmatprep.subr.bf16.mxu0 0
      %517 = vmatpush1.bf16.msra.mxu0 0
      %518 = vmatprep.subr.bf16.mxu0 0
      %519 = vmatpush1.bf16.msra.mxu0 0
      %520 = vmatprep.subr.bf16.mxu0 %v494
      %521 = vmatpush1.bf16.msra.mxu0 %v491
      %522 = vmatprep.subr.bf16.mxu0 %v438
      %523 = vmatpush1.bf16.msra.mxu0 %v437
      %524 = vmatprep.subr.bf16.mxu0 %v430
      %525 = vmatpush1.bf16.msra.mxu0 %v429
      %526 = vmatprep.subr.bf16.mxu0 %v422
      %527 = vmatpush1.bf16.msra.mxu0 %v421
      %528 = vmatprep.subr.bf16.mxu0 %v414
      %529 = vmatpush1.bf16.msra.mxu0 %v413
      %530 = vmatprep.subr.bf16.mxu0 0
      %531 = vmatpush2.bf16.msra.mxu0 0
      %532 = vmatprep.subr.bf16.mxu0 0
      %533 = vmatpush2.bf16.msra.mxu0 0
      %534 = vmatprep.subr.bf16.mxu0 0
      %535 = vmatpush2.bf16.msra.mxu0 0
      %536 = vmatprep.subr.bf16.mxu0 0
      %537 = vmatpush2.bf16.msra.mxu0 0
      %538 = vmatprep.subr.bf16.mxu0 0
      %539 = vmatpush2.bf16.msra.mxu0 0
      %540 = vmatprep.subr.bf16.mxu0 0
      %541 = vmatpush2.bf16.msra.mxu0 0
      %542 = vmatprep.subr.bf16.mxu0 0
      %543 = vmatpush2.bf16.msra.mxu0 0
      %544 = vmatprep.subr.bf16.mxu0 0
      %545 = vmatpush2.bf16.msra.mxu0 0
      %546 = vmatprep.mubr.bf16.mxu0 0
      %547 = vmatmul.mubr.bf16.gmra.mxu0 %v487
      %v548 = vpop.f32.mrf.mxu0
      %v549 = vadd.f32 0.0, %v548
      %v550 = vpop.f32.mrf.mxu0
      %v551 = vadd.f32 0.0, %v550
      %v552 = vpop.f32.mrf.mxu0
      %v553 = vadd.f32 0.0, %v552
      %v554 = vpop.f32.mrf.mxu0
      %v555 = vadd.f32 0.0, %v554
      %556 = vdwg.mxu0
      %557 = vmatprep.subr.bf16.mxu0 0
      %558 = vmatpush1.bf16.msra.mxu0 0
      %559 = vmatprep.subr.bf16.mxu0 0
      %560 = vmatpush1.bf16.msra.mxu0 0
      %561 = vmatprep.subr.bf16.mxu0 0
      %562 = vmatpush1.bf16.msra.mxu0 0
      %563 = vmatprep.subr.bf16.mxu0 %v500
      %564 = vmatpush1.bf16.msra.mxu0 %v497
      %565 = vmatprep.subr.bf16.mxu0 %v440
      %566 = vmatpush1.bf16.msra.mxu0 %v439
      %567 = vmatprep.subr.bf16.mxu0 %v432
      %568 = vmatpush1.bf16.msra.mxu0 %v431
      %569 = vmatprep.subr.bf16.mxu0 %v424
      %570 = vmatpush1.bf16.msra.mxu0 %v423
      %571 = vmatprep.subr.bf16.mxu0 %v416
      %572 = vmatpush1.bf16.msra.mxu0 %v415
      %573 = vmatprep.subr.bf16.mxu0 0
      %574 = vmatpush2.bf16.msra.mxu0 0
      %575 = vmatprep.subr.bf16.mxu0 0
      %576 = vmatpush2.bf16.msra.mxu0 0
      %577 = vmatprep.subr.bf16.mxu0 0
      %578 = vmatpush2.bf16.msra.mxu0 0
      %579 = vmatprep.subr.bf16.mxu0 0
      %580 = vmatpush2.bf16.msra.mxu0 0
      %581 = vmatprep.subr.bf16.mxu0 0
      %582 = vmatpush2.bf16.msra.mxu0 0
      %583 = vmatprep.subr.bf16.mxu0 0
      %584 = vmatpush2.bf16.msra.mxu0 0
      %585 = vmatprep.subr.bf16.mxu0 0
      %586 = vmatpush2.bf16.msra.mxu0 0
      %587 = vmatprep.subr.bf16.mxu0 0
      %588 = vmatpush2.bf16.msra.mxu0 0
      %589 = vmatprep.mubr.bf16.mxu0 0
      %590 = vmatmul.mubr.bf16.gmra.mxu0 %v487
      %v591 = vpop.f32.mrf.mxu0
      %v592 = vadd.f32 0.0, %v591
      %v593 = vpop.f32.mrf.mxu0
      %v594 = vadd.f32 0.0, %v593
      %v595 = vpop.f32.mrf.mxu0
      %v596 = vadd.f32 0.0, %v595
      %v597 = vpop.f32.mrf.mxu0
      %v598 = vadd.f32 0.0, %v597
      %599 = vdwg.mxu0
      %600 = vmatprep.subr.bf16.mxu0 0
      %601 = vmatpush1.bf16.msra.mxu0 0
      %602 = vmatprep.subr.bf16.mxu0 0
      %603 = vmatpush1.bf16.msra.mxu0 0
      %604 = vmatprep.subr.bf16.mxu0 0
      %605 = vmatpush1.bf16.msra.mxu0 0
      %606 = vmatprep.subr.bf16.mxu0 %v506
      %607 = vmatpush1.bf16.msra.mxu0 %v503
      %608 = vmatprep.subr.bf16.mxu0 %v442
      %609 = vmatpush1.bf16.msra.mxu0 %v441
      %610 = vmatprep.subr.bf16.mxu0 %v434
      %611 = vmatpush1.bf16.msra.mxu0 %v433
      %612 = vmatprep.subr.bf16.mxu0 %v426
      %613 = vmatpush1.bf16.msra.mxu0 %v425
      %614 = vmatprep.subr.bf16.mxu0 %v418
      %615 = vmatpush1.bf16.msra.mxu0 %v417
      %616 = vmatprep.subr.bf16.mxu0 0
      %617 = vmatpush2.bf16.msra.mxu0 0
      %618 = vmatprep.subr.bf16.mxu0 0
      %619 = vmatpush2.bf16.msra.mxu0 0
      %620 = vmatprep.subr.bf16.mxu0 0
      %621 = vmatpush2.bf16.msra.mxu0 0
      %622 = vmatprep.subr.bf16.mxu0 0
      %623 = vmatpush2.bf16.msra.mxu0 0
      %624 = vmatprep.subr.bf16.mxu0 0
      %625 = vmatpush2.bf16.msra.mxu0 0
      %626 = vmatprep.subr.bf16.mxu0 0
      %627 = vmatpush2.bf16.msra.mxu0 0
      %628 = vmatprep.subr.bf16.mxu0 0
      %629 = vmatpush2.bf16.msra.mxu0 0
      %630 = vmatprep.subr.bf16.mxu0 0
      %631 = vmatpush2.bf16.msra.mxu0 0
      %632 = vmatprep.mubr.bf16.mxu0 0
      %633 = vmatmul.mubr.bf16.gmra.mxu0 %v487
      %v634 = vpop.f32.mrf.mxu0
      %v635 = vadd.f32 0.0, %v634
      %v636 = vpop.f32.mrf.mxu0
      %v637 = vadd.f32 0.0, %v636
      %v638 = vpop.f32.mrf.mxu0
      %v639 = vadd.f32 0.0, %v638
      %v640 = vpop.f32.mrf.mxu0
      %v641 = vadd.f32 0.0, %v640
      %642 = vdwg.mxu0
      %643 = vmatprep.subr.bf16.mxu0 0
      %644 = vmatpush1.bf16.msra.mxu0 0
      %645 = vmatprep.subr.bf16.mxu0 0
      %646 = vmatpush1.bf16.msra.mxu0 0
      %647 = vmatprep.subr.bf16.mxu0 0
      %648 = vmatpush1.bf16.msra.mxu0 0
      %649 = vmatprep.subr.bf16.mxu0 %v512
      %650 = vmatpush1.bf16.msra.mxu0 %v509
      %651 = vmatprep.subr.bf16.mxu0 %v444
      %652 = vmatpush1.bf16.msra.mxu0 %v443
      %653 = vmatprep.subr.bf16.mxu0 %v436
      %654 = vmatpush1.bf16.msra.mxu0 %v435
      %655 = vmatprep.subr.bf16.mxu0 %v428
      %656 = vmatpush1.bf16.msra.mxu0 %v427
      %657 = vmatprep.subr.bf16.mxu0 %v420
      %658 = vmatpush1.bf16.msra.mxu0 %v419
      %659 = vmatprep.subr.bf16.mxu0 0
      %660 = vmatpush2.bf16.msra.mxu0 0
      %661 = vmatprep.subr.bf16.mxu0 0
      %662 = vmatpush2.bf16.msra.mxu0 0
      %663 = vmatprep.subr.bf16.mxu0 0
      %664 = vmatpush2.bf16.msra.mxu0 0
      %665 = vmatprep.subr.bf16.mxu0 0
      %666 = vmatpush2.bf16.msra.mxu0 0
      %667 = vmatprep.subr.bf16.mxu0 0
      %668 = vmatpush2.bf16.msra.mxu0 0
      %669 = vmatprep.subr.bf16.mxu0 0
      %670 = vmatpush2.bf16.msra.mxu0 0
      %671 = vmatprep.subr.bf16.mxu0 0
      %672 = vmatpush2.bf16.msra.mxu0 0
      %673 = vmatprep.subr.bf16.mxu0 0
      %674 = vmatpush2.bf16.msra.mxu0 0
      %675 = vmatprep.mubr.bf16.mxu0 0
      %676 = vmatmul.mubr.bf16.gmra.mxu0 %v487
      %v677 = vpop.f32.mrf.mxu0
      %v678 = vadd.f32 0.0, %v677
      %v679 = vpop.f32.mrf.mxu0
      %v680 = vadd.f32 0.0, %v679
      %v681 = vpop.f32.mrf.mxu0
      %v682 = vadd.f32 0.0, %v681
      %v683 = vpop.f32.mrf.mxu0
      %v684 = vadd.f32 0.0, %v683
      %685 = vdwg.mxu0
      %v722 = vunpack.c.l.b16 %v229
      %v723 = vunpack.c.h.b16 %v229
      %v724 = vunpack.c.l.b16 %v230
      %v725 = vunpack.c.h.b16 %v230
      %v726 = vunpack.c.l.b16 %v231
      %v727 = vunpack.c.h.b16 %v231
      %v728 = vunpack.c.l.b16 %v232
      %v729 = vunpack.c.h.b16 %v232
      %v730 = vunpack.c.l.b16 %v233
      %v731 = vunpack.c.h.b16 %v233
      %v732 = vunpack.c.l.b16 %v234
      %v733 = vunpack.c.h.b16 %v234
      %v734 = vunpack.c.l.b16 %v235
      %v735 = vunpack.c.h.b16 %v235
      %v736 = vunpack.c.l.b16 %v236
      %v737 = vunpack.c.h.b16 %v236
      %v738 = vunpack.c.l.b16 %v237
      %v739 = vunpack.c.h.b16 %v237
      %v740 = vunpack.c.l.b16 %v238
      %v741 = vunpack.c.h.b16 %v238
      %v742 = vunpack.c.l.b16 %v239
      %v743 = vunpack.c.h.b16 %v239
      %v744 = vunpack.c.l.b16 %v240
      %v745 = vunpack.c.h.b16 %v240
      %v746 = vunpack.c.l.b16 %v241
      %v747 = vunpack.c.h.b16 %v241
      %v748 = vunpack.c.l.b16 %v242
      %v749 = vunpack.c.h.b16 %v242
      %v750 = vunpack.c.l.b16 %v243
      %v751 = vunpack.c.h.b16 %v243
      %v752 = vunpack.c.l.b16 %v244
      %v753 = vunpack.c.h.b16 %v244
      %v754 = vunpack.c.l.b16 %v245
      %v755 = vunpack.c.h.b16 %v245
      %v756 = vunpack.c.l.b16 %v246
      %v757 = vunpack.c.h.b16 %v246
      %v758 = vunpack.c.l.b16 %v247
      %v759 = vunpack.c.h.b16 %v247
      %v760 = vunpack.c.l.b16 %v248
      %v761 = vunpack.c.h.b16 %v248
      %v762 = vunpack.c.l.b16 %v249
      %v763 = vunpack.c.h.b16 %v249
      %v764 = vunpack.c.l.b16 %v250
      %v765 = vunpack.c.h.b16 %v250
      %v766 = vunpack.c.l.b16 %v251
      %v767 = vunpack.c.h.b16 %v251
      %v768 = vunpack.c.l.b16 %v252
      %v769 = vunpack.c.h.b16 %v252
      %v770 = vunpack.c.l.b16 %v253
      %v771 = vunpack.c.h.b16 %v253
      %v772 = vunpack.c.l.b16 %v254
      %v773 = vunpack.c.h.b16 %v254
      %v774 = vunpack.c.l.b16 %v255
      %v775 = vunpack.c.h.b16 %v255
      %v776 = vunpack.c.l.b16 %v256
      %v777 = vunpack.c.h.b16 %v256
      %v778 = vunpack.c.l.b16 %v257
      %v779 = vunpack.c.h.b16 %v257
      %v780 = vunpack.c.l.b16 %v258
      %v781 = vunpack.c.h.b16 %v258
      %v782 = vunpack.c.l.b16 %v259
      %v783 = vunpack.c.h.b16 %v259
      %v784 = vunpack.c.l.b16 %v260
      %v785 = vunpack.c.h.b16 %v260
      %v786 = vunpack.c.l.b16 %v261
      %v787 = vunpack.c.h.b16 %v261
      %v788 = vunpack.c.l.b16 %v262
      %v789 = vunpack.c.h.b16 %v262
      %v790 = vunpack.c.l.b16 %v263
      %v791 = vunpack.c.h.b16 %v263
      %v792 = vunpack.c.l.b16 %v264
      %v793 = vunpack.c.h.b16 %v264
      %v794 = vpack.c.b16 %v730, %v722
      %v795 = vpack.c.b16 %v731, %v723
      %v796 = vpack.c.b16 %v732, %v724
      %v797 = vpack.c.b16 %v733, %v725
      %v798 = vpack.c.b16 %v734, %v726
      %v799 = vpack.c.b16 %v735, %v727
      %v800 = vpack.c.b16 %v736, %v728
      %v801 = vpack.c.b16 %v737, %v729
      %v802 = vpack.c.b16 %v746, %v738
      %v803 = vpack.c.b16 %v747, %v739
      %v804 = vpack.c.b16 %v748, %v740
      %v805 = vpack.c.b16 %v749, %v741
      %v806 = vpack.c.b16 %v750, %v742
      %v807 = vpack.c.b16 %v751, %v743
      %v808 = vpack.c.b16 %v752, %v744
      %v809 = vpack.c.b16 %v753, %v745
      %v810 = vpack.c.b16 %v762, %v754
      %v811 = vpack.c.b16 %v763, %v755
      %v812 = vpack.c.b16 %v764, %v756
      %v813 = vpack.c.b16 %v765, %v757
      %v814 = vpack.c.b16 %v766, %v758
      %v815 = vpack.c.b16 %v767, %v759
      %v816 = vpack.c.b16 %v768, %v760
      %v817 = vpack.c.b16 %v769, %v761
      %v818 = vpack.c.b16 %v778, %v770
      %v819 = vpack.c.b16 %v779, %v771
      %v820 = vpack.c.b16 %v780, %v772
      %v821 = vpack.c.b16 %v781, %v773
      %v822 = vpack.c.b16 %v782, %v774
      %v823 = vpack.c.b16 %v783, %v775
      %v824 = vpack.c.b16 %v784, %v776
      %v825 = vpack.c.b16 %v785, %v777
      %v826 = vpack.c.b16 %v786, %v786
      %v827 = vpack.c.b16 %v787, %v787
      %v828 = vpack.c.b16 %v788, %v788
      %v829 = vpack.c.b16 %v789, %v789
      %v830 = vpack.c.b16 %v790, %v790
      %v831 = vpack.c.b16 %v791, %v791
      %v832 = vpack.c.b16 %v792, %v792
      %v833 = vpack.c.b16 %v793, %v793
      %v867 = vsel %vm485, %v228, 0
      %v870 = vsel %vm489, %v826, 0
      %v873 = vsel %vm489, %v827, 0
      %v876 = vsel %vm489, %v828, 0
      %v879 = vsel %vm489, %v829, 0
      %v882 = vsel %vm489, %v830, 0
      %v885 = vsel %vm489, %v831, 0
      %v888 = vsel %vm489, %v832, 0
      %v891 = vsel %vm489, %v833, 0
      %893 = vmatprep.subr.bf16.mxu0 0
      %894 = vmatpush1.bf16.msra.mxu0 0
      %895 = vmatprep.subr.bf16.mxu0 0
      %896 = vmatpush1.bf16.msra.mxu0 0
      %897 = vmatprep.subr.bf16.mxu0 0
      %898 = vmatpush1.bf16.msra.mxu0 0
      %899 = vmatprep.subr.bf16.mxu0 %v873
      %900 = vmatpush1.bf16.msra.mxu0 %v870
      %901 = vmatprep.subr.bf16.mxu0 %v819
      %902 = vmatpush1.bf16.msra.mxu0 %v818
      %903 = vmatprep.subr.bf16.mxu0 %v811
      %904 = vmatpush1.bf16.msra.mxu0 %v810
      %905 = vmatprep.subr.bf16.mxu0 %v803
      %906 = vmatpush1.bf16.msra.mxu0 %v802
      %907 = vmatprep.subr.bf16.mxu0 %v795
      %908 = vmatpush1.bf16.msra.mxu0 %v794
      %909 = vmatprep.subr.bf16.mxu0 0
      %910 = vmatpush2.bf16.msra.mxu0 0
      %911 = vmatprep.subr.bf16.mxu0 0
      %912 = vmatpush2.bf16.msra.mxu0 0
      %913 = vmatprep.subr.bf16.mxu0 0
      %914 = vmatpush2.bf16.msra.mxu0 0
      %915 = vmatprep.subr.bf16.mxu0 0
      %916 = vmatpush2.bf16.msra.mxu0 0
      %917 = vmatprep.subr.bf16.mxu0 0
      %918 = vmatpush2.bf16.msra.mxu0 0
      %919 = vmatprep.subr.bf16.mxu0 0
      %920 = vmatpush2.bf16.msra.mxu0 0
      %921 = vmatprep.subr.bf16.mxu0 0
      %922 = vmatpush2.bf16.msra.mxu0 0
      %923 = vmatprep.subr.bf16.mxu0 0
      %924 = vmatpush2.bf16.msra.mxu0 0
      %925 = vmatprep.mubr.bf16.mxu0 0
      %926 = vmatmul.mubr.bf16.gmra.mxu0 %v867
      %v927 = vpop.f32.mrf.mxu0
      %v928 = vadd.f32 %v549, %v927
      %v929 = vpop.f32.mrf.mxu0
      %v930 = vadd.f32 %v551, %v929
      %v931 = vpop.f32.mrf.mxu0
      %v932 = vadd.f32 %v553, %v931
      %v933 = vpop.f32.mrf.mxu0
      %v934 = vadd.f32 %v555, %v933
      %935 = vdwg.mxu0
      %936 = vmatprep.subr.bf16.mxu0 0
      %937 = vmatpush1.bf16.msra.mxu0 0
      %938 = vmatprep.subr.bf16.mxu0 0
      %939 = vmatpush1.bf16.msra.mxu0 0
      %940 = vmatprep.subr.bf16.mxu0 0
      %941 = vmatpush1.bf16.msra.mxu0 0
      %942 = vmatprep.subr.bf16.mxu0 %v879
      %943 = vmatpush1.bf16.msra.mxu0 %v876
      %944 = vmatprep.subr.bf16.mxu0 %v821
      %945 = vmatpush1.bf16.msra.mxu0 %v820
      %946 = vmatprep.subr.bf16.mxu0 %v813
      %947 = vmatpush1.bf16.msra.mxu0 %v812
      %948 = vmatprep.subr.bf16.mxu0 %v805
      %949 = vmatpush1.bf16.msra.mxu0 %v804
      %950 = vmatprep.subr.bf16.mxu0 %v797
      %951 = vmatpush1.bf16.msra.mxu0 %v796
      %952 = vmatprep.subr.bf16.mxu0 0
      %953 = vmatpush2.bf16.msra.mxu0 0
      %954 = vmatprep.subr.bf16.mxu0 0
      %955 = vmatpush2.bf16.msra.mxu0 0
      %956 = vmatprep.subr.bf16.mxu0 0
      %957 = vmatpush2.bf16.msra.mxu0 0
      %958 = vmatprep.subr.bf16.mxu0 0
      %959 = vmatpush2.bf16.msra.mxu0 0
      %960 = vmatprep.subr.bf16.mxu0 0
      %961 = vmatpush2.bf16.msra.mxu0 0
      %962 = vmatprep.subr.bf16.mxu0 0
      %963 = vmatpush2.bf16.msra.mxu0 0
      %964 = vmatprep.subr.bf16.mxu0 0
      %965 = vmatpush2.bf16.msra.mxu0 0
      %966 = vmatprep.subr.bf16.mxu0 0
      %967 = vmatpush2.bf16.msra.mxu0 0
      %968 = vmatprep.mubr.bf16.mxu0 0
      %969 = vmatmul.mubr.bf16.gmra.mxu0 %v867
      %v970 = vpop.f32.mrf.mxu0
      %v971 = vadd.f32 %v592, %v970
      %v972 = vpop.f32.mrf.mxu0
      %v973 = vadd.f32 %v594, %v972
      %v974 = vpop.f32.mrf.mxu0
      %v975 = vadd.f32 %v596, %v974
      %v976 = vpop.f32.mrf.mxu0
      %v977 = vadd.f32 %v598, %v976
      %978 = vdwg.mxu0
      %979 = vmatprep.subr.bf16.mxu0 0
      %980 = vmatpush1.bf16.msra.mxu0 0
      %981 = vmatprep.subr.bf16.mxu0 0
      %982 = vmatpush1.bf16.msra.mxu0 0
      %983 = vmatprep.subr.bf16.mxu0 0
      %984 = vmatpush1.bf16.msra.mxu0 0
      %985 = vmatprep.subr.bf16.mxu0 %v885
      %986 = vmatpush1.bf16.msra.mxu0 %v882
      %987 = vmatprep.subr.bf16.mxu0 %v823
      %988 = vmatpush1.bf16.msra.mxu0 %v822
      %989 = vmatprep.subr.bf16.mxu0 %v815
      %990 = vmatpush1.bf16.msra.mxu0 %v814
      %991 = vmatprep.subr.bf16.mxu0 %v807
      %992 = vmatpush1.bf16.msra.mxu0 %v806
      %993 = vmatprep.subr.bf16.mxu0 %v799
      %994 = vmatpush1.bf16.msra.mxu0 %v798
      %995 = vmatprep.subr.bf16.mxu0 0
      %996 = vmatpush2.bf16.msra.mxu0 0
      %997 = vmatprep.subr.bf16.mxu0 0
      %998 = vmatpush2.bf16.msra.mxu0 0
      %999 = vmatprep.subr.bf16.mxu0 0
      %1000 = vmatpush2.bf16.msra.mxu0 0
      %1001 = vmatprep.subr.bf16.mxu0 0
      %1002 = vmatpush2.bf16.msra.mxu0 0
      %1003 = vmatprep.subr.bf16.mxu0 0
      %1004 = vmatpush2.bf16.msra.mxu0 0
      %1005 = vmatprep.subr.bf16.mxu0 0
      %1006 = vmatpush2.bf16.msra.mxu0 0
      %1007 = vmatprep.subr.bf16.mxu0 0
      %1008 = vmatpush2.bf16.msra.mxu0 0
      %1009 = vmatprep.subr.bf16.mxu0 0
      %1010 = vmatpush2.bf16.msra.mxu0 0
      %1011 = vmatprep.mubr.bf16.mxu0 0
      %1012 = vmatmul.mubr.bf16.gmra.mxu0 %v867
      %v1013 = vpop.f32.mrf.mxu0
      %v1014 = vadd.f32 %v635, %v1013
      %v1015 = vpop.f32.mrf.mxu0
      %v1016 = vadd.f32 %v637, %v1015
      %v1017 = vpop.f32.mrf.mxu0
      %v1018 = vadd.f32 %v639, %v1017
      %v1019 = vpop.f32.mrf.mxu0
      %v1020 = vadd.f32 %v641, %v1019
      %1021 = vdwg.mxu0
      %1022 = vmatprep.subr.bf16.mxu0 0
      %1023 = vmatpush1.bf16.msra.mxu0 0
      %1024 = vmatprep.subr.bf16.mxu0 0
      %1025 = vmatpush1.bf16.msra.mxu0 0
      %1026 = vmatprep.subr.bf16.mxu0 0
      %1027 = vmatpush1.bf16.msra.mxu0 0
      %1028 = vmatprep.subr.bf16.mxu0 %v891
      %1029 = vmatpush1.bf16.msra.mxu0 %v888
      %1030 = vmatprep.subr.bf16.mxu0 %v825
      %1031 = vmatpush1.bf16.msra.mxu0 %v824
      %1032 = vmatprep.subr.bf16.mxu0 %v817
      %1033 = vmatpush1.bf16.msra.mxu0 %v816
      %1034 = vmatprep.subr.bf16.mxu0 %v809
      %1035 = vmatpush1.bf16.msra.mxu0 %v808
      %1036 = vmatprep.subr.bf16.mxu0 %v801
      %1037 = vmatpush1.bf16.msra.mxu0 %v800
      %1038 = vmatprep.subr.bf16.mxu0 0
      %1039 = vmatpush2.bf16.msra.mxu0 0
      %1040 = vmatprep.subr.bf16.mxu0 0
      %1041 = vmatpush2.bf16.msra.mxu0 0
      %1042 = vmatprep.subr.bf16.mxu0 0
      %1043 = vmatpush2.bf16.msra.mxu0 0
      %1044 = vmatprep.subr.bf16.mxu0 0
      %1045 = vmatpush2.bf16.msra.mxu0 0
      %1046 = vmatprep.subr.bf16.mxu0 0
      %1047 = vmatpush2.bf16.msra.mxu0 0
      %1048 = vmatprep.subr.bf16.mxu0 0
      %1049 = vmatpush2.bf16.msra.mxu0 0
      %1050 = vmatprep.subr.bf16.mxu0 0
      %1051 = vmatpush2.bf16.msra.mxu0 0
      %1052 = vmatprep.subr.bf16.mxu0 0
      %1053 = vmatpush2.bf16.msra.mxu0 0
      %1054 = vmatprep.mubr.bf16.mxu0 0
      %1055 = vmatmul.mubr.bf16.gmra.mxu0 %v867
      %v1056 = vpop.f32.mrf.mxu0
      %v1057 = vadd.f32 %v678, %v1056
      %v1058 = vpop.f32.mrf.mxu0
      %v1059 = vadd.f32 %v680, %v1058
      %v1060 = vpop.f32.mrf.mxu0
      %v1061 = vadd.f32 %v682, %v1060
      %v1062 = vpop.f32.mrf.mxu0
      %v1063 = vadd.f32 %v684, %v1062
      %1064 = vdwg.mxu0
      %v1065 = vld [vmem:[%s219 + $0x2] sm:$0xff]
      %v1066 = vld [vmem:[%s219 + $0xa] sm:$0xff]
      %v1067 = vpack.c.bf16 %v1066, %v1065
      %s1068 = scalar_lea.vmem %s1, 576
      %v1069 = vld [vmem:[%s1068] sm:$0xff]
      %v1070 = vld [vmem:[%s1068 + $0x8] sm:$0xff]
      %v1071 = vld [vmem:[%s1068 + $0x10] sm:$0xff]
      %v1072 = vld [vmem:[%s1068 + $0x18] sm:$0xff]
      %v1073 = vld [vmem:[%s1068 + $0x20] sm:$0xff]
      %v1074 = vld [vmem:[%s1068 + $0x28] sm:$0xff]
      %v1075 = vld [vmem:[%s1068 + $0x30] sm:$0xff]
      %v1076 = vld [vmem:[%s1068 + $0x38] sm:$0xff]
      %v1077 = vld [vmem:[%s1068 + $0x40] sm:$0xff]
      %v1078 = vld [vmem:[%s1068 + $0x48] sm:$0xff]
      %v1079 = vld [vmem:[%s1068 + $0x50] sm:$0xff]
      %v1080 = vld [vmem:[%s1068 + $0x58] sm:$0xff]
      %v1081 = vld [vmem:[%s1068 + $0x60] sm:$0xff]
      %v1082 = vld [vmem:[%s1068 + $0x68] sm:$0xff]
      %v1083 = vld [vmem:[%s1068 + $0x70] sm:$0xff]
      %v1084 = vld [vmem:[%s1068 + $0x78] sm:$0xff]
      %v1085 = vld [vmem:[%s1068 + $0x80] sm:$0xff]
      %v1086 = vld [vmem:[%s1068 + $0x88] sm:$0xff]
      %v1087 = vld [vmem:[%s1068 + $0x90] sm:$0xff]
      %v1088 = vld [vmem:[%s1068 + $0x98] sm:$0xff]
      %v1089 = vld [vmem:[%s1068 + $0xa0] sm:$0xff]
      %v1090 = vld [vmem:[%s1068 + $0xa8] sm:$0xff]
      %v1091 = vld [vmem:[%s1068 + $0xb0] sm:$0xff]
      %v1092 = vld [vmem:[%s1068 + $0xb8] sm:$0xff]
      %v1093 = vld [vmem:[%s1068 + $0xc0] sm:$0xff]
      %v1094 = vld [vmem:[%s1068 + $0xc8] sm:$0xff]
      %v1095 = vld [vmem:[%s1068 + $0xd0] sm:$0xff]
      %v1096 = vld [vmem:[%s1068 + $0xd8] sm:$0xff]
      %v1097 = vld [vmem:[%s1068 + $0xe0] sm:$0xff]
      %v1098 = vld [vmem:[%s1068 + $0xe8] sm:$0xff]
      %v1099 = vld [vmem:[%s1068 + $0xf0] sm:$0xff]
      %v1100 = vld [vmem:[%s1068 + $0xf8] sm:$0xff]
      %v1101 = vld [vmem:[%s1068 + $0x100] sm:$0xff]
      %v1102 = vld [vmem:[%s1068 + $0x108] sm:$0xff]
      %v1103 = vld [vmem:[%s1068 + $0x110] sm:$0xff]
      %v1104 = vld [vmem:[%s1068 + $0x118] sm:$0xff]
      %v1141 = vunpack.c.l.b16 %v1069
      %v1142 = vunpack.c.h.b16 %v1069
      %v1143 = vunpack.c.l.b16 %v1070
      %v1144 = vunpack.c.h.b16 %v1070
      %v1145 = vunpack.c.l.b16 %v1071
      %v1146 = vunpack.c.h.b16 %v1071
      %v1147 = vunpack.c.l.b16 %v1072
      %v1148 = vunpack.c.h.b16 %v1072
      %v1149 = vunpack.c.l.b16 %v1073
      %v1150 = vunpack.c.h.b16 %v1073
      %v1151 = vunpack.c.l.b16 %v1074
      %v1152 = vunpack.c.h.b16 %v1074
      %v1153 = vunpack.c.l.b16 %v1075
      %v1154 = vunpack.c.h.b16 %v1075
      %v1155 = vunpack.c.l.b16 %v1076
      %v1156 = vunpack.c.h.b16 %v1076
      %v1157 = vunpack.c.l.b16 %v1077
      %v1158 = vunpack.c.h.b16 %v1077
      %v1159 = vunpack.c.l.b16 %v1078
      %v1160 = vunpack.c.h.b16 %v1078
      %v1161 = vunpack.c.l.b16 %v1079
      %v1162 = vunpack.c.h.b16 %v1079
      %v1163 = vunpack.c.l.b16 %v1080
      %v1164 = vunpack.c.h.b16 %v1080
      %v1165 = vunpack.c.l.b16 %v1081
      %v1166 = vunpack.c.h.b16 %v1081
      %v1167 = vunpack.c.l.b16 %v1082
      %v1168 = vunpack.c.h.b16 %v1082
      %v1169 = vunpack.c.l.b16 %v1083
      %v1170 = vunpack.c.h.b16 %v1083
      %v1171 = vunpack.c.l.b16 %v1084
      %v1172 = vunpack.c.h.b16 %v1084
      %v1173 = vunpack.c.l.b16 %v1085
      %v1174 = vunpack.c.h.b16 %v1085
      %v1175 = vunpack.c.l.b16 %v1086
      %v1176 = vunpack.c.h.b16 %v1086
      %v1177 = vunpack.c.l.b16 %v1087
      %v1178 = vunpack.c.h.b16 %v1087
      %v1179 = vunpack.c.l.b16 %v1088
      %v1180 = vunpack.c.h.b16 %v1088
      %v1181 = vunpack.c.l.b16 %v1089
      %v1182 = vunpack.c.h.b16 %v1089
      %v1183 = vunpack.c.l.b16 %v1090
      %v1184 = vunpack.c.h.b16 %v1090
      %v1185 = vunpack.c.l.b16 %v1091
      %v1186 = vunpack.c.h.b16 %v1091
      %v1187 = vunpack.c.l.b16 %v1092
      %v1188 = vunpack.c.h.b16 %v1092
      %v1189 = vunpack.c.l.b16 %v1093
      %v1190 = vunpack.c.h.b16 %v1093
      %v1191 = vunpack.c.l.b16 %v1094
      %v1192 = vunpack.c.h.b16 %v1094
      %v1193 = vunpack.c.l.b16 %v1095
      %v1194 = vunpack.c.h.b16 %v1095
      %v1195 = vunpack.c.l.b16 %v1096
      %v1196 = vunpack.c.h.b16 %v1096
      %v1197 = vunpack.c.l.b16 %v1097
      %v1198 = vunpack.c.h.b16 %v1097
      %v1199 = vunpack.c.l.b16 %v1098
      %v1200 = vunpack.c.h.b16 %v1098
      %v1201 = vunpack.c.l.b16 %v1099
      %v1202 = vunpack.c.h.b16 %v1099
      %v1203 = vunpack.c.l.b16 %v1100
      %v1204 = vunpack.c.h.b16 %v1100
      %v1205 = vunpack.c.l.b16 %v1101
      %v1206 = vunpack.c.h.b16 %v1101
      %v1207 = vunpack.c.l.b16 %v1102
      %v1208 = vunpack.c.h.b16 %v1102
      %v1209 = vunpack.c.l.b16 %v1103
      %v1210 = vunpack.c.h.b16 %v1103
      %v1211 = vunpack.c.l.b16 %v1104
      %v1212 = vunpack.c.h.b16 %v1104
      %v1213 = vpack.c.b16 %v1149, %v1141
      %v1214 = vpack.c.b16 %v1150, %v1142
      %v1215 = vpack.c.b16 %v1151, %v1143
      %v1216 = vpack.c.b16 %v1152, %v1144
      %v1217 = vpack.c.b16 %v1153, %v1145
      %v1218 = vpack.c.b16 %v1154, %v1146
      %v1219 = vpack.c.b16 %v1155, %v1147
      %v1220 = vpack.c.b16 %v1156, %v1148
      %v1221 = vpack.c.b16 %v1165, %v1157
      %v1222 = vpack.c.b16 %v1166, %v1158
      %v1223 = vpack.c.b16 %v1167, %v1159
      %v1224 = vpack.c.b16 %v1168, %v1160
      %v1225 = vpack.c.b16 %v1169, %v1161
      %v1226 = vpack.c.b16 %v1170, %v1162
      %v1227 = vpack.c.b16 %v1171, %v1163
      %v1228 = vpack.c.b16 %v1172, %v1164
      %v1229 = vpack.c.b16 %v1181, %v1173
      %v1230 = vpack.c.b16 %v1182, %v1174
      %v1231 = vpack.c.b16 %v1183, %v1175
      %v1232 = vpack.c.b16 %v1184, %v1176
      %v1233 = vpack.c.b16 %v1185, %v1177
      %v1234 = vpack.c.b16 %v1186, %v1178
      %v1235 = vpack.c.b16 %v1187, %v1179
      %v1236 = vpack.c.b16 %v1188, %v1180
      %v1237 = vpack.c.b16 %v1197, %v1189
      %v1238 = vpack.c.b16 %v1198, %v1190
      %v1239 = vpack.c.b16 %v1199, %v1191
      %v1240 = vpack.c.b16 %v1200, %v1192
      %v1241 = vpack.c.b16 %v1201, %v1193
      %v1242 = vpack.c.b16 %v1202, %v1194
      %v1243 = vpack.c.b16 %v1203, %v1195
      %v1244 = vpack.c.b16 %v1204, %v1196
      %v1245 = vpack.c.b16 %v1205, %v1205
      %v1246 = vpack.c.b16 %v1206, %v1206
      %v1247 = vpack.c.b16 %v1207, %v1207
      %v1248 = vpack.c.b16 %v1208, %v1208
      %v1249 = vpack.c.b16 %v1209, %v1209
      %v1250 = vpack.c.b16 %v1210, %v1210
      %v1251 = vpack.c.b16 %v1211, %v1211
      %v1252 = vpack.c.b16 %v1212, %v1212
      %v1286 = vsel %vm485, %v1067, 0
      %v1289 = vsel %vm489, %v1245, 0
      %v1292 = vsel %vm489, %v1246, 0
      %v1295 = vsel %vm489, %v1247, 0
      %v1298 = vsel %vm489, %v1248, 0
      %v1301 = vsel %vm489, %v1249, 0
      %v1304 = vsel %vm489, %v1250, 0
      %v1307 = vsel %vm489, %v1251, 0
      %v1310 = vsel %vm489, %v1252, 0
      %1312 = vmatprep.subr.bf16.mxu0 0
      %1313 = vmatpush1.bf16.msra.mxu0 0
      %1314 = vmatprep.subr.bf16.mxu0 0
      %1315 = vmatpush1.bf16.msra.mxu0 0
      %1316 = vmatprep.subr.bf16.mxu0 0
      %1317 = vmatpush1.bf16.msra.mxu0 0
      %1318 = vmatprep.subr.bf16.mxu0 %v1292
      %1319 = vmatpush1.bf16.msra.mxu0 %v1289
      %1320 = vmatprep.subr.bf16.mxu0 %v1238
      %1321 = vmatpush1.bf16.msra.mxu0 %v1237
      %1322 = vmatprep.subr.bf16.mxu0 %v1230
      %1323 = vmatpush1.bf16.msra.mxu0 %v1229
      %1324 = vmatprep.subr.bf16.mxu0 %v1222
      %1325 = vmatpush1.bf16.msra.mxu0 %v1221
      %1326 = vmatprep.subr.bf16.mxu0 %v1214
      %1327 = vmatpush1.bf16.msra.mxu0 %v1213
      %1328 = vmatprep.subr.bf16.mxu0 0
      %1329 = vmatpush2.bf16.msra.mxu0 0
      %1330 = vmatprep.subr.bf16.mxu0 0
      %1331 = vmatpush2.bf16.msra.mxu0 0
      %1332 = vmatprep.subr.bf16.mxu0 0
      %1333 = vmatpush2.bf16.msra.mxu0 0
      %1334 = vmatprep.subr.bf16.mxu0 0
      %1335 = vmatpush2.bf16.msra.mxu0 0
      %1336 = vmatprep.subr.bf16.mxu0 0
      %1337 = vmatpush2.bf16.msra.mxu0 0
      %1338 = vmatprep.subr.bf16.mxu0 0
      %1339 = vmatpush2.bf16.msra.mxu0 0
      %1340 = vmatprep.subr.bf16.mxu0 0
      %1341 = vmatpush2.bf16.msra.mxu0 0
      %1342 = vmatprep.subr.bf16.mxu0 0
      %1343 = vmatpush2.bf16.msra.mxu0 0
      %1344 = vmatprep.mubr.bf16.mxu0 0
      %1345 = vmatmul.mubr.bf16.gmra.mxu0 %v1286
      %v1346 = vpop.f32.mrf.mxu0
      %v1347 = vadd.f32 0.0, %v1346
      %v1348 = vpop.f32.mrf.mxu0
      %v1349 = vadd.f32 0.0, %v1348
      %v1350 = vpop.f32.mrf.mxu0
      %v1351 = vadd.f32 0.0, %v1350
      %v1352 = vpop.f32.mrf.mxu0
      %v1353 = vadd.f32 0.0, %v1352
      %1354 = vdwg.mxu0
      %1355 = vmatprep.subr.bf16.mxu0 0
      %1356 = vmatpush1.bf16.msra.mxu0 0
      %1357 = vmatprep.subr.bf16.mxu0 0
      %1358 = vmatpush1.bf16.msra.mxu0 0
      %1359 = vmatprep.subr.bf16.mxu0 0
      %1360 = vmatpush1.bf16.msra.mxu0 0
      %1361 = vmatprep.subr.bf16.mxu0 %v1298
      %1362 = vmatpush1.bf16.msra.mxu0 %v1295
      %1363 = vmatprep.subr.bf16.mxu0 %v1240
      %1364 = vmatpush1.bf16.msra.mxu0 %v1239
      %1365 = vmatprep.subr.bf16.mxu0 %v1232
      %1366 = vmatpush1.bf16.msra.mxu0 %v1231
      %1367 = vmatprep.subr.bf16.mxu0 %v1224
      %1368 = vmatpush1.bf16.msra.mxu0 %v1223
      %1369 = vmatprep.subr.bf16.mxu0 %v1216
      %1370 = vmatpush1.bf16.msra.mxu0 %v1215
      %1371 = vmatprep.subr.bf16.mxu0 0
      %1372 = vmatpush2.bf16.msra.mxu0 0
      %1373 = vmatprep.subr.bf16.mxu0 0
      %1374 = vmatpush2.bf16.msra.mxu0 0
      %1375 = vmatprep.subr.bf16.mxu0 0
      %1376 = vmatpush2.bf16.msra.mxu0 0
      %1377 = vmatprep.subr.bf16.mxu0 0
      %1378 = vmatpush2.bf16.msra.mxu0 0
      %1379 = vmatprep.subr.bf16.mxu0 0
      %1380 = vmatpush2.bf16.msra.mxu0 0
      %1381 = vmatprep.subr.bf16.mxu0 0
      %1382 = vmatpush2.bf16.msra.mxu0 0
      %1383 = vmatprep.subr.bf16.mxu0 0
      %1384 = vmatpush2.bf16.msra.mxu0 0
      %1385 = vmatprep.subr.bf16.mxu0 0
      %1386 = vmatpush2.bf16.msra.mxu0 0
      %1387 = vmatprep.mubr.bf16.mxu0 0
      %1388 = vmatmul.mubr.bf16.gmra.mxu0 %v1286
      %v1389 = vpop.f32.mrf.mxu0
      %v1390 = vadd.f32 0.0, %v1389
      %v1391 = vpop.f32.mrf.mxu0
      %v1392 = vadd.f32 0.0, %v1391
      %v1393 = vpop.f32.mrf.mxu0
      %v1394 = vadd.f32 0.0, %v1393
      %v1395 = vpop.f32.mrf.mxu0
      %v1396 = vadd.f32 0.0, %v1395
      %1397 = vdwg.mxu0
      %1398 = vmatprep.subr.bf16.mxu0 0
      %1399 = vmatpush1.bf16.msra.mxu0 0
      %1400 = vmatprep.subr.bf16.mxu0 0
      %1401 = vmatpush1.bf16.msra.mxu0 0
      %1402 = vmatprep.subr.bf16.mxu0 0
      %1403 = vmatpush1.bf16.msra.mxu0 0
      %1404 = vmatprep.subr.bf16.mxu0 %v1304
      %1405 = vmatpush1.bf16.msra.mxu0 %v1301
      %1406 = vmatprep.subr.bf16.mxu0 %v1242
      %1407 = vmatpush1.bf16.msra.mxu0 %v1241
      %1408 = vmatprep.subr.bf16.mxu0 %v1234
      %1409 = vmatpush1.bf16.msra.mxu0 %v1233
      %1410 = vmatprep.subr.bf16.mxu0 %v1226
      %1411 = vmatpush1.bf16.msra.mxu0 %v1225
      %1412 = vmatprep.subr.bf16.mxu0 %v1218
      %1413 = vmatpush1.bf16.msra.mxu0 %v1217
      %1414 = vmatprep.subr.bf16.mxu0 0
      %1415 = vmatpush2.bf16.msra.mxu0 0
      %1416 = vmatprep.subr.bf16.mxu0 0
      %1417 = vmatpush2.bf16.msra.mxu0 0
      %1418 = vmatprep.subr.bf16.mxu0 0
      %1419 = vmatpush2.bf16.msra.mxu0 0
      %1420 = vmatprep.subr.bf16.mxu0 0
      %1421 = vmatpush2.bf16.msra.mxu0 0
      %1422 = vmatprep.subr.bf16.mxu0 0
      %1423 = vmatpush2.bf16.msra.mxu0 0
      %1424 = vmatprep.subr.bf16.mxu0 0
      %1425 = vmatpush2.bf16.msra.mxu0 0
      %1426 = vmatprep.subr.bf16.mxu0 0
      %1427 = vmatpush2.bf16.msra.mxu0 0
      %1428 = vmatprep.subr.bf16.mxu0 0
      %1429 = vmatpush2.bf16.msra.mxu0 0
      %1430 = vmatprep.mubr.bf16.mxu0 0
      %1431 = vmatmul.mubr.bf16.gmra.mxu0 %v1286
      %v1432 = vpop.f32.mrf.mxu0
      %v1433 = vadd.f32 0.0, %v1432
      %v1434 = vpop.f32.mrf.mxu0
      %v1435 = vadd.f32 0.0, %v1434
      %v1436 = vpop.f32.mrf.mxu0
      %v1437 = vadd.f32 0.0, %v1436
      %v1438 = vpop.f32.mrf.mxu0
      %v1439 = vadd.f32 0.0, %v1438
      %1440 = vdwg.mxu0
      %1441 = vmatprep.subr.bf16.mxu0 0
      %1442 = vmatpush1.bf16.msra.mxu0 0
      %1443 = vmatprep.subr.bf16.mxu0 0
      %1444 = vmatpush1.bf16.msra.mxu0 0
      %1445 = vmatprep.subr.bf16.mxu0 0
      %1446 = vmatpush1.bf16.msra.mxu0 0
      %1447 = vmatprep.subr.bf16.mxu0 %v1310
      %1448 = vmatpush1.bf16.msra.mxu0 %v1307
      %1449 = vmatprep.subr.bf16.mxu0 %v1244
      %1450 = vmatpush1.bf16.msra.mxu0 %v1243
      %1451 = vmatprep.subr.bf16.mxu0 %v1236
      %1452 = vmatpush1.bf16.msra.mxu0 %v1235
      %1453 = vmatprep.subr.bf16.mxu0 %v1228
      %1454 = vmatpush1.bf16.msra.mxu0 %v1227
      %1455 = vmatprep.subr.bf16.mxu0 %v1220
      %1456 = vmatpush1.bf16.msra.mxu0 %v1219
      %1457 = vmatprep.subr.bf16.mxu0 0
      %1458 = vmatpush2.bf16.msra.mxu0 0
      %1459 = vmatprep.subr.bf16.mxu0 0
      %1460 = vmatpush2.bf16.msra.mxu0 0
      %1461 = vmatprep.subr.bf16.mxu0 0
      %1462 = vmatpush2.bf16.msra.mxu0 0
      %1463 = vmatprep.subr.bf16.mxu0 0
      %1464 = vmatpush2.bf16.msra.mxu0 0
      %1465 = vmatprep.subr.bf16.mxu0 0
      %1466 = vmatpush2.bf16.msra.mxu0 0
      %1467 = vmatprep.subr.bf16.mxu0 0
      %1468 = vmatpush2.bf16.msra.mxu0 0
      %1469 = vmatprep.subr.bf16.mxu0 0
      %1470 = vmatpush2.bf16.msra.mxu0 0
      %1471 = vmatprep.subr.bf16.mxu0 0
      %1472 = vmatpush2.bf16.msra.mxu0 0
      %1473 = vmatprep.mubr.bf16.mxu0 0
      %1474 = vmatmul.mubr.bf16.gmra.mxu0 %v1286
      %v1475 = vpop.f32.mrf.mxu0
      %v1476 = vadd.f32 0.0, %v1475
      %v1477 = vpop.f32.mrf.mxu0
      %v1478 = vadd.f32 0.0, %v1477
      %v1479 = vpop.f32.mrf.mxu0
      %v1480 = vadd.f32 0.0, %v1479
      %v1481 = vpop.f32.mrf.mxu0
      %v1482 = vadd.f32 0.0, %v1481
      %1483 = vdwg.mxu0
      %v1484 = vadd.f32 %v928, %v1347
      %v1485 = vadd.f32 %v930, %v1349
      %v1486 = vadd.f32 %v971, %v1390
      %v1487 = vadd.f32 %v973, %v1392
      %v1488 = vadd.f32 %v1014, %v1433
      %v1489 = vadd.f32 %v1016, %v1435
      %v1490 = vadd.f32 %v1057, %v1476
      %v1491 = vadd.f32 %v1059, %v1478
      %v1492 = vadd.f32 %v932, %v1351
      %v1493 = vadd.f32 %v934, %v1353
      %v1494 = vadd.f32 %v975, %v1394
      %v1495 = vadd.f32 %v977, %v1396
      %v1496 = vadd.f32 %v1018, %v1437
      %v1497 = vadd.f32 %v1020, %v1439
      %v1498 = vadd.f32 %v1061, %v1480
      %v1499 = vadd.f32 %v1063, %v1482
      %v1500 = vld [vmem:[%s3] ss:$2 sm:$0xff]
      %v1502 = vlaneseq
      %v1503 = vshrl.u32 %v1502, 7
      %v1504 = vsub.s32 0, %v1503
      %v1505 = vrot.slane %v1500, %v1504
      %v1506 = vlaneseq
      %v1507 = vshrl.u32 %v1506, 7
      %v1508 = vsub.s32 1, %v1507
      %v1509 = vrot.slane %v1500, %v1508
      %v1510 = vlaneseq
      %v1511 = vshrl.u32 %v1510, 7
      %v1512 = vsub.s32 2, %v1511
      %v1513 = vrot.slane %v1500, %v1512
      %v1514 = vlaneseq
      %v1515 = vshrl.u32 %v1514, 7
      %v1516 = vsub.s32 3, %v1515
      %v1517 = vrot.slane %v1500, %v1516
      %v1518 = vlaneseq
      %v1519 = vshrl.u32 %v1518, 7
      %v1520 = vsub.s32 4, %v1519
      %v1521 = vrot.slane %v1500, %v1520
      %v1522 = vlaneseq
      %v1523 = vshrl.u32 %v1522, 7
      %v1524 = vsub.s32 5, %v1523
      %v1525 = vrot.slane %v1500, %v1524
      %v1526 = vlaneseq
      %v1527 = vshrl.u32 %v1526, 7
      %v1528 = vsub.s32 6, %v1527
      %v1529 = vrot.slane %v1500, %v1528
      %v1530 = vlaneseq
      %v1531 = vshrl.u32 %v1530, 7
      %v1532 = vsub.s32 7, %v1531
      %v1533 = vrot.slane %v1500, %v1532
      %v1542 = vmul.f32 %v1484, %v1505
      %v1543 = vmul.f32 %v1485, %v1509
      %v1544 = vmul.f32 %v1486, %v1513
      %v1545 = vmul.f32 %v1487, %v1517
      %v1546 = vmul.f32 %v1488, %v1521
      %v1547 = vmul.f32 %v1489, %v1525
      %v1548 = vmul.f32 %v1490, %v1529
      %v1549 = vmul.f32 %v1491, %v1533
      %v1550 = vmul.f32 %v1492, %v1505
      %v1551 = vmul.f32 %v1493, %v1509
      %v1552 = vmul.f32 %v1494, %v1513
      %v1553 = vmul.f32 %v1495, %v1517
      %v1554 = vmul.f32 %v1496, %v1521
      %v1555 = vmul.f32 %v1497, %v1525
      %v1556 = vmul.f32 %v1498, %v1529
      %v1557 = vmul.f32 %v1499, %v1533
      %s1558 = scalar_lea.vmem %s3, 1
      %v1559 = vld [vmem:[%s1558] ss:$2 sm:$0xff]
      %v1561 = vlaneseq
      %v1562 = vshrl.u32 %v1561, 7
      %v1563 = vsub.s32 0, %v1562
      %v1564 = vrot.slane %v1559, %v1563
      %v1565 = vlaneseq
      %v1566 = vshrl.u32 %v1565, 7
      %v1567 = vsub.s32 1, %v1566
      %v1568 = vrot.slane %v1559, %v1567
      %v1569 = vlaneseq
      %v1570 = vshrl.u32 %v1569, 7
      %v1571 = vsub.s32 2, %v1570
      %v1572 = vrot.slane %v1559, %v1571
      %v1573 = vlaneseq
      %v1574 = vshrl.u32 %v1573, 7
      %v1575 = vsub.s32 3, %v1574
      %v1576 = vrot.slane %v1559, %v1575
      %v1577 = vlaneseq
      %v1578 = vshrl.u32 %v1577, 7
      %v1579 = vsub.s32 4, %v1578
      %v1580 = vrot.slane %v1559, %v1579
      %v1581 = vlaneseq
      %v1582 = vshrl.u32 %v1581, 7
      %v1583 = vsub.s32 5, %v1582
      %v1584 = vrot.slane %v1559, %v1583
      %v1585 = vlaneseq
      %v1586 = vshrl.u32 %v1585, 7
      %v1587 = vsub.s32 6, %v1586
      %v1588 = vrot.slane %v1559, %v1587
      %v1589 = vlaneseq
      %v1590 = vshrl.u32 %v1589, 7
      %v1591 = vsub.s32 7, %v1590
      %v1592 = vrot.slane %v1559, %v1591
      %v1601 = vadd.f32 %v1542, %v1564
      %v1602 = vadd.f32 %v1543, %v1568
      %v1603 = vadd.f32 %v1544, %v1572
      %v1604 = vadd.f32 %v1545, %v1576
      %v1605 = vadd.f32 %v1546, %v1580
      %v1606 = vadd.f32 %v1547, %v1584
      %v1607 = vadd.f32 %v1548, %v1588
      %v1608 = vadd.f32 %v1549, %v1592
      %v1609 = vadd.f32 %v1550, %v1564
      %v1610 = vadd.f32 %v1551, %v1568
      %v1611 = vadd.f32 %v1552, %v1572
      %v1612 = vadd.f32 %v1553, %v1576
      %v1613 = vadd.f32 %v1554, %v1580
      %v1614 = vadd.f32 %v1555, %v1584
      %v1615 = vadd.f32 %v1556, %v1588
      %v1616 = vadd.f32 %v1557, %v1592
      %v1617 = vmax.f32 %v1601, 0.0
      %v1618 = vmax.f32 %v1602, 0.0
      %v1619 = vmax.f32 %v1603, 0.0
      %v1620 = vmax.f32 %v1604, 0.0
      %v1621 = vmax.f32 %v1609, 0.0
      %v1622 = vmax.f32 %v1610, 0.0
      %v1623 = vmax.f32 %v1611, 0.0
      %v1624 = vmax.f32 %v1612, 0.0
      %1625 = vst [vmem:[#allocation2] sm:$0xff] 0.0
      %1626 = vst [vmem:[#allocation2 + $0x8] sm:$0xff] 0.0
      %1627 = vst [vmem:[#allocation2 + $0x10] sm:$0xff] 0.0
      %1628 = vst [vmem:[#allocation2 + $0x18] sm:$0xff] 0.0
      %1629 = vst [vmem:[#allocation2 + $0x20] sm:$0xff] 0.0
      %1630 = vst [vmem:[#allocation2 + $0x28] sm:$0xff] 0.0
      %1631 = vst [vmem:[#allocation2 + $0x30] sm:$0xff] 0.0
      %1632 = vst [vmem:[#allocation2 + $0x38] sm:$0xff] 0.0
      %vm1633 = vcmask 523264
      %1634 = vst.msk [vmem:[#allocation2 + $0x40] sm:$0xff] %vm1633, 0.0
      %1635 = vst [vmem:[#allocation2 + $0x48] sm:$0xff] 0.0
      %1636 = vst [vmem:[#allocation2 + $0x50] sm:$0xff] 0.0
      %1637 = vst [vmem:[#allocation2 + $0x58] sm:$0xff] 0.0
      %1638 = vst [vmem:[#allocation2 + $0x60] sm:$0xff] 0.0
      %1639 = vst [vmem:[#allocation2 + $0x68] sm:$0xff] 0.0
      %1640 = vst [vmem:[#allocation2 + $0x70] sm:$0xff] 0.0
      %1641 = vst [vmem:[#allocation2 + $0x78] sm:$0xff] 0.0
      %1642 = vst [vmem:[#allocation2 + $0x80] sm:$0xff] 0.0
      %1643 = vst.msk [vmem:[#allocation2 + $0x88] sm:$0xff] %vm1633, 0.0
      %vm1648 = vcmask 1040384
      %v1649 = vrot.slane %v1619, 7
      %v1650 = vrot.slane %v1620, 7
      %v1651 = vrot.slane %v1623, 7
      %v1652 = vsel %vm1648, %v1649, %v1651
      %v1653 = vrot.slane %v1624, 7
      %v1654 = vsel %vm1648, %v1650, %v1653
      %1655 = vrot.lane.b32.xlu0 %v1649, 8
      %v1656 = vpop.permute.xlu0 %1655
      %1657 = vrot.lane.b32.xlu0 %v1650, 8
      %v1658 = vpop.permute.xlu0 %1657
      %1659 = vrot.lane.b32.xlu0 %v1652, 8
      %v1660 = vpop.permute.xlu0 %1659
      %1661 = vrot.lane.b32.xlu0 %v1654, 8
      %v1662 = vpop.permute.xlu0 %1661
      %vm1663 = vcmask 64512
      %v1664 = vsel %vm1663, %v1656, %v1658
      %v1665 = vsel %vm1663, %v1660, %v1662
      %vm1672 = vcmask 1047617
      %1673 = vst.msk [vmem:[#allocation2] sm:$0xfe] %vm1672, %v1656
      %1674 = vst [vmem:[#allocation2 + $0x8] sm:$0xfe] %v1664
      %vm1675 = vcmask 64513
      %1676 = vst.msk [vmem:[#allocation2 + $0x10] sm:$0xfe] %vm1675, %v1658
      %vm1677 = vcmask 1047616
      %1678 = vst.msk [vmem:[#allocation2 + $0x48] sm:$0xff] %vm1677, %v1660
      %1679 = vst [vmem:[#allocation2 + $0x50] sm:$0xff] %v1665
      %1680 = vst.msk [vmem:[#allocation2 + $0x58] sm:$0xff] %vm1663, %v1662
      %1685 = vrot.lane.b32.xlu0 %v1617, 24
      %v1686 = vpop.permute.xlu0 %1685
      %1687 = vrot.lane.b32.xlu0 %v1618, 24
      %v1688 = vpop.permute.xlu0 %1687
      %1689 = vrot.lane.b32.xlu0 %v1621, 24
      %v1690 = vpop.permute.xlu0 %1689
      %1691 = vrot.lane.b32.xlu0 %v1622, 24
      %v1692 = vpop.permute.xlu0 %1691
      %vm1693 = vcmask 195584
      %v1694 = vsel %vm1693, %v1686, %v1688
      %v1695 = vsel %vm1693, %v1690, %v1692
      %vm1702 = vcmask 1047744
      %1703 = vst.msk [vmem:[#allocation2 + $0x10] sm:$0xff] %vm1702, %v1686
      %1704 = vst [vmem:[#allocation2 + $0x18] sm:$0xff] %v1694
      %1705 = vst.msk [vmem:[#allocation2 + $0x20] sm:$0xff] %vm1693, %v1688
      %1706 = vst.msk [vmem:[#allocation2 + $0x58] sm:$0xff] %vm1702, %v1690
      %1707 = vst [vmem:[#allocation2 + $0x60] sm:$0xff] %v1695
      %1708 = vst.msk [vmem:[#allocation2 + $0x68] sm:$0xff] %vm1693, %v1692
      %1709 = vrot.lane.b32.xlu0 %v1619, 40
      %v1710 = vpop.permute.xlu0 %1709
      %1711 = vrot.lane.b32.xlu0 %v1620, 40
      %v1712 = vpop.permute.xlu0 %1711
      %1713 = vrot.lane.b32.xlu0 %v1623, 40
      %v1714 = vpop.permute.xlu0 %1713
      %1715 = vrot.lane.b32.xlu0 %v1624, 40
      %v1716 = vpop.permute.xlu0 %1715
      %vm1717 = vcmask 326656
      %v1718 = vsel %vm1717, %v1710, %v1712
      %v1719 = vsel %vm1717, %v1714, %v1716
      %vm1726 = vcmask 1047872
      %1727 = vst.msk [vmem:[#allocation2 + $0x20] sm:$0xff] %vm1726, %v1710
      %1728 = vst [vmem:[#allocation2 + $0x28] sm:$0xff] %v1718
      %1729 = vst.msk [vmem:[#allocation2 + $0x30] sm:$0xff] %vm1717, %v1712
      %1730 = vst.msk [vmem:[#allocation2 + $0x68] sm:$0xff] %vm1726, %v1714
      %1731 = vst [vmem:[#allocation2 + $0x70] sm:$0xff] %v1719
      %1732 = vst.msk [vmem:[#allocation2 + $0x78] sm:$0xff] %vm1717, %v1716
      %vm1733 = vcmask 1046528
      %v1734 = vrot.slane %v1617, 1
      %v1735 = vrot.slane %v1621, 1
      %v1736 = vsel %vm1733, %v1734, %v1735
      %v1737 = vrot.slane %v1618, 1
      %v1738 = vrot.slane %v1622, 1
      %v1739 = vsel %vm1733, %v1737, %v1738
      %1740 = vrot.lane.b32.xlu0 %v1736, 56
      %v1741 = vpop.permute.xlu0 %1740
      %1742 = vrot.lane.b32.xlu0 %v1739, 56
      %v1743 = vpop.permute.xlu0 %1742
      %1744 = vrot.lane.b32.xlu0 %v1735, 56
      %v1745 = vpop.permute.xlu0 %1744
      %1746 = vrot.lane.b32.xlu0 %v1738, 56
      %v1747 = vpop.permute.xlu0 %1746
      %vm1748 = vcmask 457728
      %v1749 = vsel %vm1748, %v1741, %v1743
      %v1750 = vsel %vm1748, %v1745, %v1747
      %vm1757 = vcmask 1048000
      %1758 = vst.msk [vmem:[#allocation2 + $0x30] sm:$0xff] %vm1757, %v1741
      %1759 = vst [vmem:[#allocation2 + $0x38] sm:$0xff] %v1749
      %1760 = vst.msk [vmem:[#allocation2 + $0x40] sm:$0xff] %vm1748, %v1743
      %vm1761 = vcmask 1046976
      %1762 = vst.msk [vmem:[#allocation2 + $0x78] sm:$0x7f] %vm1761, %v1745
      %1763 = vst [vmem:[#allocation2 + $0x80] sm:$0x7f] %v1750
      %vm1764 = vcmask 456704
      %1765 = vst.msk [vmem:[#allocation2 + $0x88] sm:$0x7f] %vm1764, %v1747
      %v1766 = vld [vmem:[#allocation2] sm:$0xff]
      %v1767 = vld [vmem:[#allocation2 + $0x8] sm:$0xff]
      %v1768 = vld [vmem:[#allocation2 + $0x10] sm:$0xff]
      %v1769 = vld [vmem:[#allocation2 + $0x18] sm:$0xff]
      %v1770 = vld [vmem:[#allocation2 + $0x20] sm:$0xff]
      %v1771 = vld [vmem:[#allocation2 + $0x28] sm:$0xff]
      %v1772 = vld [vmem:[#allocation2 + $0x30] sm:$0xff]
      %v1773 = vld [vmem:[#allocation2 + $0x38] sm:$0xff]
      %v1774 = vld [vmem:[#allocation2 + $0x40] sm:$0xff]
      %v1775 = vld [vmem:[#allocation2 + $0x48] sm:$0xff]
      %v1776 = vld [vmem:[#allocation2 + $0x50] sm:$0xff]
      %v1777 = vld [vmem:[#allocation2 + $0x58] sm:$0xff]
      %v1778 = vld [vmem:[#allocation2 + $0x60] sm:$0xff]
      %v1779 = vld [vmem:[#allocation2 + $0x68] sm:$0xff]
      %v1780 = vld [vmem:[#allocation2 + $0x70] sm:$0xff]
      %v1781 = vld [vmem:[#allocation2 + $0x78] sm:$0xff]
      %v1782 = vld [vmem:[#allocation2 + $0x80] sm:$0xff]
      %v1783 = vld [vmem:[#allocation2 + $0x88] sm:$0xff]
      %v1784 = vpack.c.bf16 %v1775, %v1766
      %v1785 = vpack.c.bf16 %v1776, %v1767
      %v1786 = vpack.c.bf16 %v1777, %v1768
      %v1787 = vpack.c.bf16 %v1778, %v1769
      %v1788 = vpack.c.bf16 %v1779, %v1770
      %v1789 = vpack.c.bf16 %v1780, %v1771
      %v1790 = vpack.c.bf16 %v1781, %v1772
      %v1791 = vpack.c.bf16 %v1782, %v1773
      %v1792 = vpack.c.bf16 %v1783, %v1774
      %v1793 = vld [vmem:[%s2] sm:$0xff]
      %v1794 = vld [vmem:[%s2 + $0x8] sm:$0xff]
      %v1795 = vld [vmem:[%s2 + $0x10] sm:$0xff]
      %v1796 = vld [vmem:[%s2 + $0x18] sm:$0xff]
      %v1797 = vld [vmem:[%s2 + $0x20] sm:$0xff]
      %v1798 = vld [vmem:[%s2 + $0x28] sm:$0xff]
      %v1799 = vld [vmem:[%s2 + $0x30] sm:$0xff]
      %v1800 = vld [vmem:[%s2 + $0x38] sm:$0xff]
      %v1801 = vld [vmem:[%s2 + $0x40] sm:$0xff]
      %v1802 = vld [vmem:[%s2 + $0x48] sm:$0xff]
      %v1803 = vld [vmem:[%s2 + $0x50] sm:$0xff]
      %v1804 = vld [vmem:[%s2 + $0x58] sm:$0xff]
      %v1805 = vld [vmem:[%s2 + $0x60] sm:$0xff]
      %v1806 = vld [vmem:[%s2 + $0x68] sm:$0xff]
      %v1807 = vld [vmem:[%s2 + $0x70] sm:$0xff]
      %v1808 = vld [vmem:[%s2 + $0x78] sm:$0xff]
      %v1809 = vld [vmem:[%s2 + $0x80] sm:$0xff]
      %v1810 = vld [vmem:[%s2 + $0x88] sm:$0xff]
      %v1811 = vld [vmem:[%s2 + $0x90] sm:$0xff]
      %v1812 = vld [vmem:[%s2 + $0x98] sm:$0xff]
      %v1813 = vld [vmem:[%s2 + $0xa0] sm:$0xff]
      %v1814 = vld [vmem:[%s2 + $0xa8] sm:$0xff]
      %v1815 = vld [vmem:[%s2 + $0xb0] sm:$0xff]
      %v1816 = vld [vmem:[%s2 + $0xb8] sm:$0xff]
      %v1817 = vld [vmem:[%s2 + $0xc0] sm:$0xff]
      %v1818 = vld [vmem:[%s2 + $0xc8] sm:$0xff]
      %v1819 = vld [vmem:[%s2 + $0xd0] sm:$0xff]
      %v1820 = vld [vmem:[%s2 + $0xd8] sm:$0xff]
      %v1821 = vld [vmem:[%s2 + $0xe0] sm:$0xff]
      %v1822 = vld [vmem:[%s2 + $0xe8] sm:$0xff]
      %v1823 = vld [vmem:[%s2 + $0xf0] sm:$0xff]
      %v1824 = vld [vmem:[%s2 + $0xf8] sm:$0xff]
      %v1825 = vld [vmem:[%s2 + $0x100] sm:$0xff]
      %v1826 = vld [vmem:[%s2 + $0x108] sm:$0xff]
      %v1827 = vld [vmem:[%s2 + $0x110] sm:$0xff]
      %v1828 = vld [vmem:[%s2 + $0x118] sm:$0xff]
      %v1829 = vld [vmem:[%s2 + $0x120] sm:$0xff]
      %v1830 = vld [vmem:[%s2 + $0x128] sm:$0xff]
      %v1831 = vld [vmem:[%s2 + $0x130] sm:$0xff]
      %v1832 = vld [vmem:[%s2 + $0x138] sm:$0xff]
      %v1833 = vld [vmem:[%s2 + $0x140] sm:$0xff]
      %v1834 = vld [vmem:[%s2 + $0x148] sm:$0xff]
      %v1835 = vld [vmem:[%s2 + $0x150] sm:$0xff]
      %v1836 = vld [vmem:[%s2 + $0x158] sm:$0xff]
      %v1837 = vld [vmem:[%s2 + $0x160] sm:$0xff]
      %v1838 = vld [vmem:[%s2 + $0x168] sm:$0xff]
      %v1839 = vld [vmem:[%s2 + $0x170] sm:$0xff]
      %v1840 = vld [vmem:[%s2 + $0x178] sm:$0xff]
      %v1841 = vld [vmem:[%s2 + $0x180] sm:$0xff]
      %v1842 = vld [vmem:[%s2 + $0x188] sm:$0xff]
      %v1843 = vld [vmem:[%s2 + $0x190] sm:$0xff]
      %v1844 = vld [vmem:[%s2 + $0x198] sm:$0xff]
      %v1845 = vld [vmem:[%s2 + $0x1a0] sm:$0xff]
      %v1846 = vld [vmem:[%s2 + $0x1a8] sm:$0xff]
      %v1847 = vld [vmem:[%s2 + $0x1b0] sm:$0xff]
      %v1848 = vld [vmem:[%s2 + $0x1b8] sm:$0xff]
      %v1849 = vld [vmem:[%s2 + $0x1c0] sm:$0xff]
      %v1850 = vld [vmem:[%s2 + $0x1c8] sm:$0xff]
      %v1851 = vld [vmem:[%s2 + $0x1d0] sm:$0xff]
      %v1852 = vld [vmem:[%s2 + $0x1d8] sm:$0xff]
      %v1853 = vld [vmem:[%s2 + $0x1e0] sm:$0xff]
      %v1854 = vld [vmem:[%s2 + $0x1e8] sm:$0xff]
      %v1855 = vld [vmem:[%s2 + $0x1f0] sm:$0xff]
      %v1856 = vld [vmem:[%s2 + $0x1f8] sm:$0xff]
      %v1857 = vld [vmem:[%s2 + $0x200] sm:$0xff]
      %v1858 = vld [vmem:[%s2 + $0x208] sm:$0xff]
      %v1859 = vld [vmem:[%s2 + $0x210] sm:$0xff]
      %v1860 = vld [vmem:[%s2 + $0x218] sm:$0xff]
      %v1861 = vld [vmem:[%s2 + $0x220] sm:$0xff]
      %v1862 = vld [vmem:[%s2 + $0x228] sm:$0xff]
      %v1863 = vld [vmem:[%s2 + $0x230] sm:$0xff]
      %v1864 = vld [vmem:[%s2 + $0x238] sm:$0xff]
      %v1865 = vld [vmem:[%s2 + $0x240] sm:$0xff]
      %v1866 = vld [vmem:[%s2 + $0x248] sm:$0xff]
      %v1867 = vld [vmem:[%s2 + $0x250] sm:$0xff]
      %v1868 = vld [vmem:[%s2 + $0x258] sm:$0xff]
      %v1869 = vld [vmem:[%s2 + $0x260] sm:$0xff]
      %v1870 = vld [vmem:[%s2 + $0x268] sm:$0xff]
      %v1871 = vld [vmem:[%s2 + $0x270] sm:$0xff]
      %v1872 = vld [vmem:[%s2 + $0x278] sm:$0xff]
      %v1873 = vld [vmem:[%s2 + $0x280] sm:$0xff]
      %v1874 = vld [vmem:[%s2 + $0x288] sm:$0xff]
      %v1875 = vld [vmem:[%s2 + $0x290] sm:$0xff]
      %v1876 = vld [vmem:[%s2 + $0x298] sm:$0xff]
      %v1877 = vld [vmem:[%s2 + $0x2a0] sm:$0xff]
      %v1878 = vld [vmem:[%s2 + $0x2a8] sm:$0xff]
      %v1879 = vld [vmem:[%s2 + $0x2b0] sm:$0xff]
      %v1880 = vld [vmem:[%s2 + $0x2b8] sm:$0xff]
      %v1881 = vld [vmem:[%s2 + $0x2c0] sm:$0xff]
      %v1882 = vld [vmem:[%s2 + $0x2c8] sm:$0xff]
      %v1883 = vld [vmem:[%s2 + $0x2d0] sm:$0xff]
      %v1884 = vld [vmem:[%s2 + $0x2d8] sm:$0xff]
      %v1885 = vld [vmem:[%s2 + $0x2e0] sm:$0xff]
      %v1886 = vld [vmem:[%s2 + $0x2e8] sm:$0xff]
      %v1887 = vld [vmem:[%s2 + $0x2f0] sm:$0xff]
      %v1888 = vld [vmem:[%s2 + $0x2f8] sm:$0xff]
      %v1889 = vld [vmem:[%s2 + $0x300] sm:$0xff]
      %v1890 = vld [vmem:[%s2 + $0x308] sm:$0xff]
      %v1891 = vld [vmem:[%s2 + $0x310] sm:$0xff]
      %v1892 = vld [vmem:[%s2 + $0x318] sm:$0xff]
      %v1893 = vld [vmem:[%s2 + $0x320] sm:$0xff]
      %v1894 = vld [vmem:[%s2 + $0x328] sm:$0xff]
      %v1895 = vld [vmem:[%s2 + $0x330] sm:$0xff]
      %v1896 = vld [vmem:[%s2 + $0x338] sm:$0xff]
      %v1897 = vld [vmem:[%s2 + $0x340] sm:$0xff]
      %v1898 = vld [vmem:[%s2 + $0x348] sm:$0xff]
      %v1899 = vld [vmem:[%s2 + $0x350] sm:$0xff]
      %v1900 = vld [vmem:[%s2 + $0x358] sm:$0xff]
      %v1901 = vld [vmem:[%s2 + $0x360] sm:$0xff]
      %v1902 = vld [vmem:[%s2 + $0x368] sm:$0xff]
      %v1903 = vld [vmem:[%s2 + $0x370] sm:$0xff]
      %v1904 = vld [vmem:[%s2 + $0x378] sm:$0xff]
      %v1905 = vld [vmem:[%s2 + $0x380] sm:$0xff]
      %v1906 = vld [vmem:[%s2 + $0x388] sm:$0xff]
      %v1907 = vld [vmem:[%s2 + $0x390] sm:$0xff]
      %v1908 = vld [vmem:[%s2 + $0x398] sm:$0xff]
      %v1909 = vld [vmem:[%s2 + $0x3a0] sm:$0xff]
      %v1910 = vld [vmem:[%s2 + $0x3a8] sm:$0xff]
      %v1911 = vld [vmem:[%s2 + $0x3b0] sm:$0xff]
      %v1912 = vld [vmem:[%s2 + $0x3b8] sm:$0xff]
      %v1913 = vld [vmem:[%s2 + $0x3c0] sm:$0xff]
      %v1914 = vld [vmem:[%s2 + $0x3c8] sm:$0xff]
      %v1915 = vld [vmem:[%s2 + $0x3d0] sm:$0xff]
      %v1916 = vld [vmem:[%s2 + $0x3d8] sm:$0xff]
      %v1917 = vld [vmem:[%s2 + $0x3e0] sm:$0xff]
      %v1918 = vld [vmem:[%s2 + $0x3e8] sm:$0xff]
      %v1919 = vld [vmem:[%s2 + $0x3f0] sm:$0xff]
      %v1920 = vld [vmem:[%s2 + $0x3f8] sm:$0xff]
      %v1921 = vld [vmem:[%s2 + $0x400] sm:$0xff]
      %v1922 = vld [vmem:[%s2 + $0x408] sm:$0xff]
      %v1923 = vld [vmem:[%s2 + $0x410] sm:$0xff]
      %v1924 = vld [vmem:[%s2 + $0x418] sm:$0xff]
      %v1925 = vld [vmem:[%s2 + $0x420] sm:$0xff]
      %v1926 = vld [vmem:[%s2 + $0x428] sm:$0xff]
      %v1927 = vld [vmem:[%s2 + $0x430] sm:$0xff]
      %v1928 = vld [vmem:[%s2 + $0x438] sm:$0xff]
      %v1929 = vld [vmem:[%s2 + $0x440] sm:$0xff]
      %v1930 = vld [vmem:[%s2 + $0x448] sm:$0xff]
      %v1931 = vld [vmem:[%s2 + $0x450] sm:$0xff]
      %v1932 = vld [vmem:[%s2 + $0x458] sm:$0xff]
      %v1933 = vld [vmem:[%s2 + $0x460] sm:$0xff]
      %v1934 = vld [vmem:[%s2 + $0x468] sm:$0xff]
      %v1935 = vld [vmem:[%s2 + $0x470] sm:$0xff]
      %v1936 = vld [vmem:[%s2 + $0x478] sm:$0xff]
      %v1937 = vld [vmem:[%s2 + $0x480] sm:$0xff]
      %v1938 = vld [vmem:[%s2 + $0x488] sm:$0xff]
      %v1939 = vld [vmem:[%s2 + $0x490] sm:$0xff]
      %v1940 = vld [vmem:[%s2 + $0x498] sm:$0xff]
      %v1941 = vld [vmem:[%s2 + $0x4a0] sm:$0xff]
      %v1942 = vld [vmem:[%s2 + $0x4a8] sm:$0xff]
      %v1943 = vld [vmem:[%s2 + $0x4b0] sm:$0xff]
      %v1944 = vld [vmem:[%s2 + $0x4b8] sm:$0xff]
      %v1945 = vld [vmem:[%s2 + $0x4c0] sm:$0xff]
      %v1946 = vld [vmem:[%s2 + $0x4c8] sm:$0xff]
      %v1947 = vld [vmem:[%s2 + $0x4d0] sm:$0xff]
      %v1948 = vld [vmem:[%s2 + $0x4d8] sm:$0xff]
      %v1949 = vld [vmem:[%s2 + $0x4e0] sm:$0xff]
      %v1950 = vld [vmem:[%s2 + $0x4e8] sm:$0xff]
      %v1951 = vld [vmem:[%s2 + $0x4f0] sm:$0xff]
      %v1952 = vld [vmem:[%s2 + $0x4f8] sm:$0xff]
      %v1953 = vld [vmem:[%s2 + $0x500] sm:$0xff]
      %v1954 = vld [vmem:[%s2 + $0x508] sm:$0xff]
      %v1955 = vld [vmem:[%s2 + $0x510] sm:$0xff]
      %v1956 = vld [vmem:[%s2 + $0x518] sm:$0xff]
      %v1957 = vld [vmem:[%s2 + $0x520] sm:$0xff]
      %v1958 = vld [vmem:[%s2 + $0x528] sm:$0xff]
      %v1959 = vld [vmem:[%s2 + $0x530] sm:$0xff]
      %v1960 = vld [vmem:[%s2 + $0x538] sm:$0xff]
      %v1961 = vld [vmem:[%s2 + $0x540] sm:$0xff]
      %v1962 = vld [vmem:[%s2 + $0x548] sm:$0xff]
      %v1963 = vld [vmem:[%s2 + $0x550] sm:$0xff]
      %v1964 = vld [vmem:[%s2 + $0x558] sm:$0xff]
      %v1965 = vld [vmem:[%s2 + $0x560] sm:$0xff]
      %v1966 = vld [vmem:[%s2 + $0x568] sm:$0xff]
      %v1967 = vld [vmem:[%s2 + $0x570] sm:$0xff]
      %v1968 = vld [vmem:[%s2 + $0x578] sm:$0xff]
      %v1969 = vld [vmem:[%s2 + $0x580] sm:$0xff]
      %v1970 = vld [vmem:[%s2 + $0x588] sm:$0xff]
      %v1971 = vld [vmem:[%s2 + $0x590] sm:$0xff]
      %v1972 = vld [vmem:[%s2 + $0x598] sm:$0xff]
      %v1973 = vld [vmem:[%s2 + $0x5a0] sm:$0xff]
      %v1974 = vld [vmem:[%s2 + $0x5a8] sm:$0xff]
      %v1975 = vld [vmem:[%s2 + $0x5b0] sm:$0xff]
      %v1976 = vld [vmem:[%s2 + $0x5b8] sm:$0xff]
      %v1977 = vld [vmem:[%s2 + $0x5c0] sm:$0xff]
      %v1978 = vld [vmem:[%s2 + $0x5c8] sm:$0xff]
      %v1979 = vld [vmem:[%s2 + $0x5d0] sm:$0xff]
      %v1980 = vld [vmem:[%s2 + $0x5d8] sm:$0xff]
      %v1981 = vld [vmem:[%s2 + $0x5e0] sm:$0xff]
      %v1982 = vld [vmem:[%s2 + $0x5e8] sm:$0xff]
      %v1983 = vld [vmem:[%s2 + $0x5f0] sm:$0xff]
      %v1984 = vld [vmem:[%s2 + $0x5f8] sm:$0xff]
      %v1985 = vld [vmem:[%s2 + $0x600] sm:$0xff]
      %v1986 = vld [vmem:[%s2 + $0x608] sm:$0xff]
      %v1987 = vld [vmem:[%s2 + $0x610] sm:$0xff]
      %v1988 = vld [vmem:[%s2 + $0x618] sm:$0xff]
      %v1989 = vld [vmem:[%s2 + $0x620] sm:$0xff]
      %v1990 = vld [vmem:[%s2 + $0x628] sm:$0xff]
      %v1991 = vld [vmem:[%s2 + $0x630] sm:$0xff]
      %v1992 = vld [vmem:[%s2 + $0x638] sm:$0xff]
      %v1993 = vld [vmem:[%s2 + $0x640] sm:$0xff]
      %v1994 = vld [vmem:[%s2 + $0x648] sm:$0xff]
      %v1995 = vld [vmem:[%s2 + $0x650] sm:$0xff]
      %v1996 = vld [vmem:[%s2 + $0x658] sm:$0xff]
      %v1997 = vld [vmem:[%s2 + $0x660] sm:$0xff]
      %v1998 = vld [vmem:[%s2 + $0x668] sm:$0xff]
      %v1999 = vld [vmem:[%s2 + $0x670] sm:$0xff]
      %v2000 = vld [vmem:[%s2 + $0x678] sm:$0xff]
      %v2001 = vld [vmem:[%s2 + $0x680] sm:$0xff]
      %v2002 = vld [vmem:[%s2 + $0x688] sm:$0xff]
      %v2003 = vld [vmem:[%s2 + $0x690] sm:$0xff]
      %v2004 = vld [vmem:[%s2 + $0x698] sm:$0xff]
      %v2005 = vld [vmem:[%s2 + $0x6a0] sm:$0xff]
      %v2006 = vld [vmem:[%s2 + $0x6a8] sm:$0xff]
      %v2007 = vld [vmem:[%s2 + $0x6b0] sm:$0xff]
      %v2008 = vld [vmem:[%s2 + $0x6b8] sm:$0xff]
      %v2009 = vld [vmem:[%s2 + $0x6c0] sm:$0xff]
      %v2010 = vld [vmem:[%s2 + $0x6c8] sm:$0xff]
      %v2011 = vld [vmem:[%s2 + $0x6d0] sm:$0xff]
      %v2012 = vld [vmem:[%s2 + $0x6d8] sm:$0xff]
      %v2013 = vld [vmem:[%s2 + $0x6e0] sm:$0xff]
      %v2014 = vld [vmem:[%s2 + $0x6e8] sm:$0xff]
      %v2015 = vld [vmem:[%s2 + $0x6f0] sm:$0xff]
      %v2016 = vld [vmem:[%s2 + $0x6f8] sm:$0xff]
      %v2017 = vld [vmem:[%s2 + $0x700] sm:$0xff]
      %v2018 = vld [vmem:[%s2 + $0x708] sm:$0xff]
      %v2019 = vld [vmem:[%s2 + $0x710] sm:$0xff]
      %v2020 = vld [vmem:[%s2 + $0x718] sm:$0xff]
      %v2021 = vld [vmem:[%s2 + $0x720] sm:$0xff]
      %v2022 = vld [vmem:[%s2 + $0x728] sm:$0xff]
      %v2023 = vld [vmem:[%s2 + $0x730] sm:$0xff]
      %v2024 = vld [vmem:[%s2 + $0x738] sm:$0xff]
      %v2025 = vld [vmem:[%s2 + $0x740] sm:$0xff]
      %v2026 = vld [vmem:[%s2 + $0x748] sm:$0xff]
      %v2027 = vld [vmem:[%s2 + $0x750] sm:$0xff]
      %v2028 = vld [vmem:[%s2 + $0x758] sm:$0xff]
      %v2029 = vld [vmem:[%s2 + $0x760] sm:$0xff]
      %v2030 = vld [vmem:[%s2 + $0x768] sm:$0xff]
      %v2031 = vld [vmem:[%s2 + $0x770] sm:$0xff]
      %v2032 = vld [vmem:[%s2 + $0x778] sm:$0xff]
      %v2033 = vld [vmem:[%s2 + $0x780] sm:$0xff]
      %v2034 = vld [vmem:[%s2 + $0x788] sm:$0xff]
      %v2035 = vld [vmem:[%s2 + $0x790] sm:$0xff]
      %v2036 = vld [vmem:[%s2 + $0x798] sm:$0xff]
      %v2037 = vld [vmem:[%s2 + $0x7a0] sm:$0xff]
      %v2038 = vld [vmem:[%s2 + $0x7a8] sm:$0xff]
      %v2039 = vld [vmem:[%s2 + $0x7b0] sm:$0xff]
      %v2040 = vld [vmem:[%s2 + $0x7b8] sm:$0xff]
      %v2041 = vld [vmem:[%s2 + $0x7c0] sm:$0xff]
      %v2042 = vld [vmem:[%s2 + $0x7c8] sm:$0xff]
      %v2043 = vld [vmem:[%s2 + $0x7d0] sm:$0xff]
      %v2044 = vld [vmem:[%s2 + $0x7d8] sm:$0xff]
      %v2045 = vld [vmem:[%s2 + $0x7e0] sm:$0xff]
      %v2046 = vld [vmem:[%s2 + $0x7e8] sm:$0xff]
      %v2047 = vld [vmem:[%s2 + $0x7f0] sm:$0xff]
      %v2048 = vld [vmem:[%s2 + $0x7f8] sm:$0xff]
      %v2049 = vld [vmem:[%s2 + $0x800] sm:$0xff]
      %v2050 = vld [vmem:[%s2 + $0x808] sm:$0xff]
      %v2051 = vld [vmem:[%s2 + $0x810] sm:$0xff]
      %v2052 = vld [vmem:[%s2 + $0x818] sm:$0xff]
      %v2053 = vld [vmem:[%s2 + $0x820] sm:$0xff]
      %v2054 = vld [vmem:[%s2 + $0x828] sm:$0xff]
      %v2055 = vld [vmem:[%s2 + $0x830] sm:$0xff]
      %v2056 = vld [vmem:[%s2 + $0x838] sm:$0xff]
      %v2057 = vld [vmem:[%s2 + $0x840] sm:$0xff]
      %v2058 = vld [vmem:[%s2 + $0x848] sm:$0xff]
      %v2059 = vld [vmem:[%s2 + $0x850] sm:$0xff]
      %v2060 = vld [vmem:[%s2 + $0x858] sm:$0xff]
      %v2061 = vld [vmem:[%s2 + $0x860] sm:$0xff]
      %v2062 = vld [vmem:[%s2 + $0x868] sm:$0xff]
      %v2063 = vld [vmem:[%s2 + $0x870] sm:$0xff]
      %v2064 = vld [vmem:[%s2 + $0x878] sm:$0xff]
      %v2337 = vunpack.c.l.b16 %v1793
      %v2338 = vunpack.c.h.b16 %v1793
      %v2339 = vunpack.c.l.b16 %v1794
      %v2340 = vunpack.c.h.b16 %v1794
      %v2341 = vunpack.c.l.b16 %v1795
      %v2342 = vunpack.c.h.b16 %v1795
      %v2343 = vunpack.c.l.b16 %v1796
      %v2344 = vunpack.c.h.b16 %v1796
      %v2345 = vunpack.c.l.b16 %v1797
      %v2346 = vunpack.c.h.b16 %v1797
      %v2347 = vunpack.c.l.b16 %v1798
      %v2348 = vunpack.c.h.b16 %v1798
      %v2349 = vunpack.c.l.b16 %v1799
      %v2350 = vunpack.c.h.b16 %v1799
      %v2351 = vunpack.c.l.b16 %v1800
      %v2352 = vunpack.c.h.b16 %v1800
      %v2353 = vunpack.c.l.b16 %v1801
      %v2354 = vunpack.c.h.b16 %v1801
      %v2355 = vunpack.c.l.b16 %v1802
      %v2356 = vunpack.c.h.b16 %v1802
      %v2357 = vunpack.c.l.b16 %v1803
      %v2358 = vunpack.c.h.b16 %v1803
      %v2359 = vunpack.c.l.b16 %v1804
      %v2360 = vunpack.c.h.b16 %v1804
      %v2361 = vunpack.c.l.b16 %v1805
      %v2362 = vunpack.c.h.b16 %v1805
      %v2363 = vunpack.c.l.b16 %v1806
      %v2364 = vunpack.c.h.b16 %v1806
      %v2365 = vunpack.c.l.b16 %v1807
      %v2366 = vunpack.c.h.b16 %v1807
      %v2367 = vunpack.c.l.b16 %v1808
      %v2368 = vunpack.c.h.b16 %v1808
      %v2369 = vunpack.c.l.b16 %v1809
      %v2370 = vunpack.c.h.b16 %v1809
      %v2371 = vunpack.c.l.b16 %v1810
      %v2372 = vunpack.c.h.b16 %v1810
      %v2373 = vunpack.c.l.b16 %v1811
      %v2374 = vunpack.c.h.b16 %v1811
      %v2375 = vunpack.c.l.b16 %v1812
      %v2376 = vunpack.c.h.b16 %v1812
      %v2377 = vunpack.c.l.b16 %v1813
      %v2378 = vunpack.c.h.b16 %v1813
      %v2379 = vunpack.c.l.b16 %v1814
      %v2380 = vunpack.c.h.b16 %v1814
      %v2381 = vunpack.c.l.b16 %v1815
      %v2382 = vunpack.c.h.b16 %v1815
      %v2383 = vunpack.c.l.b16 %v1816
      %v2384 = vunpack.c.h.b16 %v1816
      %v2385 = vunpack.c.l.b16 %v1817
      %v2386 = vunpack.c.h.b16 %v1817
      %v2387 = vunpack.c.l.b16 %v1818
      %v2388 = vunpack.c.h.b16 %v1818
      %v2389 = vunpack.c.l.b16 %v1819
      %v2390 = vunpack.c.h.b16 %v1819
      %v2391 = vunpack.c.l.b16 %v1820
      %v2392 = vunpack.c.h.b16 %v1820
      %v2393 = vunpack.c.l.b16 %v1821
      %v2394 = vunpack.c.h.b16 %v1821
      %v2395 = vunpack.c.l.b16 %v1822
      %v2396 = vunpack.c.h.b16 %v1822
      %v2397 = vunpack.c.l.b16 %v1823
      %v2398 = vunpack.c.h.b16 %v1823
      %v2399 = vunpack.c.l.b16 %v1824
      %v2400 = vunpack.c.h.b16 %v1824
      %v2401 = vunpack.c.l.b16 %v1825
      %v2402 = vunpack.c.h.b16 %v1825
      %v2403 = vunpack.c.l.b16 %v1826
      %v2404 = vunpack.c.h.b16 %v1826
      %v2405 = vunpack.c.l.b16 %v1827
      %v2406 = vunpack.c.h.b16 %v1827
      %v2407 = vunpack.c.l.b16 %v1828
      %v2408 = vunpack.c.h.b16 %v1828
      %v2409 = vunpack.c.l.b16 %v1829
      %v2410 = vunpack.c.h.b16 %v1829
      %v2411 = vunpack.c.l.b16 %v1830
      %v2412 = vunpack.c.h.b16 %v1830
      %v2413 = vunpack.c.l.b16 %v1831
      %v2414 = vunpack.c.h.b16 %v1831
      %v2415 = vunpack.c.l.b16 %v1832
      %v2416 = vunpack.c.h.b16 %v1832
      %v2417 = vunpack.c.l.b16 %v1833
      %v2418 = vunpack.c.h.b16 %v1833
      %v2419 = vunpack.c.l.b16 %v1834
      %v2420 = vunpack.c.h.b16 %v1834
      %v2421 = vunpack.c.l.b16 %v1835
      %v2422 = vunpack.c.h.b16 %v1835
      %v2423 = vunpack.c.l.b16 %v1836
      %v2424 = vunpack.c.h.b16 %v1836
      %v2425 = vunpack.c.l.b16 %v1837
      %v2426 = vunpack.c.h.b16 %v1837
      %v2427 = vunpack.c.l.b16 %v1838
      %v2428 = vunpack.c.h.b16 %v1838
      %v2429 = vunpack.c.l.b16 %v1839
      %v2430 = vunpack.c.h.b16 %v1839
      %v2431 = vunpack.c.l.b16 %v1840
      %v2432 = vunpack.c.h.b16 %v1840
      %v2433 = vunpack.c.l.b16 %v1841
      %v2434 = vunpack.c.h.b16 %v1841
      %v2435 = vunpack.c.l.b16 %v1842
      %v2436 = vunpack.c.h.b16 %v1842
      %v2437 = vunpack.c.l.b16 %v1843
      %v2438 = vunpack.c.h.b16 %v1843
      %v2439 = vunpack.c.l.b16 %v1844
      %v2440 = vunpack.c.h.b16 %v1844
      %v2441 = vunpack.c.l.b16 %v1845
      %v2442 = vunpack.c.h.b16 %v1845
      %v2443 = vunpack.c.l.b16 %v1846
      %v2444 = vunpack.c.h.b16 %v1846
      %v2445 = vunpack.c.l.b16 %v1847
      %v2446 = vunpack.c.h.b16 %v1847
      %v2447 = vunpack.c.l.b16 %v1848
      %v2448 = vunpack.c.h.b16 %v1848
      %v2449 = vunpack.c.l.b16 %v1849
      %v2450 = vunpack.c.h.b16 %v1849
      %v2451 = vunpack.c.l.b16 %v1850
      %v2452 = vunpack.c.h.b16 %v1850
      %v2453 = vunpack.c.l.b16 %v1851
      %v2454 = vunpack.c.h.b16 %v1851
      %v2455 = vunpack.c.l.b16 %v1852
      %v2456 = vunpack.c.h.b16 %v1852
      %v2457 = vunpack.c.l.b16 %v1853
      %v2458 = vunpack.c.h.b16 %v1853
      %v2459 = vunpack.c.l.b16 %v1854
      %v2460 = vunpack.c.h.b16 %v1854
      %v2461 = vunpack.c.l.b16 %v1855
      %v2462 = vunpack.c.h.b16 %v1855
      %v2463 = vunpack.c.l.b16 %v1856
      %v2464 = vunpack.c.h.b16 %v1856
      %v2465 = vunpack.c.l.b16 %v1857
      %v2466 = vunpack.c.h.b16 %v1857
      %v2467 = vunpack.c.l.b16 %v1858
      %v2468 = vunpack.c.h.b16 %v1858
      %v2469 = vunpack.c.l.b16 %v1859
      %v2470 = vunpack.c.h.b16 %v1859
      %v2471 = vunpack.c.l.b16 %v1860
      %v2472 = vunpack.c.h.b16 %v1860
      %v2473 = vunpack.c.l.b16 %v1861
      %v2474 = vunpack.c.h.b16 %v1861
      %v2475 = vunpack.c.l.b16 %v1862
      %v2476 = vunpack.c.h.b16 %v1862
      %v2477 = vunpack.c.l.b16 %v1863
      %v2478 = vunpack.c.h.b16 %v1863
      %v2479 = vunpack.c.l.b16 %v1864
      %v2480 = vunpack.c.h.b16 %v1864
      %v2481 = vunpack.c.l.b16 %v1865
      %v2482 = vunpack.c.h.b16 %v1865
      %v2483 = vunpack.c.l.b16 %v1866
      %v2484 = vunpack.c.h.b16 %v1866
      %v2485 = vunpack.c.l.b16 %v1867
      %v2486 = vunpack.c.h.b16 %v1867
      %v2487 = vunpack.c.l.b16 %v1868
      %v2488 = vunpack.c.h.b16 %v1868
      %v2489 = vunpack.c.l.b16 %v1869
      %v2490 = vunpack.c.h.b16 %v1869
      %v2491 = vunpack.c.l.b16 %v1870
      %v2492 = vunpack.c.h.b16 %v1870
      %v2493 = vunpack.c.l.b16 %v1871
      %v2494 = vunpack.c.h.b16 %v1871
      %v2495 = vunpack.c.l.b16 %v1872
      %v2496 = vunpack.c.h.b16 %v1872
      %v2497 = vunpack.c.l.b16 %v1873
      %v2498 = vunpack.c.h.b16 %v1873
      %v2499 = vunpack.c.l.b16 %v1874
      %v2500 = vunpack.c.h.b16 %v1874
      %v2501 = vunpack.c.l.b16 %v1875
      %v2502 = vunpack.c.h.b16 %v1875
      %v2503 = vunpack.c.l.b16 %v1876
      %v2504 = vunpack.c.h.b16 %v1876
      %v2505 = vunpack.c.l.b16 %v1877
      %v2506 = vunpack.c.h.b16 %v1877
      %v2507 = vunpack.c.l.b16 %v1878
      %v2508 = vunpack.c.h.b16 %v1878
      %v2509 = vunpack.c.l.b16 %v1879
      %v2510 = vunpack.c.h.b16 %v1879
      %v2511 = vunpack.c.l.b16 %v1880
      %v2512 = vunpack.c.h.b16 %v1880
      %v2513 = vunpack.c.l.b16 %v1881
      %v2514 = vunpack.c.h.b16 %v1881
      %v2515 = vunpack.c.l.b16 %v1882
      %v2516 = vunpack.c.h.b16 %v1882
      %v2517 = vunpack.c.l.b16 %v1883
      %v2518 = vunpack.c.h.b16 %v1883
      %v2519 = vunpack.c.l.b16 %v1884
      %v2520 = vunpack.c.h.b16 %v1884
      %v2521 = vunpack.c.l.b16 %v1885
      %v2522 = vunpack.c.h.b16 %v1885
      %v2523 = vunpack.c.l.b16 %v1886
      %v2524 = vunpack.c.h.b16 %v1886
      %v2525 = vunpack.c.l.b16 %v1887
      %v2526 = vunpack.c.h.b16 %v1887
      %v2527 = vunpack.c.l.b16 %v1888
      %v2528 = vunpack.c.h.b16 %v1888
      %v2529 = vunpack.c.l.b16 %v1889
      %v2530 = vunpack.c.h.b16 %v1889
      %v2531 = vunpack.c.l.b16 %v1890
      %v2532 = vunpack.c.h.b16 %v1890
      %v2533 = vunpack.c.l.b16 %v1891
      %v2534 = vunpack.c.h.b16 %v1891
      %v2535 = vunpack.c.l.b16 %v1892
      %v2536 = vunpack.c.h.b16 %v1892
      %v2537 = vunpack.c.l.b16 %v1893
      %v2538 = vunpack.c.h.b16 %v1893
      %v2539 = vunpack.c.l.b16 %v1894
      %v2540 = vunpack.c.h.b16 %v1894
      %v2541 = vunpack.c.l.b16 %v1895
      %v2542 = vunpack.c.h.b16 %v1895
      %v2543 = vunpack.c.l.b16 %v1896
      %v2544 = vunpack.c.h.b16 %v1896
      %v2545 = vunpack.c.l.b16 %v1897
      %v2546 = vunpack.c.h.b16 %v1897
      %v2547 = vunpack.c.l.b16 %v1898
      %v2548 = vunpack.c.h.b16 %v1898
      %v2549 = vunpack.c.l.b16 %v1899
      %v2550 = vunpack.c.h.b16 %v1899
      %v2551 = vunpack.c.l.b16 %v1900
      %v2552 = vunpack.c.h.b16 %v1900
      %v2553 = vunpack.c.l.b16 %v1901
      %v2554 = vunpack.c.h.b16 %v1901
      %v2555 = vunpack.c.l.b16 %v1902
      %v2556 = vunpack.c.h.b16 %v1902
      %v2557 = vunpack.c.l.b16 %v1903
      %v2558 = vunpack.c.h.b16 %v1903
      %v2559 = vunpack.c.l.b16 %v1904
      %v2560 = vunpack.c.h.b16 %v1904
      %v2561 = vunpack.c.l.b16 %v1905
      %v2562 = vunpack.c.h.b16 %v1905
      %v2563 = vunpack.c.l.b16 %v1906
      %v2564 = vunpack.c.h.b16 %v1906
      %v2565 = vunpack.c.l.b16 %v1907
      %v2566 = vunpack.c.h.b16 %v1907
      %v2567 = vunpack.c.l.b16 %v1908
      %v2568 = vunpack.c.h.b16 %v1908
      %v2569 = vunpack.c.l.b16 %v1909
      %v2570 = vunpack.c.h.b16 %v1909
      %v2571 = vunpack.c.l.b16 %v1910
      %v2572 = vunpack.c.h.b16 %v1910
      %v2573 = vunpack.c.l.b16 %v1911
      %v2574 = vunpack.c.h.b16 %v1911
      %v2575 = vunpack.c.l.b16 %v1912
      %v2576 = vunpack.c.h.b16 %v1912
      %v2577 = vunpack.c.l.b16 %v1913
      %v2578 = vunpack.c.h.b16 %v1913
      %v2579 = vunpack.c.l.b16 %v1914
      %v2580 = vunpack.c.h.b16 %v1914
      %v2581 = vunpack.c.l.b16 %v1915
      %v2582 = vunpack.c.h.b16 %v1915
      %v2583 = vunpack.c.l.b16 %v1916
      %v2584 = vunpack.c.h.b16 %v1916
      %v2585 = vunpack.c.l.b16 %v1917
      %v2586 = vunpack.c.h.b16 %v1917
      %v2587 = vunpack.c.l.b16 %v1918
      %v2588 = vunpack.c.h.b16 %v1918
      %v2589 = vunpack.c.l.b16 %v1919
      %v2590 = vunpack.c.h.b16 %v1919
      %v2591 = vunpack.c.l.b16 %v1920
      %v2592 = vunpack.c.h.b16 %v1920
      %v2593 = vunpack.c.l.b16 %v1921
      %v2594 = vunpack.c.h.b16 %v1921
      %v2595 = vunpack.c.l.b16 %v1922
      %v2596 = vunpack.c.h.b16 %v1922
      %v2597 = vunpack.c.l.b16 %v1923
      %v2598 = vunpack.c.h.b16 %v1923
      %v2599 = vunpack.c.l.b16 %v1924
      %v2600 = vunpack.c.h.b16 %v1924
      %v2601 = vunpack.c.l.b16 %v1925
      %v2602 = vunpack.c.h.b16 %v1925
      %v2603 = vunpack.c.l.b16 %v1926
      %v2604 = vunpack.c.h.b16 %v1926
      %v2605 = vunpack.c.l.b16 %v1927
      %v2606 = vunpack.c.h.b16 %v1927
      %v2607 = vunpack.c.l.b16 %v1928
      %v2608 = vunpack.c.h.b16 %v1928
      %v2609 = vunpack.c.l.b16 %v1929
      %v2610 = vunpack.c.h.b16 %v1929
      %v2611 = vunpack.c.l.b16 %v1930
      %v2612 = vunpack.c.h.b16 %v1930
      %v2613 = vunpack.c.l.b16 %v1931
      %v2614 = vunpack.c.h.b16 %v1931
      %v2615 = vunpack.c.l.b16 %v1932
      %v2616 = vunpack.c.h.b16 %v1932
      %v2617 = vunpack.c.l.b16 %v1933
      %v2618 = vunpack.c.h.b16 %v1933
      %v2619 = vunpack.c.l.b16 %v1934
      %v2620 = vunpack.c.h.b16 %v1934
      %v2621 = vunpack.c.l.b16 %v1935
      %v2622 = vunpack.c.h.b16 %v1935
      %v2623 = vunpack.c.l.b16 %v1936
      %v2624 = vunpack.c.h.b16 %v1936
      %v2625 = vunpack.c.l.b16 %v1937
      %v2626 = vunpack.c.h.b16 %v1937
      %v2627 = vunpack.c.l.b16 %v1938
      %v2628 = vunpack.c.h.b16 %v1938
      %v2629 = vunpack.c.l.b16 %v1939
      %v2630 = vunpack.c.h.b16 %v1939
      %v2631 = vunpack.c.l.b16 %v1940
      %v2632 = vunpack.c.h.b16 %v1940
      %v2633 = vunpack.c.l.b16 %v1941
      %v2634 = vunpack.c.h.b16 %v1941
      %v2635 = vunpack.c.l.b16 %v1942
      %v2636 = vunpack.c.h.b16 %v1942
      %v2637 = vunpack.c.l.b16 %v1943
      %v2638 = vunpack.c.h.b16 %v1943
      %v2639 = vunpack.c.l.b16 %v1944
      %v2640 = vunpack.c.h.b16 %v1944
      %v2641 = vunpack.c.l.b16 %v1945
      %v2642 = vunpack.c.h.b16 %v1945
      %v2643 = vunpack.c.l.b16 %v1946
      %v2644 = vunpack.c.h.b16 %v1946
      %v2645 = vunpack.c.l.b16 %v1947
      %v2646 = vunpack.c.h.b16 %v1947
      %v2647 = vunpack.c.l.b16 %v1948
      %v2648 = vunpack.c.h.b16 %v1948
      %v2649 = vunpack.c.l.b16 %v1949
      %v2650 = vunpack.c.h.b16 %v1949
      %v2651 = vunpack.c.l.b16 %v1950
      %v2652 = vunpack.c.h.b16 %v1950
      %v2653 = vunpack.c.l.b16 %v1951
      %v2654 = vunpack.c.h.b16 %v1951
      %v2655 = vunpack.c.l.b16 %v1952
      %v2656 = vunpack.c.h.b16 %v1952
      %v2657 = vunpack.c.l.b16 %v1953
      %v2658 = vunpack.c.h.b16 %v1953
      %v2659 = vunpack.c.l.b16 %v1954
      %v2660 = vunpack.c.h.b16 %v1954
      %v2661 = vunpack.c.l.b16 %v1955
      %v2662 = vunpack.c.h.b16 %v1955
      %v2663 = vunpack.c.l.b16 %v1956
      %v2664 = vunpack.c.h.b16 %v1956
      %v2665 = vunpack.c.l.b16 %v1957
      %v2666 = vunpack.c.h.b16 %v1957
      %v2667 = vunpack.c.l.b16 %v1958
      %v2668 = vunpack.c.h.b16 %v1958
      %v2669 = vunpack.c.l.b16 %v1959
      %v2670 = vunpack.c.h.b16 %v1959
      %v2671 = vunpack.c.l.b16 %v1960
      %v2672 = vunpack.c.h.b16 %v1960
      %v2673 = vunpack.c.l.b16 %v1961
      %v2674 = vunpack.c.h.b16 %v1961
      %v2675 = vunpack.c.l.b16 %v1962
      %v2676 = vunpack.c.h.b16 %v1962
      %v2677 = vunpack.c.l.b16 %v1963
      %v2678 = vunpack.c.h.b16 %v1963
      %v2679 = vunpack.c.l.b16 %v1964
      %v2680 = vunpack.c.h.b16 %v1964
      %v2681 = vunpack.c.l.b16 %v1965
      %v2682 = vunpack.c.h.b16 %v1965
      %v2683 = vunpack.c.l.b16 %v1966
      %v2684 = vunpack.c.h.b16 %v1966
      %v2685 = vunpack.c.l.b16 %v1967
      %v2686 = vunpack.c.h.b16 %v1967
      %v2687 = vunpack.c.l.b16 %v1968
      %v2688 = vunpack.c.h.b16 %v1968
      %v2689 = vunpack.c.l.b16 %v1969
      %v2690 = vunpack.c.h.b16 %v1969
      %v2691 = vunpack.c.l.b16 %v1970
      %v2692 = vunpack.c.h.b16 %v1970
      %v2693 = vunpack.c.l.b16 %v1971
      %v2694 = vunpack.c.h.b16 %v1971
      %v2695 = vunpack.c.l.b16 %v1972
      %v2696 = vunpack.c.h.b16 %v1972
      %v2697 = vunpack.c.l.b16 %v1973
      %v2698 = vunpack.c.h.b16 %v1973
      %v2699 = vunpack.c.l.b16 %v1974
      %v2700 = vunpack.c.h.b16 %v1974
      %v2701 = vunpack.c.l.b16 %v1975
      %v2702 = vunpack.c.h.b16 %v1975
      %v2703 = vunpack.c.l.b16 %v1976
      %v2704 = vunpack.c.h.b16 %v1976
      %v2705 = vunpack.c.l.b16 %v1977
      %v2706 = vunpack.c.h.b16 %v1977
      %v2707 = vunpack.c.l.b16 %v1978
      %v2708 = vunpack.c.h.b16 %v1978
      %v2709 = vunpack.c.l.b16 %v1979
      %v2710 = vunpack.c.h.b16 %v1979
      %v2711 = vunpack.c.l.b16 %v1980
      %v2712 = vunpack.c.h.b16 %v1980
      %v2713 = vunpack.c.l.b16 %v1981
      %v2714 = vunpack.c.h.b16 %v1981
      %v2715 = vunpack.c.l.b16 %v1982
      %v2716 = vunpack.c.h.b16 %v1982
      %v2717 = vunpack.c.l.b16 %v1983
      %v2718 = vunpack.c.h.b16 %v1983
      %v2719 = vunpack.c.l.b16 %v1984
      %v2720 = vunpack.c.h.b16 %v1984
      %v2721 = vunpack.c.l.b16 %v1985
      %v2722 = vunpack.c.h.b16 %v1985
      %v2723 = vunpack.c.l.b16 %v1986
      %v2724 = vunpack.c.h.b16 %v1986
      %v2725 = vunpack.c.l.b16 %v1987
      %v2726 = vunpack.c.h.b16 %v1987
      %v2727 = vunpack.c.l.b16 %v1988
      %v2728 = vunpack.c.h.b16 %v1988
      %v2729 = vunpack.c.l.b16 %v1989
      %v2730 = vunpack.c.h.b16 %v1989
      %v2731 = vunpack.c.l.b16 %v1990
      %v2732 = vunpack.c.h.b16 %v1990
      %v2733 = vunpack.c.l.b16 %v1991
      %v2734 = vunpack.c.h.b16 %v1991
      %v2735 = vunpack.c.l.b16 %v1992
      %v2736 = vunpack.c.h.b16 %v1992
      %v2737 = vunpack.c.l.b16 %v1993
      %v2738 = vunpack.c.h.b16 %v1993
      %v2739 = vunpack.c.l.b16 %v1994
      %v2740 = vunpack.c.h.b16 %v1994
      %v2741 = vunpack.c.l.b16 %v1995
      %v2742 = vunpack.c.h.b16 %v1995
      %v2743 = vunpack.c.l.b16 %v1996
      %v2744 = vunpack.c.h.b16 %v1996
      %v2745 = vunpack.c.l.b16 %v1997
      %v2746 = vunpack.c.h.b16 %v1997
      %v2747 = vunpack.c.l.b16 %v1998
      %v2748 = vunpack.c.h.b16 %v1998
      %v2749 = vunpack.c.l.b16 %v1999
      %v2750 = vunpack.c.h.b16 %v1999
      %v2751 = vunpack.c.l.b16 %v2000
      %v2752 = vunpack.c.h.b16 %v2000
      %v2753 = vunpack.c.l.b16 %v2001
      %v2754 = vunpack.c.h.b16 %v2001
      %v2755 = vunpack.c.l.b16 %v2002
      %v2756 = vunpack.c.h.b16 %v2002
      %v2757 = vunpack.c.l.b16 %v2003
      %v2758 = vunpack.c.h.b16 %v2003
      %v2759 = vunpack.c.l.b16 %v2004
      %v2760 = vunpack.c.h.b16 %v2004
      %v2761 = vunpack.c.l.b16 %v2005
      %v2762 = vunpack.c.h.b16 %v2005
      %v2763 = vunpack.c.l.b16 %v2006
      %v2764 = vunpack.c.h.b16 %v2006
      %v2765 = vunpack.c.l.b16 %v2007
      %v2766 = vunpack.c.h.b16 %v2007
      %v2767 = vunpack.c.l.b16 %v2008
      %v2768 = vunpack.c.h.b16 %v2008
      %v2769 = vunpack.c.l.b16 %v2009
      %v2770 = vunpack.c.h.b16 %v2009
      %v2771 = vunpack.c.l.b16 %v2010
      %v2772 = vunpack.c.h.b16 %v2010
      %v2773 = vunpack.c.l.b16 %v2011
      %v2774 = vunpack.c.h.b16 %v2011
      %v2775 = vunpack.c.l.b16 %v2012
      %v2776 = vunpack.c.h.b16 %v2012
      %v2777 = vunpack.c.l.b16 %v2013
      %v2778 = vunpack.c.h.b16 %v2013
      %v2779 = vunpack.c.l.b16 %v2014
      %v2780 = vunpack.c.h.b16 %v2014
      %v2781 = vunpack.c.l.b16 %v2015
      %v2782 = vunpack.c.h.b16 %v2015
      %v2783 = vunpack.c.l.b16 %v2016
      %v2784 = vunpack.c.h.b16 %v2016
      %v2785 = vunpack.c.l.b16 %v2017
      %v2786 = vunpack.c.h.b16 %v2017
      %v2787 = vunpack.c.l.b16 %v2018
      %v2788 = vunpack.c.h.b16 %v2018
      %v2789 = vunpack.c.l.b16 %v2019
      %v2790 = vunpack.c.h.b16 %v2019
      %v2791 = vunpack.c.l.b16 %v2020
      %v2792 = vunpack.c.h.b16 %v2020
      %v2793 = vunpack.c.l.b16 %v2021
      %v2794 = vunpack.c.h.b16 %v2021
      %v2795 = vunpack.c.l.b16 %v2022
      %v2796 = vunpack.c.h.b16 %v2022
      %v2797 = vunpack.c.l.b16 %v2023
      %v2798 = vunpack.c.h.b16 %v2023
      %v2799 = vunpack.c.l.b16 %v2024
      %v2800 = vunpack.c.h.b16 %v2024
      %v2801 = vunpack.c.l.b16 %v2025
      %v2802 = vunpack.c.h.b16 %v2025
      %v2803 = vunpack.c.l.b16 %v2026
      %v2804 = vunpack.c.h.b16 %v2026
      %v2805 = vunpack.c.l.b16 %v2027
      %v2806 = vunpack.c.h.b16 %v2027
      %v2807 = vunpack.c.l.b16 %v2028
      %v2808 = vunpack.c.h.b16 %v2028
      %v2809 = vunpack.c.l.b16 %v2029
      %v2810 = vunpack.c.h.b16 %v2029
      %v2811 = vunpack.c.l.b16 %v2030
      %v2812 = vunpack.c.h.b16 %v2030
      %v2813 = vunpack.c.l.b16 %v2031
      %v2814 = vunpack.c.h.b16 %v2031
      %v2815 = vunpack.c.l.b16 %v2032
      %v2816 = vunpack.c.h.b16 %v2032
      %v2817 = vunpack.c.l.b16 %v2033
      %v2818 = vunpack.c.h.b16 %v2033
      %v2819 = vunpack.c.l.b16 %v2034
      %v2820 = vunpack.c.h.b16 %v2034
      %v2821 = vunpack.c.l.b16 %v2035
      %v2822 = vunpack.c.h.b16 %v2035
      %v2823 = vunpack.c.l.b16 %v2036
      %v2824 = vunpack.c.h.b16 %v2036
      %v2825 = vunpack.c.l.b16 %v2037
      %v2826 = vunpack.c.h.b16 %v2037
      %v2827 = vunpack.c.l.b16 %v2038
      %v2828 = vunpack.c.h.b16 %v2038
      %v2829 = vunpack.c.l.b16 %v2039
      %v2830 = vunpack.c.h.b16 %v2039
      %v2831 = vunpack.c.l.b16 %v2040
      %v2832 = vunpack.c.h.b16 %v2040
      %v2833 = vunpack.c.l.b16 %v2041
      %v2834 = vunpack.c.h.b16 %v2041
      %v2835 = vunpack.c.l.b16 %v2042
      %v2836 = vunpack.c.h.b16 %v2042
      %v2837 = vunpack.c.l.b16 %v2043
      %v2838 = vunpack.c.h.b16 %v2043
      %v2839 = vunpack.c.l.b16 %v2044
      %v2840 = vunpack.c.h.b16 %v2044
      %v2841 = vunpack.c.l.b16 %v2045
      %v2842 = vunpack.c.h.b16 %v2045
      %v2843 = vunpack.c.l.b16 %v2046
      %v2844 = vunpack.c.h.b16 %v2046
      %v2845 = vunpack.c.l.b16 %v2047
      %v2846 = vunpack.c.h.b16 %v2047
      %v2847 = vunpack.c.l.b16 %v2048
      %v2848 = vunpack.c.h.b16 %v2048
      %v2849 = vunpack.c.l.b16 %v2049
      %v2850 = vunpack.c.h.b16 %v2049
      %v2851 = vunpack.c.l.b16 %v2050
      %v2852 = vunpack.c.h.b16 %v2050
      %v2853 = vunpack.c.l.b16 %v2051
      %v2854 = vunpack.c.h.b16 %v2051
      %v2855 = vunpack.c.l.b16 %v2052
      %v2856 = vunpack.c.h.b16 %v2052
      %v2857 = vunpack.c.l.b16 %v2053
      %v2858 = vunpack.c.h.b16 %v2053
      %v2859 = vunpack.c.l.b16 %v2054
      %v2860 = vunpack.c.h.b16 %v2054
      %v2861 = vunpack.c.l.b16 %v2055
      %v2862 = vunpack.c.h.b16 %v2055
      %v2863 = vunpack.c.l.b16 %v2056
      %v2864 = vunpack.c.h.b16 %v2056
      %v2865 = vunpack.c.l.b16 %v2057
      %v2866 = vunpack.c.h.b16 %v2057
      %v2867 = vunpack.c.l.b16 %v2058
      %v2868 = vunpack.c.h.b16 %v2058
      %v2869 = vunpack.c.l.b16 %v2059
      %v2870 = vunpack.c.h.b16 %v2059
      %v2871 = vunpack.c.l.b16 %v2060
      %v2872 = vunpack.c.h.b16 %v2060
      %v2873 = vunpack.c.l.b16 %v2061
      %v2874 = vunpack.c.h.b16 %v2061
      %v2875 = vunpack.c.l.b16 %v2062
      %v2876 = vunpack.c.h.b16 %v2062
      %v2877 = vunpack.c.l.b16 %v2063
      %v2878 = vunpack.c.h.b16 %v2063
      %v2879 = vunpack.c.l.b16 %v2064
      %v2880 = vunpack.c.h.b16 %v2064
      %v2881 = vpack.c.b16 %v2341, %v2337
      %v2882 = vpack.c.b16 %v2342, %v2338
      %v2883 = vpack.c.b16 %v2343, %v2339
      %v2884 = vpack.c.b16 %v2344, %v2340
      %v2885 = vpack.c.b16 %v2349, %v2345
      %v2886 = vpack.c.b16 %v2350, %v2346
      %v2887 = vpack.c.b16 %v2351, %v2347
      %v2888 = vpack.c.b16 %v2352, %v2348
      %v2889 = vpack.c.b16 %v2357, %v2353
      %v2890 = vpack.c.b16 %v2358, %v2354
      %v2891 = vpack.c.b16 %v2359, %v2355
      %v2892 = vpack.c.b16 %v2360, %v2356
      %v2893 = vpack.c.b16 %v2365, %v2361
      %v2894 = vpack.c.b16 %v2366, %v2362
      %v2895 = vpack.c.b16 %v2367, %v2363
      %v2896 = vpack.c.b16 %v2368, %v2364
      %v2897 = vpack.c.b16 %v2373, %v2369
      %v2898 = vpack.c.b16 %v2374, %v2370
      %v2899 = vpack.c.b16 %v2375, %v2371
      %v2900 = vpack.c.b16 %v2376, %v2372
      %v2901 = vpack.c.b16 %v2381, %v2377
      %v2902 = vpack.c.b16 %v2382, %v2378
      %v2903 = vpack.c.b16 %v2383, %v2379
      %v2904 = vpack.c.b16 %v2384, %v2380
      %v2905 = vpack.c.b16 %v2389, %v2385
      %v2906 = vpack.c.b16 %v2390, %v2386
      %v2907 = vpack.c.b16 %v2391, %v2387
      %v2908 = vpack.c.b16 %v2392, %v2388
      %v2909 = vpack.c.b16 %v2397, %v2393
      %v2910 = vpack.c.b16 %v2398, %v2394
      %v2911 = vpack.c.b16 %v2399, %v2395
      %v2912 = vpack.c.b16 %v2400, %v2396
      %v2913 = vpack.c.b16 %v2405, %v2401
      %v2914 = vpack.c.b16 %v2406, %v2402
      %v2915 = vpack.c.b16 %v2407, %v2403
      %v2916 = vpack.c.b16 %v2408, %v2404
      %v2917 = vpack.c.b16 %v2413, %v2409
      %v2918 = vpack.c.b16 %v2414, %v2410
      %v2919 = vpack.c.b16 %v2415, %v2411
      %v2920 = vpack.c.b16 %v2416, %v2412
      %v2921 = vpack.c.b16 %v2421, %v2417
      %v2922 = vpack.c.b16 %v2422, %v2418
      %v2923 = vpack.c.b16 %v2423, %v2419
      %v2924 = vpack.c.b16 %v2424, %v2420
      %v2925 = vpack.c.b16 %v2429, %v2425
      %v2926 = vpack.c.b16 %v2430, %v2426
      %v2927 = vpack.c.b16 %v2431, %v2427
      %v2928 = vpack.c.b16 %v2432, %v2428
      %v2929 = vpack.c.b16 %v2437, %v2433
      %v2930 = vpack.c.b16 %v2438, %v2434
      %v2931 = vpack.c.b16 %v2439, %v2435
      %v2932 = vpack.c.b16 %v2440, %v2436
      %v2933 = vpack.c.b16 %v2445, %v2441
      %v2934 = vpack.c.b16 %v2446, %v2442
      %v2935 = vpack.c.b16 %v2447, %v2443
      %v2936 = vpack.c.b16 %v2448, %v2444
      %v2937 = vpack.c.b16 %v2453, %v2449
      %v2938 = vpack.c.b16 %v2454, %v2450
      %v2939 = vpack.c.b16 %v2455, %v2451
      %v2940 = vpack.c.b16 %v2456, %v2452
      %v2941 = vpack.c.b16 %v2461, %v2457
      %v2942 = vpack.c.b16 %v2462, %v2458
      %v2943 = vpack.c.b16 %v2463, %v2459
      %v2944 = vpack.c.b16 %v2464, %v2460
      %v2945 = vpack.c.b16 %v2469, %v2465
      %v2946 = vpack.c.b16 %v2470, %v2466
      %v2947 = vpack.c.b16 %v2471, %v2467
      %v2948 = vpack.c.b16 %v2472, %v2468
      %v2949 = vpack.c.b16 %v2477, %v2473
      %v2950 = vpack.c.b16 %v2478, %v2474
      %v2951 = vpack.c.b16 %v2479, %v2475
      %v2952 = vpack.c.b16 %v2480, %v2476
      %v2953 = vpack.c.b16 %v2485, %v2481
      %v2954 = vpack.c.b16 %v2486, %v2482
      %v2955 = vpack.c.b16 %v2487, %v2483
      %v2956 = vpack.c.b16 %v2488, %v2484
      %v2957 = vpack.c.b16 %v2493, %v2489
      %v2958 = vpack.c.b16 %v2494, %v2490
      %v2959 = vpack.c.b16 %v2495, %v2491
      %v2960 = vpack.c.b16 %v2496, %v2492
      %v2961 = vpack.c.b16 %v2501, %v2497
      %v2962 = vpack.c.b16 %v2502, %v2498
      %v2963 = vpack.c.b16 %v2503, %v2499
      %v2964 = vpack.c.b16 %v2504, %v2500
      %v2965 = vpack.c.b16 %v2509, %v2505
      %v2966 = vpack.c.b16 %v2510, %v2506
      %v2967 = vpack.c.b16 %v2511, %v2507
      %v2968 = vpack.c.b16 %v2512, %v2508
      %v2969 = vpack.c.b16 %v2517, %v2513
      %v2970 = vpack.c.b16 %v2518, %v2514
      %v2971 = vpack.c.b16 %v2519, %v2515
      %v2972 = vpack.c.b16 %v2520, %v2516
      %v2973 = vpack.c.b16 %v2525, %v2521
      %v2974 = vpack.c.b16 %v2526, %v2522
      %v2975 = vpack.c.b16 %v2527, %v2523
      %v2976 = vpack.c.b16 %v2528, %v2524
      %v2977 = vpack.c.b16 %v2533, %v2529
      %v2978 = vpack.c.b16 %v2534, %v2530
      %v2979 = vpack.c.b16 %v2535, %v2531
      %v2980 = vpack.c.b16 %v2536, %v2532
      %v2981 = vpack.c.b16 %v2541, %v2537
      %v2982 = vpack.c.b16 %v2542, %v2538
      %v2983 = vpack.c.b16 %v2543, %v2539
      %v2984 = vpack.c.b16 %v2544, %v2540
      %v2985 = vpack.c.b16 %v2549, %v2545
      %v2986 = vpack.c.b16 %v2550, %v2546
      %v2987 = vpack.c.b16 %v2551, %v2547
      %v2988 = vpack.c.b16 %v2552, %v2548
      %v2989 = vpack.c.b16 %v2557, %v2553
      %v2990 = vpack.c.b16 %v2558, %v2554
      %v2991 = vpack.c.b16 %v2559, %v2555
      %v2992 = vpack.c.b16 %v2560, %v2556
      %v2993 = vpack.c.b16 %v2565, %v2561
      %v2994 = vpack.c.b16 %v2566, %v2562
      %v2995 = vpack.c.b16 %v2567, %v2563
      %v2996 = vpack.c.b16 %v2568, %v2564
      %v2997 = vpack.c.b16 %v2573, %v2569
      %v2998 = vpack.c.b16 %v2574, %v2570
      %v2999 = vpack.c.b16 %v2575, %v2571
      %v3000 = vpack.c.b16 %v2576, %v2572
      %v3001 = vpack.c.b16 %v2581, %v2577
      %v3002 = vpack.c.b16 %v2582, %v2578
      %v3003 = vpack.c.b16 %v2583, %v2579
      %v3004 = vpack.c.b16 %v2584, %v2580
      %v3005 = vpack.c.b16 %v2589, %v2585
      %v3006 = vpack.c.b16 %v2590, %v2586
      %v3007 = vpack.c.b16 %v2591, %v2587
      %v3008 = vpack.c.b16 %v2592, %v2588
      %v3009 = vpack.c.b16 %v2597, %v2593
      %v3010 = vpack.c.b16 %v2598, %v2594
      %v3011 = vpack.c.b16 %v2599, %v2595
      %v3012 = vpack.c.b16 %v2600, %v2596
      %v3013 = vpack.c.b16 %v2605, %v2601
      %v3014 = vpack.c.b16 %v2606, %v2602
      %v3015 = vpack.c.b16 %v2607, %v2603
      %v3016 = vpack.c.b16 %v2608, %v2604
      %v3017 = vpack.c.b16 %v2613, %v2609
      %v3018 = vpack.c.b16 %v2614, %v2610
      %v3019 = vpack.c.b16 %v2615, %v2611
      %v3020 = vpack.c.b16 %v2616, %v2612
      %v3021 = vpack.c.b16 %v2621, %v2617
      %v3022 = vpack.c.b16 %v2622, %v2618
      %v3023 = vpack.c.b16 %v2623, %v2619
      %v3024 = vpack.c.b16 %v2624, %v2620
      %v3025 = vpack.c.b16 %v2629, %v2625
      %v3026 = vpack.c.b16 %v2630, %v2626
      %v3027 = vpack.c.b16 %v2631, %v2627
      %v3028 = vpack.c.b16 %v2632, %v2628
      %v3029 = vpack.c.b16 %v2637, %v2633
      %v3030 = vpack.c.b16 %v2638, %v2634
      %v3031 = vpack.c.b16 %v2639, %v2635
      %v3032 = vpack.c.b16 %v2640, %v2636
      %v3033 = vpack.c.b16 %v2645, %v2641
      %v3034 = vpack.c.b16 %v2646, %v2642
      %v3035 = vpack.c.b16 %v2647, %v2643
      %v3036 = vpack.c.b16 %v2648, %v2644
      %v3037 = vpack.c.b16 %v2653, %v2649
      %v3038 = vpack.c.b16 %v2654, %v2650
      %v3039 = vpack.c.b16 %v2655, %v2651
      %v3040 = vpack.c.b16 %v2656, %v2652
      %v3041 = vpack.c.b16 %v2661, %v2657
      %v3042 = vpack.c.b16 %v2662, %v2658
      %v3043 = vpack.c.b16 %v2663, %v2659
      %v3044 = vpack.c.b16 %v2664, %v2660
      %v3045 = vpack.c.b16 %v2669, %v2665
      %v3046 = vpack.c.b16 %v2670, %v2666
      %v3047 = vpack.c.b16 %v2671, %v2667
      %v3048 = vpack.c.b16 %v2672, %v2668
      %v3049 = vpack.c.b16 %v2677, %v2673
      %v3050 = vpack.c.b16 %v2678, %v2674
      %v3051 = vpack.c.b16 %v2679, %v2675
      %v3052 = vpack.c.b16 %v2680, %v2676
      %v3053 = vpack.c.b16 %v2685, %v2681
      %v3054 = vpack.c.b16 %v2686, %v2682
      %v3055 = vpack.c.b16 %v2687, %v2683
      %v3056 = vpack.c.b16 %v2688, %v2684
      %v3057 = vpack.c.b16 %v2693, %v2689
      %v3058 = vpack.c.b16 %v2694, %v2690
      %v3059 = vpack.c.b16 %v2695, %v2691
      %v3060 = vpack.c.b16 %v2696, %v2692
      %v3061 = vpack.c.b16 %v2701, %v2697
      %v3062 = vpack.c.b16 %v2702, %v2698
      %v3063 = vpack.c.b16 %v2703, %v2699
      %v3064 = vpack.c.b16 %v2704, %v2700
      %v3065 = vpack.c.b16 %v2709, %v2705
      %v3066 = vpack.c.b16 %v2710, %v2706
      %v3067 = vpack.c.b16 %v2711, %v2707
      %v3068 = vpack.c.b16 %v2712, %v2708
      %v3069 = vpack.c.b16 %v2717, %v2713
      %v3070 = vpack.c.b16 %v2718, %v2714
      %v3071 = vpack.c.b16 %v2719, %v2715
      %v3072 = vpack.c.b16 %v2720, %v2716
      %v3073 = vpack.c.b16 %v2725, %v2721
      %v3074 = vpack.c.b16 %v2726, %v2722
      %v3075 = vpack.c.b16 %v2727, %v2723
      %v3076 = vpack.c.b16 %v2728, %v2724
      %v3077 = vpack.c.b16 %v2733, %v2729
      %v3078 = vpack.c.b16 %v2734, %v2730
      %v3079 = vpack.c.b16 %v2735, %v2731
      %v3080 = vpack.c.b16 %v2736, %v2732
      %v3081 = vpack.c.b16 %v2741, %v2737
      %v3082 = vpack.c.b16 %v2742, %v2738
      %v3083 = vpack.c.b16 %v2743, %v2739
      %v3084 = vpack.c.b16 %v2744, %v2740
      %v3085 = vpack.c.b16 %v2749, %v2745
      %v3086 = vpack.c.b16 %v2750, %v2746
      %v3087 = vpack.c.b16 %v2751, %v2747
      %v3088 = vpack.c.b16 %v2752, %v2748
      %v3089 = vpack.c.b16 %v2757, %v2753
      %v3090 = vpack.c.b16 %v2758, %v2754
      %v3091 = vpack.c.b16 %v2759, %v2755
      %v3092 = vpack.c.b16 %v2760, %v2756
      %v3093 = vpack.c.b16 %v2765, %v2761
      %v3094 = vpack.c.b16 %v2766, %v2762
      %v3095 = vpack.c.b16 %v2767, %v2763
      %v3096 = vpack.c.b16 %v2768, %v2764
      %v3097 = vpack.c.b16 %v2773, %v2769
      %v3098 = vpack.c.b16 %v2774, %v2770
      %v3099 = vpack.c.b16 %v2775, %v2771
      %v3100 = vpack.c.b16 %v2776, %v2772
      %v3101 = vpack.c.b16 %v2781, %v2777
      %v3102 = vpack.c.b16 %v2782, %v2778
      %v3103 = vpack.c.b16 %v2783, %v2779
      %v3104 = vpack.c.b16 %v2784, %v2780
      %v3105 = vpack.c.b16 %v2789, %v2785
      %v3106 = vpack.c.b16 %v2790, %v2786
      %v3107 = vpack.c.b16 %v2791, %v2787
      %v3108 = vpack.c.b16 %v2792, %v2788
      %v3109 = vpack.c.b16 %v2797, %v2793
      %v3110 = vpack.c.b16 %v2798, %v2794
      %v3111 = vpack.c.b16 %v2799, %v2795
      %v3112 = vpack.c.b16 %v2800, %v2796
      %v3113 = vpack.c.b16 %v2805, %v2801
      %v3114 = vpack.c.b16 %v2806, %v2802
      %v3115 = vpack.c.b16 %v2807, %v2803
      %v3116 = vpack.c.b16 %v2808, %v2804
      %v3117 = vpack.c.b16 %v2813, %v2809
      %v3118 = vpack.c.b16 %v2814, %v2810
      %v3119 = vpack.c.b16 %v2815, %v2811
      %v3120 = vpack.c.b16 %v2816, %v2812
      %v3121 = vpack.c.b16 %v2821, %v2817
      %v3122 = vpack.c.b16 %v2822, %v2818
      %v3123 = vpack.c.b16 %v2823, %v2819
      %v3124 = vpack.c.b16 %v2824, %v2820
      %v3125 = vpack.c.b16 %v2829, %v2825
      %v3126 = vpack.c.b16 %v2830, %v2826
      %v3127 = vpack.c.b16 %v2831, %v2827
      %v3128 = vpack.c.b16 %v2832, %v2828
      %v3129 = vpack.c.b16 %v2837, %v2833
      %v3130 = vpack.c.b16 %v2838, %v2834
      %v3131 = vpack.c.b16 %v2839, %v2835
      %v3132 = vpack.c.b16 %v2840, %v2836
      %v3133 = vpack.c.b16 %v2845, %v2841
      %v3134 = vpack.c.b16 %v2846, %v2842
      %v3135 = vpack.c.b16 %v2847, %v2843
      %v3136 = vpack.c.b16 %v2848, %v2844
      %v3137 = vpack.c.b16 %v2853, %v2849
      %v3138 = vpack.c.b16 %v2854, %v2850
      %v3139 = vpack.c.b16 %v2855, %v2851
      %v3140 = vpack.c.b16 %v2856, %v2852
      %v3141 = vpack.c.b16 %v2861, %v2857
      %v3142 = vpack.c.b16 %v2862, %v2858
      %v3143 = vpack.c.b16 %v2863, %v2859
      %v3144 = vpack.c.b16 %v2864, %v2860
      %v3145 = vpack.c.b16 %v2869, %v2865
      %v3146 = vpack.c.b16 %v2870, %v2866
      %v3147 = vpack.c.b16 %v2871, %v2867
      %v3148 = vpack.c.b16 %v2872, %v2868
      %v3149 = vpack.c.b16 %v2877, %v2873
      %v3150 = vpack.c.b16 %v2878, %v2874
      %v3151 = vpack.c.b16 %v2879, %v2875
      %v3152 = vpack.c.b16 %v2880, %v2876
      %v3426 = vsel %vm1633, %v1792, 0
      %3428 = vmatprep.subr.bf16.mxu0 %v2910
      %3429 = vmatpush1.bf16.msra.mxu0 %v2909
      %3430 = vmatprep.subr.bf16.mxu0 %v2906
      %3431 = vmatpush1.bf16.msra.mxu0 %v2905
      %3432 = vmatprep.subr.bf16.mxu0 %v2902
      %3433 = vmatpush1.bf16.msra.mxu0 %v2901
      %3434 = vmatprep.subr.bf16.mxu0 %v2898
      %3435 = vmatpush1.bf16.msra.mxu0 %v2897
      %3436 = vmatprep.subr.bf16.mxu0 %v2894
      %3437 = vmatpush1.bf16.msra.mxu0 %v2893
      %3438 = vmatprep.subr.bf16.mxu0 %v2890
      %3439 = vmatpush1.bf16.msra.mxu0 %v2889
      %3440 = vmatprep.subr.bf16.mxu0 %v2886
      %3441 = vmatpush1.bf16.msra.mxu0 %v2885
      %3442 = vmatprep.subr.bf16.mxu0 %v2882
      %3443 = vmatpush1.bf16.msra.mxu0 %v2881
      %3444 = vmatprep.subr.bf16.mxu0 %v2942
      %3445 = vmatpush2.bf16.msra.mxu0 %v2941
      %3446 = vmatprep.subr.bf16.mxu0 %v2938
      %3447 = vmatpush2.bf16.msra.mxu0 %v2937
      %3448 = vmatprep.subr.bf16.mxu0 %v2934
      %3449 = vmatpush2.bf16.msra.mxu0 %v2933
      %3450 = vmatprep.subr.bf16.mxu0 %v2930
      %3451 = vmatpush2.bf16.msra.mxu0 %v2929
      %3452 = vmatprep.subr.bf16.mxu0 %v2926
      %3453 = vmatpush2.bf16.msra.mxu0 %v2925
      %3454 = vmatprep.subr.bf16.mxu0 %v2922
      %3455 = vmatpush2.bf16.msra.mxu0 %v2921
      %3456 = vmatprep.subr.bf16.mxu0 %v2918
      %3457 = vmatpush2.bf16.msra.mxu0 %v2917
      %3458 = vmatprep.subr.bf16.mxu0 %v2914
      %3459 = vmatpush2.bf16.msra.mxu0 %v2913
      %3460 = vmatprep.mubr.bf16.mxu0 %v1785
      %3461 = vmatmul.mubr.bf16.gmra.mxu0 %v1784
      %v3462 = vpop.f32.mrf.mxu0
      %v3463 = vadd.f32 0.0, %v3462
      %v3464 = vpop.f32.mrf.mxu0
      %v3465 = vadd.f32 0.0, %v3464
      %v3466 = vpop.f32.mrf.mxu0
      %v3467 = vadd.f32 0.0, %v3466
      %v3468 = vpop.f32.mrf.mxu0
      %v3469 = vadd.f32 0.0, %v3468
      %3470 = vdwg.mxu0
      %3471 = vmatprep.subr.bf16.mxu0 %v2974
      %3472 = vmatpush1.bf16.msra.mxu0 %v2973
      %3473 = vmatprep.subr.bf16.mxu0 %v2970
      %3474 = vmatpush1.bf16.msra.mxu0 %v2969
      %3475 = vmatprep.subr.bf16.mxu0 %v2966
      %3476 = vmatpush1.bf16.msra.mxu0 %v2965
      %3477 = vmatprep.subr.bf16.mxu0 %v2962
      %3478 = vmatpush1.bf16.msra.mxu0 %v2961
      %3479 = vmatprep.subr.bf16.mxu0 %v2958
      %3480 = vmatpush1.bf16.msra.mxu0 %v2957
      %3481 = vmatprep.subr.bf16.mxu0 %v2954
      %3482 = vmatpush1.bf16.msra.mxu0 %v2953
      %3483 = vmatprep.subr.bf16.mxu0 %v2950
      %3484 = vmatpush1.bf16.msra.mxu0 %v2949
      %3485 = vmatprep.subr.bf16.mxu0 %v2946
      %3486 = vmatpush1.bf16.msra.mxu0 %v2945
      %3487 = vmatprep.subr.bf16.mxu0 %v3006
      %3488 = vmatpush2.bf16.msra.mxu0 %v3005
      %3489 = vmatprep.subr.bf16.mxu0 %v3002
      %3490 = vmatpush2.bf16.msra.mxu0 %v3001
      %3491 = vmatprep.subr.bf16.mxu0 %v2998
      %3492 = vmatpush2.bf16.msra.mxu0 %v2997
      %3493 = vmatprep.subr.bf16.mxu0 %v2994
      %3494 = vmatpush2.bf16.msra.mxu0 %v2993
      %3495 = vmatprep.subr.bf16.mxu0 %v2990
      %3496 = vmatpush2.bf16.msra.mxu0 %v2989
      %3497 = vmatprep.subr.bf16.mxu0 %v2986
      %3498 = vmatpush2.bf16.msra.mxu0 %v2985
      %3499 = vmatprep.subr.bf16.mxu0 %v2982
      %3500 = vmatpush2.bf16.msra.mxu0 %v2981
      %3501 = vmatprep.subr.bf16.mxu0 %v2978
      %3502 = vmatpush2.bf16.msra.mxu0 %v2977
      %3503 = vmatprep.mubr.bf16.mxu0 %v1787
      %3504 = vmatmul.mubr.bf16.gmra.mxu0 %v1786
      %v3505 = vpop.f32.mrf.mxu0
      %v3506 = vadd.f32 %v3463, %v3505
      %v3507 = vpop.f32.mrf.mxu0
      %v3508 = vadd.f32 %v3465, %v3507
      %v3509 = vpop.f32.mrf.mxu0
      %v3510 = vadd.f32 %v3467, %v3509
      %v3511 = vpop.f32.mrf.mxu0
      %v3512 = vadd.f32 %v3469, %v3511
      %3513 = vdwg.mxu0
      %3514 = vmatprep.subr.bf16.mxu0 %v3038
      %3515 = vmatpush1.bf16.msra.mxu0 %v3037
      %3516 = vmatprep.subr.bf16.mxu0 %v3034
      %3517 = vmatpush1.bf16.msra.mxu0 %v3033
      %3518 = vmatprep.subr.bf16.mxu0 %v3030
      %3519 = vmatpush1.bf16.msra.mxu0 %v3029
      %3520 = vmatprep.subr.bf16.mxu0 %v3026
      %3521 = vmatpush1.bf16.msra.mxu0 %v3025
      %3522 = vmatprep.subr.bf16.mxu0 %v3022
      %3523 = vmatpush1.bf16.msra.mxu0 %v3021
      %3524 = vmatprep.subr.bf16.mxu0 %v3018
      %3525 = vmatpush1.bf16.msra.mxu0 %v3017
      %3526 = vmatprep.subr.bf16.mxu0 %v3014
      %3527 = vmatpush1.bf16.msra.mxu0 %v3013
      %3528 = vmatprep.subr.bf16.mxu0 %v3010
      %3529 = vmatpush1.bf16.msra.mxu0 %v3009
      %3530 = vmatprep.subr.bf16.mxu0 %v3070
      %3531 = vmatpush2.bf16.msra.mxu0 %v3069
      %3532 = vmatprep.subr.bf16.mxu0 %v3066
      %3533 = vmatpush2.bf16.msra.mxu0 %v3065
      %3534 = vmatprep.subr.bf16.mxu0 %v3062
      %3535 = vmatpush2.bf16.msra.mxu0 %v3061
      %3536 = vmatprep.subr.bf16.mxu0 %v3058
      %3537 = vmatpush2.bf16.msra.mxu0 %v3057
      %3538 = vmatprep.subr.bf16.mxu0 %v3054
      %3539 = vmatpush2.bf16.msra.mxu0 %v3053
      %3540 = vmatprep.subr.bf16.mxu0 %v3050
      %3541 = vmatpush2.bf16.msra.mxu0 %v3049
      %3542 = vmatprep.subr.bf16.mxu0 %v3046
      %3543 = vmatpush2.bf16.msra.mxu0 %v3045
      %3544 = vmatprep.subr.bf16.mxu0 %v3042
      %3545 = vmatpush2.bf16.msra.mxu0 %v3041
      %3546 = vmatprep.mubr.bf16.mxu0 %v1789
      %3547 = vmatmul.mubr.bf16.gmra.mxu0 %v1788
      %v3548 = vpop.f32.mrf.mxu0
      %v3549 = vadd.f32 %v3506, %v3548
      %v3550 = vpop.f32.mrf.mxu0
      %v3551 = vadd.f32 %v3508, %v3550
      %v3552 = vpop.f32.mrf.mxu0
      %v3553 = vadd.f32 %v3510, %v3552
      %v3554 = vpop.f32.mrf.mxu0
      %v3555 = vadd.f32 %v3512, %v3554
      %3556 = vdwg.mxu0
      %3557 = vmatprep.subr.bf16.mxu0 %v3102
      %3558 = vmatpush1.bf16.msra.mxu0 %v3101
      %3559 = vmatprep.subr.bf16.mxu0 %v3098
      %3560 = vmatpush1.bf16.msra.mxu0 %v3097
      %3561 = vmatprep.subr.bf16.mxu0 %v3094
      %3562 = vmatpush1.bf16.msra.mxu0 %v3093
      %3563 = vmatprep.subr.bf16.mxu0 %v3090
      %3564 = vmatpush1.bf16.msra.mxu0 %v3089
      %3565 = vmatprep.subr.bf16.mxu0 %v3086
      %3566 = vmatpush1.bf16.msra.mxu0 %v3085
      %3567 = vmatprep.subr.bf16.mxu0 %v3082
      %3568 = vmatpush1.bf16.msra.mxu0 %v3081
      %3569 = vmatprep.subr.bf16.mxu0 %v3078
      %3570 = vmatpush1.bf16.msra.mxu0 %v3077
      %3571 = vmatprep.subr.bf16.mxu0 %v3074
      %3572 = vmatpush1.bf16.msra.mxu0 %v3073
      %3573 = vmatprep.subr.bf16.mxu0 %v3134
      %3574 = vmatpush2.bf16.msra.mxu0 %v3133
      %3575 = vmatprep.subr.bf16.mxu0 %v3130
      %3576 = vmatpush2.bf16.msra.mxu0 %v3129
      %3577 = vmatprep.subr.bf16.mxu0 %v3126
      %3578 = vmatpush2.bf16.msra.mxu0 %v3125
      %3579 = vmatprep.subr.bf16.mxu0 %v3122
      %3580 = vmatpush2.bf16.msra.mxu0 %v3121
      %3581 = vmatprep.subr.bf16.mxu0 %v3118
      %3582 = vmatpush2.bf16.msra.mxu0 %v3117
      %3583 = vmatprep.subr.bf16.mxu0 %v3114
      %3584 = vmatpush2.bf16.msra.mxu0 %v3113
      %3585 = vmatprep.subr.bf16.mxu0 %v3110
      %3586 = vmatpush2.bf16.msra.mxu0 %v3109
      %3587 = vmatprep.subr.bf16.mxu0 %v3106
      %3588 = vmatpush2.bf16.msra.mxu0 %v3105
      %3589 = vmatprep.mubr.bf16.mxu0 %v1791
      %3590 = vmatmul.mubr.bf16.gmra.mxu0 %v1790
      %v3591 = vpop.f32.mrf.mxu0
      %v3592 = vadd.f32 %v3549, %v3591
      %v3593 = vpop.f32.mrf.mxu0
      %v3594 = vadd.f32 %v3551, %v3593
      %v3595 = vpop.f32.mrf.mxu0
      %v3596 = vadd.f32 %v3553, %v3595
      %v3597 = vpop.f32.mrf.mxu0
      %v3598 = vadd.f32 %v3555, %v3597
      %3599 = vdwg.mxu0
      %3600 = vmatprep.subr.bf16.mxu0 0
      %3601 = vmatpush1.bf16.msra.mxu0 0
      %3602 = vmatprep.subr.bf16.mxu0 0
      %3603 = vmatpush1.bf16.msra.mxu0 0
      %3604 = vmatprep.subr.bf16.mxu0 0
      %3605 = vmatpush1.bf16.msra.mxu0 0
      %3606 = vmatprep.subr.bf16.mxu0 0
      %3607 = vmatpush1.bf16.msra.mxu0 0
      %3608 = vmatprep.subr.bf16.mxu0 %v3150
      %3609 = vmatpush1.bf16.msra.mxu0 %v3149
      %3610 = vmatprep.subr.bf16.mxu0 %v3146
      %3611 = vmatpush1.bf16.msra.mxu0 %v3145
      %3612 = vmatprep.subr.bf16.mxu0 %v3142
      %3613 = vmatpush1.bf16.msra.mxu0 %v3141
      %3614 = vmatprep.subr.bf16.mxu0 %v3138
      %3615 = vmatpush1.bf16.msra.mxu0 %v3137
      %3616 = vmatprep.subr.bf16.mxu0 0
      %3617 = vmatpush2.bf16.msra.mxu0 0
      %3618 = vmatprep.subr.bf16.mxu0 0
      %3619 = vmatpush2.bf16.msra.mxu0 0
      %3620 = vmatprep.subr.bf16.mxu0 0
      %3621 = vmatpush2.bf16.msra.mxu0 0
      %3622 = vmatprep.subr.bf16.mxu0 0
      %3623 = vmatpush2.bf16.msra.mxu0 0
      %3624 = vmatprep.subr.bf16.mxu0 0
      %3625 = vmatpush2.bf16.msra.mxu0 0
      %3626 = vmatprep.subr.bf16.mxu0 0
      %3627 = vmatpush2.bf16.msra.mxu0 0
      %3628 = vmatprep.subr.bf16.mxu0 0
      %3629 = vmatpush2.bf16.msra.mxu0 0
      %3630 = vmatprep.subr.bf16.mxu0 0
      %3631 = vmatpush2.bf16.msra.mxu0 0
      %3632 = vmatprep.mubr.bf16.mxu0 0
      %3633 = vmatmul.mubr.bf16.gmra.mxu0 %v3426
      %v3634 = vpop.f32.mrf.mxu0
      %v3635 = vadd.f32 %v3592, %v3634
      %v3636 = vpop.f32.mrf.mxu0
      %v3637 = vadd.f32 %v3594, %v3636
      %v3638 = vpop.f32.mrf.mxu0
      %v3639 = vadd.f32 %v3596, %v3638
      %v3640 = vpop.f32.mrf.mxu0
      %v3641 = vadd.f32 %v3598, %v3640
      %3642 = vdwg.mxu0
      %3643 = vmatprep.subr.bf16.mxu0 %v2912
      %3644 = vmatpush1.bf16.msra.mxu0 %v2911
      %3645 = vmatprep.subr.bf16.mxu0 %v2908
      %3646 = vmatpush1.bf16.msra.mxu0 %v2907
      %3647 = vmatprep.subr.bf16.mxu0 %v2904
      %3648 = vmatpush1.bf16.msra.mxu0 %v2903
      %3649 = vmatprep.subr.bf16.mxu0 %v2900
      %3650 = vmatpush1.bf16.msra.mxu0 %v2899
      %3651 = vmatprep.subr.bf16.mxu0 %v2896
      %3652 = vmatpush1.bf16.msra.mxu0 %v2895
      %3653 = vmatprep.subr.bf16.mxu0 %v2892
      %3654 = vmatpush1.bf16.msra.mxu0 %v2891
      %3655 = vmatprep.subr.bf16.mxu0 %v2888
      %3656 = vmatpush1.bf16.msra.mxu0 %v2887
      %3657 = vmatprep.subr.bf16.mxu0 %v2884
      %3658 = vmatpush1.bf16.msra.mxu0 %v2883
      %3659 = vmatprep.subr.bf16.mxu0 %v2944
      %3660 = vmatpush2.bf16.msra.mxu0 %v2943
      %3661 = vmatprep.subr.bf16.mxu0 %v2940
      %3662 = vmatpush2.bf16.msra.mxu0 %v2939
      %3663 = vmatprep.subr.bf16.mxu0 %v2936
      %3664 = vmatpush2.bf16.msra.mxu0 %v2935
      %3665 = vmatprep.subr.bf16.mxu0 %v2932
      %3666 = vmatpush2.bf16.msra.mxu0 %v2931
      %3667 = vmatprep.subr.bf16.mxu0 %v2928
      %3668 = vmatpush2.bf16.msra.mxu0 %v2927
      %3669 = vmatprep.subr.bf16.mxu0 %v2924
      %3670 = vmatpush2.bf16.msra.mxu0 %v2923
      %3671 = vmatprep.subr.bf16.mxu0 %v2920
      %3672 = vmatpush2.bf16.msra.mxu0 %v2919
      %3673 = vmatprep.subr.bf16.mxu0 %v2916
      %3674 = vmatpush2.bf16.msra.mxu0 %v2915
      %3675 = vmatprep.mubr.bf16.mxu0 %v1785
      %3676 = vmatmul.mubr.bf16.gmra.mxu0 %v1784
      %v3677 = vpop.f32.mrf.mxu0
      %v3678 = vadd.f32 0.0, %v3677
      %v3679 = vpop.f32.mrf.mxu0
      %v3680 = vadd.f32 0.0, %v3679
      %v3681 = vpop.f32.mrf.mxu0
      %v3682 = vadd.f32 0.0, %v3681
      %v3683 = vpop.f32.mrf.mxu0
      %v3684 = vadd.f32 0.0, %v3683
      %3685 = vdwg.mxu0
      %3686 = vmatprep.subr.bf16.mxu0 %v2976
      %3687 = vmatpush1.bf16.msra.mxu0 %v2975
      %3688 = vmatprep.subr.bf16.mxu0 %v2972
      %3689 = vmatpush1.bf16.msra.mxu0 %v2971
      %3690 = vmatprep.subr.bf16.mxu0 %v2968
      %3691 = vmatpush1.bf16.msra.mxu0 %v2967
      %3692 = vmatprep.subr.bf16.mxu0 %v2964
      %3693 = vmatpush1.bf16.msra.mxu0 %v2963
      %3694 = vmatprep.subr.bf16.mxu0 %v2960
      %3695 = vmatpush1.bf16.msra.mxu0 %v2959
      %3696 = vmatprep.subr.bf16.mxu0 %v2956
      %3697 = vmatpush1.bf16.msra.mxu0 %v2955
      %3698 = vmatprep.subr.bf16.mxu0 %v2952
      %3699 = vmatpush1.bf16.msra.mxu0 %v2951
      %3700 = vmatprep.subr.bf16.mxu0 %v2948
      %3701 = vmatpush1.bf16.msra.mxu0 %v2947
      %3702 = vmatprep.subr.bf16.mxu0 %v3008
      %3703 = vmatpush2.bf16.msra.mxu0 %v3007
      %3704 = vmatprep.subr.bf16.mxu0 %v3004
      %3705 = vmatpush2.bf16.msra.mxu0 %v3003
      %3706 = vmatprep.subr.bf16.mxu0 %v3000
      %3707 = vmatpush2.bf16.msra.mxu0 %v2999
      %3708 = vmatprep.subr.bf16.mxu0 %v2996
      %3709 = vmatpush2.bf16.msra.mxu0 %v2995
      %3710 = vmatprep.subr.bf16.mxu0 %v2992
      %3711 = vmatpush2.bf16.msra.mxu0 %v2991
      %3712 = vmatprep.subr.bf16.mxu0 %v2988
      %3713 = vmatpush2.bf16.msra.mxu0 %v2987
      %3714 = vmatprep.subr.bf16.mxu0 %v2984
      %3715 = vmatpush2.bf16.msra.mxu0 %v2983
      %3716 = vmatprep.subr.bf16.mxu0 %v2980
      %3717 = vmatpush2.bf16.msra.mxu0 %v2979
      %3718 = vmatprep.mubr.bf16.mxu0 %v1787
      %3719 = vmatmul.mubr.bf16.gmra.mxu0 %v1786
      %v3720 = vpop.f32.mrf.mxu0
      %v3721 = vadd.f32 %v3678, %v3720
      %v3722 = vpop.f32.mrf.mxu0
      %v3723 = vadd.f32 %v3680, %v3722
      %v3724 = vpop.f32.mrf.mxu0
      %v3725 = vadd.f32 %v3682, %v3724
      %v3726 = vpop.f32.mrf.mxu0
      %v3727 = vadd.f32 %v3684, %v3726
      %3728 = vdwg.mxu0
      %3729 = vmatprep.subr.bf16.mxu0 %v3040
      %3730 = vmatpush1.bf16.msra.mxu0 %v3039
      %3731 = vmatprep.subr.bf16.mxu0 %v3036
      %3732 = vmatpush1.bf16.msra.mxu0 %v3035
      %3733 = vmatprep.subr.bf16.mxu0 %v3032
      %3734 = vmatpush1.bf16.msra.mxu0 %v3031
      %3735 = vmatprep.subr.bf16.mxu0 %v3028
      %3736 = vmatpush1.bf16.msra.mxu0 %v3027
      %3737 = vmatprep.subr.bf16.mxu0 %v3024
      %3738 = vmatpush1.bf16.msra.mxu0 %v3023
      %3739 = vmatprep.subr.bf16.mxu0 %v3020
      %3740 = vmatpush1.bf16.msra.mxu0 %v3019
      %3741 = vmatprep.subr.bf16.mxu0 %v3016
      %3742 = vmatpush1.bf16.msra.mxu0 %v3015
      %3743 = vmatprep.subr.bf16.mxu0 %v3012
      %3744 = vmatpush1.bf16.msra.mxu0 %v3011
      %3745 = vmatprep.subr.bf16.mxu0 %v3072
      %3746 = vmatpush2.bf16.msra.mxu0 %v3071
      %3747 = vmatprep.subr.bf16.mxu0 %v3068
      %3748 = vmatpush2.bf16.msra.mxu0 %v3067
      %3749 = vmatprep.subr.bf16.mxu0 %v3064
      %3750 = vmatpush2.bf16.msra.mxu0 %v3063
      %3751 = vmatprep.subr.bf16.mxu0 %v3060
      %3752 = vmatpush2.bf16.msra.mxu0 %v3059
      %3753 = vmatprep.subr.bf16.mxu0 %v3056
      %3754 = vmatpush2.bf16.msra.mxu0 %v3055
      %3755 = vmatprep.subr.bf16.mxu0 %v3052
      %3756 = vmatpush2.bf16.msra.mxu0 %v3051
      %3757 = vmatprep.subr.bf16.mxu0 %v3048
      %3758 = vmatpush2.bf16.msra.mxu0 %v3047
      %3759 = vmatprep.subr.bf16.mxu0 %v3044
      %3760 = vmatpush2.bf16.msra.mxu0 %v3043
      %3761 = vmatprep.mubr.bf16.mxu0 %v1789
      %3762 = vmatmul.mubr.bf16.gmra.mxu0 %v1788
      %v3763 = vpop.f32.mrf.mxu0
      %v3764 = vadd.f32 %v3721, %v3763
      %v3765 = vpop.f32.mrf.mxu0
      %v3766 = vadd.f32 %v3723, %v3765
      %v3767 = vpop.f32.mrf.mxu0
      %v3768 = vadd.f32 %v3725, %v3767
      %v3769 = vpop.f32.mrf.mxu0
      %v3770 = vadd.f32 %v3727, %v3769
      %3771 = vdwg.mxu0
      %3772 = vmatprep.subr.bf16.mxu0 %v3104
      %3773 = vmatpush1.bf16.msra.mxu0 %v3103
      %3774 = vmatprep.subr.bf16.mxu0 %v3100
      %3775 = vmatpush1.bf16.msra.mxu0 %v3099
      %3776 = vmatprep.subr.bf16.mxu0 %v3096
      %3777 = vmatpush1.bf16.msra.mxu0 %v3095
      %3778 = vmatprep.subr.bf16.mxu0 %v3092
      %3779 = vmatpush1.bf16.msra.mxu0 %v3091
      %3780 = vmatprep.subr.bf16.mxu0 %v3088
      %3781 = vmatpush1.bf16.msra.mxu0 %v3087
      %3782 = vmatprep.subr.bf16.mxu0 %v3084
      %3783 = vmatpush1.bf16.msra.mxu0 %v3083
      %3784 = vmatprep.subr.bf16.mxu0 %v3080
      %3785 = vmatpush1.bf16.msra.mxu0 %v3079
      %3786 = vmatprep.subr.bf16.mxu0 %v3076
      %3787 = vmatpush1.bf16.msra.mxu0 %v3075
      %3788 = vmatprep.subr.bf16.mxu0 %v3136
      %3789 = vmatpush2.bf16.msra.mxu0 %v3135
      %3790 = vmatprep.subr.bf16.mxu0 %v3132
      %3791 = vmatpush2.bf16.msra.mxu0 %v3131
      %3792 = vmatprep.subr.bf16.mxu0 %v3128
      %3793 = vmatpush2.bf16.msra.mxu0 %v3127
      %3794 = vmatprep.subr.bf16.mxu0 %v3124
      %3795 = vmatpush2.bf16.msra.mxu0 %v3123
      %3796 = vmatprep.subr.bf16.mxu0 %v3120
      %3797 = vmatpush2.bf16.msra.mxu0 %v3119
      %3798 = vmatprep.subr.bf16.mxu0 %v3116
      %3799 = vmatpush2.bf16.msra.mxu0 %v3115
      %3800 = vmatprep.subr.bf16.mxu0 %v3112
      %3801 = vmatpush2.bf16.msra.mxu0 %v3111
      %3802 = vmatprep.subr.bf16.mxu0 %v3108
      %3803 = vmatpush2.bf16.msra.mxu0 %v3107
      %3804 = vmatprep.mubr.bf16.mxu0 %v1791
      %3805 = vmatmul.mubr.bf16.gmra.mxu0 %v1790
      %v3806 = vpop.f32.mrf.mxu0
      %v3807 = vadd.f32 %v3764, %v3806
      %v3808 = vpop.f32.mrf.mxu0
      %v3809 = vadd.f32 %v3766, %v3808
      %v3810 = vpop.f32.mrf.mxu0
      %v3811 = vadd.f32 %v3768, %v3810
      %v3812 = vpop.f32.mrf.mxu0
      %v3813 = vadd.f32 %v3770, %v3812
      %3814 = vdwg.mxu0
      %3815 = vmatprep.subr.bf16.mxu0 0
      %3816 = vmatpush1.bf16.msra.mxu0 0
      %3817 = vmatprep.subr.bf16.mxu0 0
      %3818 = vmatpush1.bf16.msra.mxu0 0
      %3819 = vmatprep.subr.bf16.mxu0 0
      %3820 = vmatpush1.bf16.msra.mxu0 0
      %3821 = vmatprep.subr.bf16.mxu0 0
      %3822 = vmatpush1.bf16.msra.mxu0 0
      %3823 = vmatprep.subr.bf16.mxu0 %v3152
      %3824 = vmatpush1.bf16.msra.mxu0 %v3151
      %3825 = vmatprep.subr.bf16.mxu0 %v3148
      %3826 = vmatpush1.bf16.msra.mxu0 %v3147
      %3827 = vmatprep.subr.bf16.mxu0 %v3144
      %3828 = vmatpush1.bf16.msra.mxu0 %v3143
      %3829 = vmatprep.subr.bf16.mxu0 %v3140
      %3830 = vmatpush1.bf16.msra.mxu0 %v3139
      %3831 = vmatprep.subr.bf16.mxu0 0
      %3832 = vmatpush2.bf16.msra.mxu0 0
      %3833 = vmatprep.subr.bf16.mxu0 0
      %3834 = vmatpush2.bf16.msra.mxu0 0
      %3835 = vmatprep.subr.bf16.mxu0 0
      %3836 = vmatpush2.bf16.msra.mxu0 0
      %3837 = vmatprep.subr.bf16.mxu0 0
      %3838 = vmatpush2.bf16.msra.mxu0 0
      %3839 = vmatprep.subr.bf16.mxu0 0
      %3840 = vmatpush2.bf16.msra.mxu0 0
      %3841 = vmatprep.subr.bf16.mxu0 0
      %3842 = vmatpush2.bf16.msra.mxu0 0
      %3843 = vmatprep.subr.bf16.mxu0 0
      %3844 = vmatpush2.bf16.msra.mxu0 0
      %3845 = vmatprep.subr.bf16.mxu0 0
      %3846 = vmatpush2.bf16.msra.mxu0 0
      %3847 = vmatprep.mubr.bf16.mxu0 0
      %3848 = vmatmul.mubr.bf16.gmra.mxu0 %v3426
      %v3849 = vpop.f32.mrf.mxu0
      %v3850 = vadd.f32 %v3807, %v3849
      %v3851 = vpop.f32.mrf.mxu0
      %v3852 = vadd.f32 %v3809, %v3851
      %v3853 = vpop.f32.mrf.mxu0
      %v3854 = vadd.f32 %v3811, %v3853
      %v3855 = vpop.f32.mrf.mxu0
      %v3856 = vadd.f32 %v3813, %v3855
      %3857 = vdwg.mxu0
      %v3858 = vld [vmem:[%s4] ss:$2 sm:$0xf]
      %v3860 = vlaneseq
      %v3861 = vshrl.u32 %v3860, 7
      %v3862 = vsub.s32 0, %v3861
      %v3863 = vrot.slane %v3858, %v3862
      %v3864 = vlaneseq
      %v3865 = vshrl.u32 %v3864, 7
      %v3866 = vsub.s32 1, %v3865
      %v3867 = vrot.slane %v3858, %v3866
      %v3868 = vlaneseq
      %v3869 = vshrl.u32 %v3868, 7
      %v3870 = vsub.s32 2, %v3869
      %v3871 = vrot.slane %v3858, %v3870
      %v3872 = vlaneseq
      %v3873 = vshrl.u32 %v3872, 7
      %v3874 = vsub.s32 3, %v3873
      %v3875 = vrot.slane %v3858, %v3874
      %v3880 = vmul.f32 %v3635, %v3863
      %v3881 = vmul.f32 %v3637, %v3867
      %v3882 = vmul.f32 %v3850, %v3871
      %v3883 = vmul.f32 %v3852, %v3875
      %v3884 = vmul.f32 %v3639, %v3863
      %v3885 = vmul.f32 %v3641, %v3867
      %v3886 = vmul.f32 %v3854, %v3871
      %v3887 = vmul.f32 %v3856, %v3875
      %s3888 = scalar_lea.vmem %s4, 1
      %v3889 = vld [vmem:[%s3888] ss:$2 sm:$0xf]
      %v3891 = vlaneseq
      %v3892 = vshrl.u32 %v3891, 7
      %v3893 = vsub.s32 0, %v3892
      %v3894 = vrot.slane %v3889, %v3893
      %v3895 = vlaneseq
      %v3896 = vshrl.u32 %v3895, 7
      %v3897 = vsub.s32 1, %v3896
      %v3898 = vrot.slane %v3889, %v3897
      %v3899 = vlaneseq
      %v3900 = vshrl.u32 %v3899, 7
      %v3901 = vsub.s32 2, %v3900
      %v3902 = vrot.slane %v3889, %v3901
      %v3903 = vlaneseq
      %v3904 = vshrl.u32 %v3903, 7
      %v3905 = vsub.s32 3, %v3904
      %v3906 = vrot.slane %v3889, %v3905
      %v3911 = vadd.f32 %v3880, %v3894
      %v3912 = vadd.f32 %v3881, %v3898
      %v3913 = vadd.f32 %v3882, %v3902
      %v3914 = vadd.f32 %v3883, %v3906
      %v3915 = vadd.f32 %v3884, %v3894
      %v3916 = vadd.f32 %v3885, %v3898
      %v3917 = vadd.f32 %v3886, %v3902
      %v3918 = vadd.f32 %v3887, %v3906
      %v3919 = vadd.f32 %v3911, %v1605
      %v3920 = vadd.f32 %v3912, %v1606
      %v3921 = vadd.f32 %v3913, %v1607
      %v3922 = vadd.f32 %v3914, %v1608
      %v3923 = vadd.f32 %v3915, %v1613
      %v3924 = vadd.f32 %v3916, %v1614
      %v3925 = vadd.f32 %v3917, %v1615
      %v3926 = vadd.f32 %v3918, %v1616
      %v3927 = vmax.f32 %v3919, 0.0
      %v3928 = vmax.f32 %v3920, 0.0
      %v3929 = vmax.f32 %v3921, 0.0
      %v3930 = vmax.f32 %v3922, 0.0
      %v3931 = vmax.f32 %v3923, 0.0
      %v3932 = vmax.f32 %v3924, 0.0
      %v3933 = vmax.f32 %v3925, 0.0
      %v3934 = vmax.f32 %v3926, 0.0
      %3935 = vst [vmem:[%s224] sm:$0xff] %v3927
      %3936 = vst [vmem:[%s224 + $0x8] sm:$0xff] %v3928
      %3937 = vst [vmem:[%s224 + $0x10] sm:$0xff] %v3929
      %3938 = vst [vmem:[%s224 + $0x18] sm:$0xff] %v3930
      %3939 = vst [vmem:[%s224 + $0x20] sm:$0xff] %v3931
      %3940 = vst [vmem:[%s224 + $0x28] sm:$0xff] %v3932
      %3941 = vst [vmem:[%s224 + $0x30] sm:$0xff] %v3933
      %3942 = vst [vmem:[%s224 + $0x38] sm:$0xff] %v3934
      %p3943 = scmp.lt.s32.totalorder %s16, 1
      %s3944 = scalar_select %p3943, %s16, 1
      %s3945 = smul.addr %s3944, 8
      %s3946 = smul.addr %s3945, 8
      %s3947 = scalar_lea.vmem %s5, %s3946
      // Predicated region
      $region41: #{_lambda_.1} parent=39 // pred_check
        %p3948 = pneg %p144
      $region42: #{_lambda_.1} parent=39 // pred_check_branch
        %3950 = sbr.rel (%p3948) target = $region44
      $region43: #{_lambda_.1} parent=39 // pred_region
        _
      $region44: #{_lambda_.1} parent=39 // pred_fallthru
        _
    $region40: #{_lambda_.1} parent=5 // pred_fallthru
      _
    %p3951 = scmp.le.s32.totalorder 2, %s11
    // Predicated region
    $region45: #{_lambda_.1} parent=5 // pred_check
      %p3952 = pneg %p3951
    $region46: #{_lambda_.1} parent=5 // pred_check_branch
      %3954 = sbr.rel (%p3952) target = $region48
    $region47: #{_lambda_.1} parent=5 // pred_region
      %s3955 = ssub.s32 %s11, 2
      // Predicated region
      $region49: #{_lambda_.1} parent=47 // pred_check
        %p3956 = pneg %p150
      $region50: #{_lambda_.1} parent=47 // pred_check_branch
        %3958 = sbr.rel (%p3956) target = $region52
      $region51: #{_lambda_.1} parent=47 // pred_region
        %p3959 = scmp.lt.s32.totalorder %s17, 1
        %s3960 = scalar_select %p3959, %s17, 1
        %s3961 = smul.addr %s3960, 8
        %s3962 = smul.addr %s3961, 8
        %s3963 = scalar_lea.vmem %s5, %s3962
      $region52: #{_lambda_.1} parent=47 // pred_fallthru
        _
    $region48: #{_lambda_.1} parent=5 // pred_fallthru
      _
  $region6: #{_lambda_.1} parent=0 // loop_footer
    %s15 = sadd.s32 1, %s11
  $region7: #{_lambda_.1} parent=0 // loop_footer_branch
    %10 = sbr.rel target = $region3
  $region8: #{_lambda_.1} parent=0 // loop_exit
    _

</llo_original>
